<compile_context>
chip_gen: v7x
topology: tpu7x:2x2x1
jax: 0.10.0
libtpu: 0.0.40
codegen_flags: <defaults>
</compile_context>

<pallas_src>
import math

import jax
import jax.numpy as jnp
from jax.experimental import pallas as pl
from jax.experimental.pallas import tpu as pltpu


_L = 8  # sublane-aligned left offset of the interior inside the stage-2 scratch


def _stage1_plan():
    """Static polyphase schedule for the fused Unpool + 5x5 stage.

    For each original-input tap (dh, dw) of the 3x3 neighbourhood, list the
    valid output (row-parity a, col-parity b) phases and the matching 5x5
    kernel tap (kh, kw) = (2*dh - a, 2*dw - b).  Only 25 of 36 combinations
    are valid -> ~31% fewer MXU FLOPs than a dense polyphase repack.
    """
    plan = []
    nblk = 0
    for dh in range(3):
        for dw in range(3):
            phases = []
            for a in range(2):
                kh = 2 * dh - a
                if not 0 <= kh < 5:
                    continue
                for b in range(2):
                    kw = 2 * dw - b
                    if not 0 <= kw < 5:
                        continue
                    phases.append((a, b, kh, kw))
            plan.append((dh, dw, nblk, phases))
            nblk += len(phases)
    return plan, nblk


def _upproj_kernel(xp_ref, w5_ref, w3_ref, bias_ref, out_ref, tpad_ref):
    # xp_ref  : (Hin+2, Win+2, Cin)        bf16 pad=1 input (padded in wrapper)
    # w5_ref  : (Cin, 25*2*Cout)           bf16 fused stage-1 weights (zero taps skipped)
    # w3_ref  : (3, 3, 2*Cout, 2*Cout)     bf16 3x3 weights on the parity-packed layout
    # bias_ref: (2, 2*Cout)                f32  row0=[b1;b1], row1=[b2+b3;b2+b3]
    # out_ref : (2*Hin, Win, 2*Cout)       bf16 output, col-parity packed in channels
    # tpad_ref: (2*Hin+2, Win+16, 2*Cout)  bf16 scratch (pad=1 intermediate)
    H, Win, C2 = out_ref.shape
    Hin = H // 2
    Cout = C2 // 2
    Cin = xp_ref.shape[-1]
    f32 = jnp.float32
    plan, _ = _stage1_plan()

    # ---- stage 1: polyphase Unpool+5x5, both branches fused, per-tap matmuls
    # One MXU matmul per input tap; columns hold every valid (a, b) phase for
    # that tap, each 2*Cout wide (upper | bottom branch).  f32 accumulation
    # into four per-phase accumulators.
    acc = {}
    for dh, dw, blk0, phases in plan:
        lhs = xp_ref[dh:dh + Hin, dw:dw + Win, :].reshape(Hin * Win, Cin)
        c0 = blk0 * 2 * Cout
        r = jnp.dot(lhs, w5_ref[:, c0:c0 + len(phases) * 2 * Cout],
                    preferred_element_type=f32)
        for p, (a, b, _, _) in enumerate(phases):
            part = r[:, p * 2 * Cout:(p + 1) * 2 * Cout]
            acc[(a, b)] = part if (a, b) not in acc else acc[(a, b)] + part

    # Split (upper|bottom) columns, BN1 bias + ReLU on the upper branch, and
    # pack the parities: channels = (col-parity b, cout), rows = 2*i + a.
    b1 = bias_ref[0:1, 0:Cout]
    u_rows, x2_rows = [], []
    for a in range(2):
        u_b, x2_b = [], []
        for b in range(2):
            acc_ab = acc[(a, b)]
            u_b.append(jnp.maximum(acc_ab[:, :Cout] + b1, 0.0))
            x2_b.append(acc_ab[:, Cout:])
        u_rows.append(jnp.concatenate(u_b, axis=-1).reshape(Hin, Win, C2))
        x2_rows.append(jnp.concatenate(x2_b, axis=-1).reshape(Hin, Win, C2))
    u_cb = jnp.stack(u_rows, axis=1).reshape(H, Win, C2)   # row-parity interleave
    x2 = jnp.stack(x2_rows, axis=1).reshape(H * Win, C2)   # bottom branch (f32)

    # ---- stage the pad=1 intermediate: zero only the thin borders ----------
    Ws = tpad_ref.shape[1]
    tpad_ref[0:1, :, :] = jnp.zeros((1, Ws, C2), tpad_ref.dtype)
    tpad_ref[H + 1:H + 2, :, :] = jnp.zeros((1, Ws, C2), tpad_ref.dtype)
    tpad_ref[:, _L - 1:_L, :] = jnp.zeros((H + 2, 1, C2), tpad_ref.dtype)
    tpad_ref[:, _L + Win:_L + Win + 1, :] = jnp.zeros((H + 2, 1, C2), tpad_ref.dtype)
    tpad_ref[1:H + 1, _L:_L + Win, :] = u_cb.astype(tpad_ref.dtype)  # 8-aligned store

    # ---- stage 2: 3x3 conv on the packed intermediate, per-tap matmuls -----
    # On the parity-packed layout only the middle column shift is a dense
    # (C2, C2) block per kh; the +/-1 shifts each touch a single parity, so
    # the structurally-zero half of those taps is skipped.
    accf = acc_b0 = acc_b1 = None
    for kh in range(3):
        mid = tpad_ref[kh:kh + H, _L:_L + Win, :].reshape(H * Win, C2)
        r = jnp.dot(mid, w3_ref[kh, 1, :, :], preferred_element_type=f32)
        accf = r if accf is None else accf + r

        left = tpad_ref[kh:kh + H, _L - 1:_L - 1 + Win, Cout:C2].reshape(H * Win, Cout)
        r0 = jnp.dot(left, w3_ref[kh, 0, Cout:C2, 0:Cout], preferred_element_type=f32)
        acc_b0 = r0 if acc_b0 is None else acc_b0 + r0

        right = tpad_ref[kh:kh + H, _L + 1:_L + 1 + Win, 0:Cout].reshape(H * Win, Cout)
        r1 = jnp.dot(right, w3_ref[kh, 2, 0:Cout, Cout:C2], preferred_element_type=f32)
        acc_b1 = r1 if acc_b1 is None else acc_b1 + r1

    x1 = accf + jnp.concatenate([acc_b0, acc_b1], axis=-1)
    out = jnp.maximum(x1 + x2 + bias_ref[1:2, :], 0.0)          # + (b2 + b3), ReLU
    out_ref[...] = out.reshape(H, Win, C2).astype(out_ref.dtype)


def fold_params(params):
    """Fold BN scales into the conv weights and repack for the polyphase kernel."""
    w5u, w3u, w5b, bn = params
    Cin, Cout = w5u.shape[2], w5u.shape[3]
    C2 = 2 * Cout
    s1, b1, s2, b2, s3, b3 = bn
    w5u_s = w5u * s1                            # BN scale on output channels
    w5b_s = w5b * s3
    w3u_s = w3u * s2

    # Stage 1: one 2*Cout-wide column block (upper | bottom branch) per valid
    # (tap, phase) pair; column order follows _stage1_plan().
    plan, _ = _stage1_plan()
    cols = []
    for _dh, _dw, _blk0, phases in plan:
        for _a, _b, kh, kw in phases:
            cols.append(jnp.concatenate([w5u_s[kh, kw], w5b_s[kh, kw]], axis=-1))
    w5 = jnp.concatenate(cols, axis=-1).astype(jnp.bfloat16)     # (Cin, 50*Cout)

    # Stage 2: 3x3 weights on the column-parity-packed layout.
    # taps[b][kw] = (ds, b'): output col-parity b, kernel column kw reads the
    # packed column shifted by ds at input parity b'.
    taps = {0: [(0, 1), (1, 0), (1, 1)], 1: [(1, 0), (1, 1), (2, 0)]}
    w3 = jnp.zeros((3, 3, 2, Cout, 2, Cout), jnp.float32)
    for b in range(2):
        for kh in range(3):
            for kw in range(3):
                ds, bp = taps[b][kw]
                w3 = w3.at[kh, ds, bp, :, b, :].set(w3u_s[kh, kw])
    w3 = w3.reshape(3, 3, C2, C2).astype(jnp.bfloat16)

    bias = jnp.stack([jnp.concatenate([b1, b1]),
                      jnp.concatenate([b2 + b3, b2 + b3])]).astype(jnp.float32)
    return w5, w3, bias


def _vmem_limit_bytes():
    """Generation-aware VMEM budget: ~56 MiB on v7x (64 MiB VMEM), up to
    96 MiB on v5e/v6e (128 MiB VMEM)."""
    cap = 64 * 1024 * 1024
    try:
        cap = int(getattr(pltpu.get_tpu_info(), "vmem_capacity_bytes", cap))
    except Exception:
        pass
    return int(min(cap * 7 // 8, 96 * 1024 * 1024))


@jax.jit
def upproj_forward(x_nchw, w5, w3, bias):
    """UpProjModule.forward (NCHW in, bf16 NCHW out) via one fused Pallas kernel."""
    N, Cin, Hin, Win = x_nchw.shape
    Cout = Cin // 2
    C2 = 2 * Cout
    H = 2 * Hin

    # NCHW -> NHWC, bf16, pad=1 halo: a single fused XLA relayout that replaces
    # the old in-kernel xpad scratch round-trip.
    # TODO(synk): keep the whole decoder NHWC/bf16 end-to-end so this transpose
    #             (and the final one) disappear entirely.
    x = jnp.transpose(x_nchw, (0, 2, 3, 1)).astype(jnp.bfloat16)
    xp = jnp.pad(x, ((0, 0), (1, 1), (1, 1), (0, 0)))

    out_cb = pl.pallas_call(
        _upproj_kernel,
        out_shape=jax.ShapeDtypeStruct((N, H, Win, C2), jnp.bfloat16),
        grid_spec=pltpu.PrefetchScalarGridSpec(
            num_scalar_prefetch=0,
            grid=(N,),
            in_specs=[
                pl.BlockSpec((None, Hin + 2, Win + 2, Cin), lambda n: (n, 0, 0, 0)),
                # Constant-index weight/bias blocks (not re-fetched across steps).
                pl.BlockSpec(w5.shape, lambda n: (0, 0)),
                pl.BlockSpec(w3.shape, lambda n: (0, 0, 0, 0)),
                pl.BlockSpec(bias.shape, lambda n: (0, 0)),
            ],
            out_specs=pl.BlockSpec((None, H, Win, C2), lambda n: (n, 0, 0, 0)),
            scratch_shapes=[
                pltpu.VMEM((H + 2, Win + 2 * _L, C2), jnp.bfloat16),
            ],
        ),
        compiler_params=pltpu.CompilerParams(
            dimension_semantics=("parallel",),
            vmem_limit_bytes=_vmem_limit_bytes(),
        ),
    )(xp, w5, w3, bias)

    # Un-pack the column parity from the channel dim: (.., Win, 2*Cout) is
    # row-major identical to (.., 2*Win, Cout)  ->  free XLA reshape.
    out = out_cb.reshape(N, H, 2 * Win, Cout)
    return jnp.transpose(out, (0, 3, 1, 2))     # NHWC -> NCHW (bf16)


def make_params(in_channels, key):
    """Deterministic synthetic parameters (shapes match the PyTorch module)."""
    out_channels = in_channels // 2
    ks = jax.random.split(key, 4)
    w5u = jax.random.normal(ks[0], (5, 5, in_channels, out_channels),
                            jnp.float32) * math.sqrt(2.0 / (25 * out_channels))
    w3u = jax.random.normal(ks[1], (3, 3, out_channels, out_channels),
                            jnp.float32) * math.sqrt(2.0 / (9 * out_channels))
    w5b = jax.random.normal(ks[2], (5, 5, in_channels, out_channels),
                            jnp.float32) * math.sqrt(2.0 / (25 * out_channels))

    # Inference-mode BatchNorm folded to per-channel (scale, bias); use
    # non-trivial statistics so the weight-folding path is actually exercised.
    eps = 1e-5

    def bn_fold(kg, kb, km, kv):
        gamma = 1.0 + 0.2 * jax.random.normal(kg, (out_channels,), jnp.float32)
        beta = 0.1 * jax.random.normal(kb, (out_channels,), jnp.float32)
        mean = 0.1 * jax.random.normal(km, (out_channels,), jnp.float32)
        var = 1.0 + 0.2 * jax.random.uniform(kv, (out_channels,), jnp.float32)
        s = gamma / jnp.sqrt(var + eps)
        b = beta - mean * s
        return s, b

    kbn = jax.random.split(ks[3], 12)
    s1, b1 = bn_fold(*kbn[0:4])
    s2, b2 = bn_fold(*kbn[4:8])
    s3, b3 = bn_fold(*kbn[8:12])
    bn = jnp.stack([s1, b1, s2, b2, s3, b3])    # (6, Cout)
    return w5u, w3u, w5b, bn


def ref_forward(x_nchw, params):
    """Plain-JAX reference (lax convs, f32) for the correctness check."""
    w5u, w3u, w5b, bn = params
    x = jnp.transpose(x_nchw, (0, 2, 3, 1))
    N, Hin, Win, C = x.shape
    up = jnp.zeros((N, Hin, 2, Win, 2, C), x.dtype).at[:, :, 0, :, 0, :].set(x)
    up = up.reshape(N, 2 * Hin, 2 * Win, C)     # zero-insertion Unpool
    dn = ('NHWC', 'HWIO', 'NHWC')
    conv = lambda a, w, p: jax.lax.conv_general_dilated(
        a, w, (1, 1), [(p, p), (p, p)], dimension_numbers=dn)
    s1, b1, s2, b2, s3, b3 = bn
    u = jnp.maximum(conv(up, w5u, 2) * s1 + b1, 0.0)
    x1 = conv(u, w3u, 1) * s2 + b2
    x2 = conv(up, w5b, 2) * s3 + b3
    return jnp.transpose(jnp.maximum(x1 + x2, 0.0), (0, 3, 1, 2))


if __name__ == "__main__":
    key = jax.random.PRNGKey(0)
    kx, kp = jax.random.split(key)

    # NOTE: self-test shapes are intentionally small; 2*Cout=16 lanes is
    # lane-starved but real decoder layers (Cout >= 64) map cleanly.
    N, Cin, Hin, Win = 2, 16, 8, 8              # in_channels=16 -> out_channels=8
    x = jax.random.normal(kx, (N, Cin, Hin, Win), jnp.float32)   # NCHW
    params = make_params(Cin, kp)
    w5, w3, bias = fold_params(params)

    out = upproj_forward(x, w5, w3, bias)
    out = jax.block_until_ready(out)

    ref = ref_forward(x, params)
    assert out.shape == (N, Cin // 2, 2 * Hin, 2 * Win), out.shape
    err = float(jnp.max(jnp.abs(out.astype(jnp.float32) - ref)))
    # bf16 MXU inputs, bf16 intermediate and bf16 output (f32 accumulation)
    # vs. an all-f32 reference -> scale-aware tolerance.
    tol = 3e-2 * max(1.0, float(jnp.max(jnp.abs(ref))))
    assert err < tol, (err, tol)

    print("KERNEL_OK")
</pallas_src>

<mosaic_0001>
module attributes {stable_mosaic.version = 11 : i64} {
  func.func @_upproj_kernel(%arg0: i32, %arg1: memref<1x10x10x16xbf16, #tpu.memory_space<vmem>>, %arg2: memref<16x400xbf16, #tpu.memory_space<vmem>>, %arg3: memref<3x3x16x16xbf16, #tpu.memory_space<vmem>>, %arg4: memref<2x16xf32, #tpu.memory_space<vmem>>, %arg5: memref<1x16x8x16xbf16, #tpu.memory_space<vmem>>, %arg6: memref<18x24x16xbf16, #tpu.memory_space<vmem>>) attributes {dimension_semantics = [#tpu.dimension_semantics<parallel>], iteration_bounds = array<i64: 2>, scalar_prefetch = 0 : i64, scratch_operands = 1 : i64, tpu.core_type = #tpu.core_type<tc>, window_params = [{transform_indices = @transform_0, window_bounds = array<i64: 1, 10, 10, 16>}, {pipeline_mode = #tpu.pipeline_mode<synchronous>, transform_indices = @transform_1, window_bounds = array<i64: 16, 400>}, {pipeline_mode = #tpu.pipeline_mode<synchronous>, transform_indices = @transform_2, window_bounds = array<i64: 3, 3, 16, 16>}, {pipeline_mode = #tpu.pipeline_mode<synchronous>, transform_indices = @transform_3, window_bounds = array<i64: 2, 16>}, {transform_indices = @transform_4, window_bounds = array<i64: 1, 16, 8, 16>}]} {
    %c0 = arith.constant 0 : index
    %c0_0 = arith.constant 0 : index
    %c0_1 = arith.constant 0 : index
    %c0_2 = arith.constant 0 : index
    %0 = vector.load %arg1[%c0, %c0_0, %c0_1, %c0_2] : memref<1x10x10x16xbf16, #tpu.memory_space<vmem>>, vector<1x8x8x16xbf16>
    %1 = vector.shape_cast %0 : vector<1x8x8x16xbf16> to vector<8x8x16xbf16>
    %2 = vector.shape_cast %1 : vector<8x8x16xbf16> to vector<64x16xbf16>
    %c0_3 = arith.constant 0 : index
    %c0_4 = arith.constant 0 : index
    %3 = vector.load %arg2[%c0_3, %c0_4] : memref<16x400xbf16, #tpu.memory_space<vmem>>, vector<16x16xbf16>
    %cst = arith.constant dense<0.000000e+00> : vector<64x16xf32>
    %4 = tpu.matmul %2, %3, %cst {dimension_numbers = #tpu.dot_dimension_numbers<[1], [0], [0], [1], [0, 0, 1, 1], [], []>} : vector<64x16xbf16>, vector<16x16xbf16>, vector<64x16xf32> -> vector<64x16xf32>
    %c0_5 = arith.constant 0 : index
    %c0_6 = arith.constant 0 : index
    %c1 = arith.constant 1 : index
    %c0_7 = arith.constant 0 : index
    %5 = vector.load %arg1[%c0_5, %c0_6, %c1, %c0_7] : memref<1x10x10x16xbf16, #tpu.memory_space<vmem>>, vector<1x8x8x16xbf16>
    %6 = vector.shape_cast %5 : vector<1x8x8x16xbf16> to vector<8x8x16xbf16>
    %7 = vector.shape_cast %6 : vector<8x8x16xbf16> to vector<64x16xbf16>
    %c0_8 = arith.constant 0 : index
    %c16 = arith.constant 16 : index
    %8 = vector.load %arg2[%c0_8, %c16] : memref<16x400xbf16, #tpu.memory_space<vmem>>, vector<16x32xbf16>
    %cst_9 = arith.constant dense<0.000000e+00> : vector<64x32xf32>
    %9 = tpu.matmul %7, %8, %cst_9 {dimension_numbers = #tpu.dot_dimension_numbers<[1], [0], [0], [1], [0, 0, 1, 1], [], []>} : vector<64x16xbf16>, vector<16x32xbf16>, vector<64x32xf32> -> vector<64x32xf32>
    %10 = vector.extract_strided_slice %9 {offsets = [0, 0], sizes = [64, 16], strides = [1, 1]} : vector<64x32xf32> to vector<64x16xf32>
    %11 = arith.addf %4, %10 : vector<64x16xf32>
    %12 = vector.extract_strided_slice %9 {offsets = [0, 16], sizes = [64, 16], strides = [1, 1]} : vector<64x32xf32> to vector<64x16xf32>
    %c0_10 = arith.constant 0 : index
    %c0_11 = arith.constant 0 : index
    %c2 = arith.constant 2 : index
    %c0_12 = arith.constant 0 : index
    %13 = vector.load %arg1[%c0_10, %c0_11, %c2, %c0_12] : memref<1x10x10x16xbf16, #tpu.memory_space<vmem>>, vector<1x8x8x16xbf16>
    %14 = vector.shape_cast %13 : vector<1x8x8x16xbf16> to vector<8x8x16xbf16>
    %15 = vector.shape_cast %14 : vector<8x8x16xbf16> to vector<64x16xbf16>
    %c0_13 = arith.constant 0 : index
    %c48 = arith.constant 48 : index
    %16 = vector.load %arg2[%c0_13, %c48] : memref<16x400xbf16, #tpu.memory_space<vmem>>, vector<16x32xbf16>
    %cst_14 = arith.constant dense<0.000000e+00> : vector<64x32xf32>
    %17 = tpu.matmul %15, %16, %cst_14 {dimension_numbers = #tpu.dot_dimension_numbers<[1], [0], [0], [1], [0, 0, 1, 1], [], []>} : vector<64x16xbf16>, vector<16x32xbf16>, vector<64x32xf32> -> vector<64x32xf32>
    %18 = vector.extract_strided_slice %17 {offsets = [0, 0], sizes = [64, 16], strides = [1, 1]} : vector<64x32xf32> to vector<64x16xf32>
    %19 = arith.addf %11, %18 : vector<64x16xf32>
    %20 = vector.extract_strided_slice %17 {offsets = [0, 16], sizes = [64, 16], strides = [1, 1]} : vector<64x32xf32> to vector<64x16xf32>
    %21 = arith.addf %12, %20 : vector<64x16xf32>
    %c0_15 = arith.constant 0 : index
    %c1_16 = arith.constant 1 : index
    %c0_17 = arith.constant 0 : index
    %c0_18 = arith.constant 0 : index
    %22 = vector.load %arg1[%c0_15, %c1_16, %c0_17, %c0_18] : memref<1x10x10x16xbf16, #tpu.memory_space<vmem>>, vector<1x8x8x16xbf16>
    %23 = vector.shape_cast %22 : vector<1x8x8x16xbf16> to vector<8x8x16xbf16>
    %24 = vector.shape_cast %23 : vector<8x8x16xbf16> to vector<64x16xbf16>
    %c0_19 = arith.constant 0 : index
    %c80 = arith.constant 80 : index
    %25 = vector.load %arg2[%c0_19, %c80] : memref<16x400xbf16, #tpu.memory_space<vmem>>, vector<16x32xbf16>
    %cst_20 = arith.constant dense<0.000000e+00> : vector<64x32xf32>
    %26 = tpu.matmul %24, %25, %cst_20 {dimension_numbers = #tpu.dot_dimension_numbers<[1], [0], [0], [1], [0, 0, 1, 1], [], []>} : vector<64x16xbf16>, vector<16x32xbf16>, vector<64x32xf32> -> vector<64x32xf32>
    %27 = vector.extract_strided_slice %26 {offsets = [0, 0], sizes = [64, 16], strides = [1, 1]} : vector<64x32xf32> to vector<64x16xf32>
    %28 = arith.addf %19, %27 : vector<64x16xf32>
    %29 = vector.extract_strided_slice %26 {offsets = [0, 16], sizes = [64, 16], strides = [1, 1]} : vector<64x32xf32> to vector<64x16xf32>
    %c0_21 = arith.constant 0 : index
    %c1_22 = arith.constant 1 : index
    %c1_23 = arith.constant 1 : index
    %c0_24 = arith.constant 0 : index
    %30 = vector.load %arg1[%c0_21, %c1_22, %c1_23, %c0_24] : memref<1x10x10x16xbf16, #tpu.memory_space<vmem>>, vector<1x8x8x16xbf16>
    %31 = vector.shape_cast %30 : vector<1x8x8x16xbf16> to vector<8x8x16xbf16>
    %32 = vector.shape_cast %31 : vector<8x8x16xbf16> to vector<64x16xbf16>
    %c0_25 = arith.constant 0 : index
    %c112 = arith.constant 112 : index
    %33 = vector.load %arg2[%c0_25, %c112] : memref<16x400xbf16, #tpu.memory_space<vmem>>, vector<16x64xbf16>
    %cst_26 = arith.constant dense<0.000000e+00> : vector<64x64xf32>
    %34 = tpu.matmul %32, %33, %cst_26 {dimension_numbers = #tpu.dot_dimension_numbers<[1], [0], [0], [1], [0, 0, 1, 1], [], []>} : vector<64x16xbf16>, vector<16x64xbf16>, vector<64x64xf32> -> vector<64x64xf32>
    %35 = vector.extract_strided_slice %34 {offsets = [0, 0], sizes = [64, 16], strides = [1, 1]} : vector<64x64xf32> to vector<64x16xf32>
    %36 = arith.addf %28, %35 : vector<64x16xf32>
    %37 = vector.extract_strided_slice %34 {offsets = [0, 16], sizes = [64, 16], strides = [1, 1]} : vector<64x64xf32> to vector<64x16xf32>
    %38 = arith.addf %21, %37 : vector<64x16xf32>
    %39 = vector.extract_strided_slice %34 {offsets = [0, 32], sizes = [64, 16], strides = [1, 1]} : vector<64x64xf32> to vector<64x16xf32>
    %40 = arith.addf %29, %39 : vector<64x16xf32>
    %41 = vector.extract_strided_slice %34 {offsets = [0, 48], sizes = [64, 16], strides = [1, 1]} : vector<64x64xf32> to vector<64x16xf32>
    %c0_27 = arith.constant 0 : index
    %c1_28 = arith.constant 1 : index
    %c2_29 = arith.constant 2 : index
    %c0_30 = arith.constant 0 : index
    %42 = vector.load %arg1[%c0_27, %c1_28, %c2_29, %c0_30] : memref<1x10x10x16xbf16, #tpu.memory_space<vmem>>, vector<1x8x8x16xbf16>
    %43 = vector.shape_cast %42 : vector<1x8x8x16xbf16> to vector<8x8x16xbf16>
    %44 = vector.shape_cast %43 : vector<8x8x16xbf16> to vector<64x16xbf16>
    %c0_31 = arith.constant 0 : index
    %c176 = arith.constant 176 : index
    %45 = vector.load %arg2[%c0_31, %c176] : memref<16x400xbf16, #tpu.memory_space<vmem>>, vector<16x64xbf16>
    %cst_32 = arith.constant dense<0.000000e+00> : vector<64x64xf32>
    %46 = tpu.matmul %44, %45, %cst_32 {dimension_numbers = #tpu.dot_dimension_numbers<[1], [0], [0], [1], [0, 0, 1, 1], [], []>} : vector<64x16xbf16>, vector<16x64xbf16>, vector<64x64xf32> -> vector<64x64xf32>
    %47 = vector.extract_strided_slice %46 {offsets = [0, 0], sizes = [64, 16], strides = [1, 1]} : vector<64x64xf32> to vector<64x16xf32>
    %48 = arith.addf %36, %47 : vector<64x16xf32>
    %49 = vector.extract_strided_slice %46 {offsets = [0, 16], sizes = [64, 16], strides = [1, 1]} : vector<64x64xf32> to vector<64x16xf32>
    %50 = arith.addf %38, %49 : vector<64x16xf32>
    %51 = vector.extract_strided_slice %46 {offsets = [0, 32], sizes = [64, 16], strides = [1, 1]} : vector<64x64xf32> to vector<64x16xf32>
    %52 = arith.addf %40, %51 : vector<64x16xf32>
    %53 = vector.extract_strided_slice %46 {offsets = [0, 48], sizes = [64, 16], strides = [1, 1]} : vector<64x64xf32> to vector<64x16xf32>
    %54 = arith.addf %41, %53 : vector<64x16xf32>
    %c0_33 = arith.constant 0 : index
    %c2_34 = arith.constant 2 : index
    %c0_35 = arith.constant 0 : index
    %c0_36 = arith.constant 0 : index
    %55 = vector.load %arg1[%c0_33, %c2_34, %c0_35, %c0_36] : memref<1x10x10x16xbf16, #tpu.memory_space<vmem>>, vector<1x8x8x16xbf16>
    %56 = vector.shape_cast %55 : vector<1x8x8x16xbf16> to vector<8x8x16xbf16>
    %57 = vector.shape_cast %56 : vector<8x8x16xbf16> to vector<64x16xbf16>
    %c0_37 = arith.constant 0 : index
    %c240 = arith.constant 240 : index
    %58 = vector.load %arg2[%c0_37, %c240] : memref<16x400xbf16, #tpu.memory_space<vmem>>, vector<16x32xbf16>
    %cst_38 = arith.constant dense<0.000000e+00> : vector<64x32xf32>
    %59 = tpu.matmul %57, %58, %cst_38 {dimension_numbers = #tpu.dot_dimension_numbers<[1], [0], [0], [1], [0, 0, 1, 1], [], []>} : vector<64x16xbf16>, vector<16x32xbf16>, vector<64x32xf32> -> vector<64x32xf32>
    %60 = vector.extract_strided_slice %59 {offsets = [0, 0], sizes = [64, 16], strides = [1, 1]} : vector<64x32xf32> to vector<64x16xf32>
    %61 = arith.addf %48, %60 : vector<64x16xf32>
    %62 = vector.extract_strided_slice %59 {offsets = [0, 16], sizes = [64, 16], strides = [1, 1]} : vector<64x32xf32> to vector<64x16xf32>
    %63 = arith.addf %52, %62 : vector<64x16xf32>
    %c0_39 = arith.constant 0 : index
    %c2_40 = arith.constant 2 : index
    %c1_41 = arith.constant 1 : index
    %c0_42 = arith.constant 0 : index
    %64 = vector.load %arg1[%c0_39, %c2_40, %c1_41, %c0_42] : memref<1x10x10x16xbf16, #tpu.memory_space<vmem>>, vector<1x8x8x16xbf16>
    %65 = vector.shape_cast %64 : vector<1x8x8x16xbf16> to vector<8x8x16xbf16>
    %66 = vector.shape_cast %65 : vector<8x8x16xbf16> to vector<64x16xbf16>
    %c0_43 = arith.constant 0 : index
    %c272 = arith.constant 272 : index
    %67 = vector.load %arg2[%c0_43, %c272] : memref<16x400xbf16, #tpu.memory_space<vmem>>, vector<16x64xbf16>
    %cst_44 = arith.constant dense<0.000000e+00> : vector<64x64xf32>
    %68 = tpu.matmul %66, %67, %cst_44 {dimension_numbers = #tpu.dot_dimension_numbers<[1], [0], [0], [1], [0, 0, 1, 1], [], []>} : vector<64x16xbf16>, vector<16x64xbf16>, vector<64x64xf32> -> vector<64x64xf32>
    %69 = vector.extract_strided_slice %68 {offsets = [0, 0], sizes = [64, 16], strides = [1, 1]} : vector<64x64xf32> to vector<64x16xf32>
    %70 = arith.addf %61, %69 : vector<64x16xf32>
    %71 = vector.extract_strided_slice %68 {offsets = [0, 16], sizes = [64, 16], strides = [1, 1]} : vector<64x64xf32> to vector<64x16xf32>
    %72 = arith.addf %50, %71 : vector<64x16xf32>
    %73 = vector.extract_strided_slice %68 {offsets = [0, 32], sizes = [64, 16], strides = [1, 1]} : vector<64x64xf32> to vector<64x16xf32>
    %74 = arith.addf %63, %73 : vector<64x16xf32>
    %75 = vector.extract_strided_slice %68 {offsets = [0, 48], sizes = [64, 16], strides = [1, 1]} : vector<64x64xf32> to vector<64x16xf32>
    %76 = arith.addf %54, %75 : vector<64x16xf32>
    %c0_45 = arith.constant 0 : index
    %c2_46 = arith.constant 2 : index
    %c2_47 = arith.constant 2 : index
    %c0_48 = arith.constant 0 : index
    %77 = vector.load %arg1[%c0_45, %c2_46, %c2_47, %c0_48] : memref<1x10x10x16xbf16, #tpu.memory_space<vmem>>, vector<1x8x8x16xbf16>
    %78 = vector.shape_cast %77 : vector<1x8x8x16xbf16> to vector<8x8x16xbf16>
    %79 = vector.shape_cast %78 : vector<8x8x16xbf16> to vector<64x16xbf16>
    %c0_49 = arith.constant 0 : index
    %c336 = arith.constant 336 : index
    %80 = vector.load %arg2[%c0_49, %c336] : memref<16x400xbf16, #tpu.memory_space<vmem>>, vector<16x64xbf16>
    %cst_50 = arith.constant dense<0.000000e+00> : vector<64x64xf32>
    %81 = tpu.matmul %79, %80, %cst_50 {dimension_numbers = #tpu.dot_dimension_numbers<[1], [0], [0], [1], [0, 0, 1, 1], [], []>} : vector<64x16xbf16>, vector<16x64xbf16>, vector<64x64xf32> -> vector<64x64xf32>
    %82 = vector.extract_strided_slice %81 {offsets = [0, 0], sizes = [64, 16], strides = [1, 1]} : vector<64x64xf32> to vector<64x16xf32>
    %83 = arith.addf %70, %82 : vector<64x16xf32>
    %84 = vector.extract_strided_slice %81 {offsets = [0, 16], sizes = [64, 16], strides = [1, 1]} : vector<64x64xf32> to vector<64x16xf32>
    %85 = arith.addf %72, %84 : vector<64x16xf32>
    %86 = vector.extract_strided_slice %81 {offsets = [0, 32], sizes = [64, 16], strides = [1, 1]} : vector<64x64xf32> to vector<64x16xf32>
    %87 = arith.addf %74, %86 : vector<64x16xf32>
    %88 = vector.extract_strided_slice %81 {offsets = [0, 48], sizes = [64, 16], strides = [1, 1]} : vector<64x64xf32> to vector<64x16xf32>
    %89 = arith.addf %76, %88 : vector<64x16xf32>
    %c0_51 = arith.constant 0 : index
    %c0_52 = arith.constant 0 : index
    %90 = vector.load %arg4[%c0_51, %c0_52] : memref<2x16xf32, #tpu.memory_space<vmem>>, vector<1x8xf32>
    %91 = vector.extract_strided_slice %83 {offsets = [0, 0], sizes = [64, 8], strides = [1, 1]} : vector<64x16xf32> to vector<64x8xf32>
    %92 = vector.broadcast %90 : vector<1x8xf32> to vector<64x8xf32>
    %93 = arith.addf %91, %92 : vector<64x8xf32>
    %cst_53 = arith.constant 0.000000e+00 : f32
    %94 = vector.broadcast %cst_53 : f32 to vector<64x8xf32>
    %95 = arith.maximumf %93, %94 : vector<64x8xf32>
    %96 = vector.extract_strided_slice %83 {offsets = [0, 8], sizes = [64, 8], strides = [1, 1]} : vector<64x16xf32> to vector<64x8xf32>
    %97 = vector.extract_strided_slice %85 {offsets = [0, 0], sizes = [64, 8], strides = [1, 1]} : vector<64x16xf32> to vector<64x8xf32>
    %98 = vector.broadcast %90 : vector<1x8xf32> to vector<64x8xf32>
    %99 = arith.addf %97, %98 : vector<64x8xf32>
    %cst_54 = arith.constant 0.000000e+00 : f32
    %100 = vector.broadcast %cst_54 : f32 to vector<64x8xf32>
    %101 = arith.maximumf %99, %100 : vector<64x8xf32>
    %102 = vector.extract_strided_slice %85 {offsets = [0, 8], sizes = [64, 8], strides = [1, 1]} : vector<64x16xf32> to vector<64x8xf32>
    %103 = tpu.concatenate %95, %101 in 1 : vector<64x8xf32>, vector<64x8xf32> -> vector<64x16xf32>
    %104 = vector.shape_cast %103 : vector<64x16xf32> to vector<8x8x16xf32>
    %105 = tpu.concatenate %96, %102 in 1 : vector<64x8xf32>, vector<64x8xf32> -> vector<64x16xf32>
    %106 = vector.shape_cast %105 : vector<64x16xf32> to vector<8x8x16xf32>
    %107 = vector.extract_strided_slice %87 {offsets = [0, 0], sizes = [64, 8], strides = [1, 1]} : vector<64x16xf32> to vector<64x8xf32>
    %108 = vector.broadcast %90 : vector<1x8xf32> to vector<64x8xf32>
    %109 = arith.addf %107, %108 : vector<64x8xf32>
    %cst_55 = arith.constant 0.000000e+00 : f32
    %110 = vector.broadcast %cst_55 : f32 to vector<64x8xf32>
    %111 = arith.maximumf %109, %110 : vector<64x8xf32>
    %112 = vector.extract_strided_slice %87 {offsets = [0, 8], sizes = [64, 8], strides = [1, 1]} : vector<64x16xf32> to vector<64x8xf32>
    %113 = vector.extract_strided_slice %89 {offsets = [0, 0], sizes = [64, 8], strides = [1, 1]} : vector<64x16xf32> to vector<64x8xf32>
    %114 = vector.broadcast %90 : vector<1x8xf32> to vector<64x8xf32>
    %115 = arith.addf %113, %114 : vector<64x8xf32>
    %cst_56 = arith.constant 0.000000e+00 : f32
    %116 = vector.broadcast %cst_56 : f32 to vector<64x8xf32>
    %117 = arith.maximumf %115, %116 : vector<64x8xf32>
    %118 = vector.extract_strided_slice %89 {offsets = [0, 8], sizes = [64, 8], strides = [1, 1]} : vector<64x16xf32> to vector<64x8xf32>
    %119 = tpu.concatenate %111, %117 in 1 : vector<64x8xf32>, vector<64x8xf32> -> vector<64x16xf32>
    %120 = vector.shape_cast %119 : vector<64x16xf32> to vector<8x8x16xf32>
    %121 = tpu.concatenate %112, %118 in 1 : vector<64x8xf32>, vector<64x8xf32> -> vector<64x16xf32>
    %122 = vector.shape_cast %121 : vector<64x16xf32> to vector<8x8x16xf32>
    %123 = vector.shape_cast %104 : vector<8x8x16xf32> to vector<8x1x8x16xf32>
    %124 = vector.shape_cast %120 : vector<8x8x16xf32> to vector<8x1x8x16xf32>
    %125 = tpu.concatenate %123, %124 in 1 : vector<8x1x8x16xf32>, vector<8x1x8x16xf32> -> vector<8x2x8x16xf32>
    %126 = vector.shape_cast %125 : vector<8x2x8x16xf32> to vector<16x8x16xf32>
    %127 = vector.shape_cast %106 : vector<8x8x16xf32> to vector<8x1x8x16xf32>
    %128 = vector.shape_cast %122 : vector<8x8x16xf32> to vector<8x1x8x16xf32>
    %129 = tpu.concatenate %127, %128 in 1 : vector<8x1x8x16xf32>, vector<8x1x8x16xf32> -> vector<8x2x8x16xf32>
    %130 = vector.shape_cast %129 : vector<8x2x8x16xf32> to vector<128x16xf32>
    %cst_57 = arith.constant 0.000000e+00 : bf16
    %131 = vector.broadcast %cst_57 : bf16 to vector<1x24x16xbf16>
    %c0_58 = arith.constant 0 : index
    %c0_59 = arith.constant 0 : index
    %c0_60 = arith.constant 0 : index
    %132 = vector.load %arg6[%c0_58, %c0_59, %c0_60] : memref<18x24x16xbf16, #tpu.memory_space<vmem>>, vector<1x24x16xbf16>
    tpu.vector_store %arg6[%c0_58, %c0_59, %c0_60], %131 {strides = array<i32>} : memref<18x24x16xbf16, #tpu.memory_space<vmem>>, vector<1x24x16xbf16>,
    %cst_61 = arith.constant 0.000000e+00 : bf16
    %133 = vector.broadcast %cst_61 : bf16 to vector<1x24x16xbf16>
    %c17 = arith.constant 17 : index
    %c0_62 = arith.constant 0 : index
    %c0_63 = arith.constant 0 : index
    %134 = vector.load %arg6[%c17, %c0_62, %c0_63] : memref<18x24x16xbf16, #tpu.memory_space<vmem>>, vector<1x24x16xbf16>
    tpu.vector_store %arg6[%c17, %c0_62, %c0_63], %133 {strides = array<i32>} : memref<18x24x16xbf16, #tpu.memory_space<vmem>>, vector<1x24x16xbf16>,
    %cst_64 = arith.constant 0.000000e+00 : bf16
    %135 = vector.broadcast %cst_64 : bf16 to vector<18x1x16xbf16>
    %c0_65 = arith.constant 0 : index
    %c7 = arith.constant 7 : index
    %c0_66 = arith.constant 0 : index
    %136 = vector.load %arg6[%c0_65, %c7, %c0_66] : memref<18x24x16xbf16, #tpu.memory_space<vmem>>, vector<18x1x16xbf16>
    tpu.vector_store %arg6[%c0_65, %c7, %c0_66], %135 {strides = array<i32>} : memref<18x24x16xbf16, #tpu.memory_space<vmem>>, vector<18x1x16xbf16>,
    %cst_67 = arith.constant 0.000000e+00 : bf16
    %137 = vector.broadcast %cst_67 : bf16 to vector<18x1x16xbf16>
    %c0_68 = arith.constant 0 : index
    %c16_69 = arith.constant 16 : index
    %c0_70 = arith.constant 0 : index
    %138 = vector.load %arg6[%c0_68, %c16_69, %c0_70] : memref<18x24x16xbf16, #tpu.memory_space<vmem>>, vector<18x1x16xbf16>
    tpu.vector_store %arg6[%c0_68, %c16_69, %c0_70], %137 {strides = array<i32>} : memref<18x24x16xbf16, #tpu.memory_space<vmem>>, vector<18x1x16xbf16>,
    %139 = arith.truncf %126 : vector<16x8x16xf32> to vector<16x8x16xbf16>
    %c1_71 = arith.constant 1 : index
    %c8 = arith.constant 8 : index
    %c0_72 = arith.constant 0 : index
    %140 = vector.load %arg6[%c1_71, %c8, %c0_72] : memref<18x24x16xbf16, #tpu.memory_space<vmem>>, vector<16x8x16xbf16>
    tpu.vector_store %arg6[%c1_71, %c8, %c0_72], %139 {strides = array<i32>} : memref<18x24x16xbf16, #tpu.memory_space<vmem>>, vector<16x8x16xbf16>,
    %c0_73 = arith.constant 0 : index
    %c8_74 = arith.constant 8 : index
    %c0_75 = arith.constant 0 : index
    %141 = vector.load %arg6[%c0_73, %c8_74, %c0_75] : memref<18x24x16xbf16, #tpu.memory_space<vmem>>, vector<16x8x16xbf16>
    %142 = vector.shape_cast %141 : vector<16x8x16xbf16> to vector<128x16xbf16>
    %c0_76 = arith.constant 0 : index
    %c1_77 = arith.constant 1 : index
    %c0_78 = arith.constant 0 : index
    %c0_79 = arith.constant 0 : index
    %143 = vector.load %arg3[%c0_76, %c1_77, %c0_78, %c0_79] : memref<3x3x16x16xbf16, #tpu.memory_space<vmem>>, vector<1x1x16x16xbf16>
    %144 = vector.shape_cast %143 : vector<1x1x16x16xbf16> to vector<16x16xbf16>
    %cst_80 = arith.constant dense<0.000000e+00> : vector<128x16xf32>
    %145 = tpu.matmul %142, %144, %cst_80 {dimension_numbers = #tpu.dot_dimension_numbers<[1], [0], [0], [1], [0, 0, 1, 1], [], []>} : vector<128x16xbf16>, vector<16x16xbf16>, vector<128x16xf32> -> vector<128x16xf32>
    %c0_81 = arith.constant 0 : index
    %c7_82 = arith.constant 7 : index
    %c8_83 = arith.constant 8 : index
    %146 = vector.load %arg6[%c0_81, %c7_82, %c8_83] : memref<18x24x16xbf16, #tpu.memory_space<vmem>>, vector<16x8x8xbf16>
    %147 = vector.shape_cast %146 : vector<16x8x8xbf16> to vector<128x8xbf16>
    %c0_84 = arith.constant 0 : index
    %c0_85 = arith.constant 0 : index
    %c8_86 = arith.constant 8 : index
    %c0_87 = arith.constant 0 : index
    %148 = vector.load %arg3[%c0_84, %c0_85, %c8_86, %c0_87] : memref<3x3x16x16xbf16, #tpu.memory_space<vmem>>, vector<1x1x8x8xbf16>
    %149 = vector.shape_cast %148 : vector<1x1x8x8xbf16> to vector<8x8xbf16>
    %cst_88 = arith.constant dense<0.000000e+00> : vector<128x8xf32>
    %150 = tpu.matmul %147, %149, %cst_88 {dimension_numbers = #tpu.dot_dimension_numbers<[1], [0], [0], [1], [0, 0, 1, 1], [], []>} : vector<128x8xbf16>, vector<8x8xbf16>, vector<128x8xf32> -> vector<128x8xf32>
    %c0_89 = arith.constant 0 : index
    %c9 = arith.constant 9 : index
    %c0_90 = arith.constant 0 : index
    %151 = vector.load %arg6[%c0_89, %c9, %c0_90] : memref<18x24x16xbf16, #tpu.memory_space<vmem>>, vector<16x8x8xbf16>
    %152 = vector.shape_cast %151 : vector<16x8x8xbf16> to vector<128x8xbf16>
    %c0_91 = arith.constant 0 : index
    %c2_92 = arith.constant 2 : index
    %c0_93 = arith.constant 0 : index
    %c8_94 = arith.constant 8 : index
    %153 = vector.load %arg3[%c0_91, %c2_92, %c0_93, %c8_94] : memref<3x3x16x16xbf16, #tpu.memory_space<vmem>>, vector<1x1x8x8xbf16>
    %154 = vector.shape_cast %153 : vector<1x1x8x8xbf16> to vector<8x8xbf16>
    %cst_95 = arith.constant dense<0.000000e+00> : vector<128x8xf32>
    %155 = tpu.matmul %152, %154, %cst_95 {dimension_numbers = #tpu.dot_dimension_numbers<[1], [0], [0], [1], [0, 0, 1, 1], [], []>} : vector<128x8xbf16>, vector<8x8xbf16>, vector<128x8xf32> -> vector<128x8xf32>
    %c1_96 = arith.constant 1 : index
    %c8_97 = arith.constant 8 : index
    %c0_98 = arith.constant 0 : index
    %156 = vector.load %arg6[%c1_96, %c8_97, %c0_98] : memref<18x24x16xbf16, #tpu.memory_space<vmem>>, vector<16x8x16xbf16>
    %157 = vector.shape_cast %156 : vector<16x8x16xbf16> to vector<128x16xbf16>
    %c1_99 = arith.constant 1 : index
    %c1_100 = arith.constant 1 : index
    %c0_101 = arith.constant 0 : index
    %c0_102 = arith.constant 0 : index
    %158 = vector.load %arg3[%c1_99, %c1_100, %c0_101, %c0_102] : memref<3x3x16x16xbf16, #tpu.memory_space<vmem>>, vector<1x1x16x16xbf16>
    %159 = vector.shape_cast %158 : vector<1x1x16x16xbf16> to vector<16x16xbf16>
    %cst_103 = arith.constant dense<0.000000e+00> : vector<128x16xf32>
    %160 = tpu.matmul %157, %159, %cst_103 {dimension_numbers = #tpu.dot_dimension_numbers<[1], [0], [0], [1], [0, 0, 1, 1], [], []>} : vector<128x16xbf16>, vector<16x16xbf16>, vector<128x16xf32> -> vector<128x16xf32>
    %161 = arith.addf %145, %160 : vector<128x16xf32>
    %c1_104 = arith.constant 1 : index
    %c7_105 = arith.constant 7 : index
    %c8_106 = arith.constant 8 : index
    %162 = vector.load %arg6[%c1_104, %c7_105, %c8_106] : memref<18x24x16xbf16, #tpu.memory_space<vmem>>, vector<16x8x8xbf16>
    %163 = vector.shape_cast %162 : vector<16x8x8xbf16> to vector<128x8xbf16>
    %c1_107 = arith.constant 1 : index
    %c0_108 = arith.constant 0 : index
    %c8_109 = arith.constant 8 : index
    %c0_110 = arith.constant 0 : index
    %164 = vector.load %arg3[%c1_107, %c0_108, %c8_109, %c0_110] : memref<3x3x16x16xbf16, #tpu.memory_space<vmem>>, vector<1x1x8x8xbf16>
    %165 = vector.shape_cast %164 : vector<1x1x8x8xbf16> to vector<8x8xbf16>
    %cst_111 = arith.constant dense<0.000000e+00> : vector<128x8xf32>
    %166 = tpu.matmul %163, %165, %cst_111 {dimension_numbers = #tpu.dot_dimension_numbers<[1], [0], [0], [1], [0, 0, 1, 1], [], []>} : vector<128x8xbf16>, vector<8x8xbf16>, vector<128x8xf32> -> vector<128x8xf32>
    %167 = arith.addf %150, %166 : vector<128x8xf32>
    %c1_112 = arith.constant 1 : index
    %c9_113 = arith.constant 9 : index
    %c0_114 = arith.constant 0 : index
    %168 = vector.load %arg6[%c1_112, %c9_113, %c0_114] : memref<18x24x16xbf16, #tpu.memory_space<vmem>>, vector<16x8x8xbf16>
    %169 = vector.shape_cast %168 : vector<16x8x8xbf16> to vector<128x8xbf16>
    %c1_115 = arith.constant 1 : index
    %c2_116 = arith.constant 2 : index
    %c0_117 = arith.constant 0 : index
    %c8_118 = arith.constant 8 : index
    %170 = vector.load %arg3[%c1_115, %c2_116, %c0_117, %c8_118] : memref<3x3x16x16xbf16, #tpu.memory_space<vmem>>, vector<1x1x8x8xbf16>
    %171 = vector.shape_cast %170 : vector<1x1x8x8xbf16> to vector<8x8xbf16>
    %cst_119 = arith.constant dense<0.000000e+00> : vector<128x8xf32>
    %172 = tpu.matmul %169, %171, %cst_119 {dimension_numbers = #tpu.dot_dimension_numbers<[1], [0], [0], [1], [0, 0, 1, 1], [], []>} : vector<128x8xbf16>, vector<8x8xbf16>, vector<128x8xf32> -> vector<128x8xf32>
    %173 = arith.addf %155, %172 : vector<128x8xf32>
    %c2_120 = arith.constant 2 : index
    %c8_121 = arith.constant 8 : index
    %c0_122 = arith.constant 0 : index
    %174 = vector.load %arg6[%c2_120, %c8_121, %c0_122] : memref<18x24x16xbf16, #tpu.memory_space<vmem>>, vector<16x8x16xbf16>
    %175 = vector.shape_cast %174 : vector<16x8x16xbf16> to vector<128x16xbf16>
    %c2_123 = arith.constant 2 : index
    %c1_124 = arith.constant 1 : index
    %c0_125 = arith.constant 0 : index
    %c0_126 = arith.constant 0 : index
    %176 = vector.load %arg3[%c2_123, %c1_124, %c0_125, %c0_126] : memref<3x3x16x16xbf16, #tpu.memory_space<vmem>>, vector<1x1x16x16xbf16>
    %177 = vector.shape_cast %176 : vector<1x1x16x16xbf16> to vector<16x16xbf16>
    %cst_127 = arith.constant dense<0.000000e+00> : vector<128x16xf32>
    %178 = tpu.matmul %175, %177, %cst_127 {dimension_numbers = #tpu.dot_dimension_numbers<[1], [0], [0], [1], [0, 0, 1, 1], [], []>} : vector<128x16xbf16>, vector<16x16xbf16>, vector<128x16xf32> -> vector<128x16xf32>
    %179 = arith.addf %161, %178 : vector<128x16xf32>
    %c2_128 = arith.constant 2 : index
    %c7_129 = arith.constant 7 : index
    %c8_130 = arith.constant 8 : index
    %180 = vector.load %arg6[%c2_128, %c7_129, %c8_130] : memref<18x24x16xbf16, #tpu.memory_space<vmem>>, vector<16x8x8xbf16>
    %181 = vector.shape_cast %180 : vector<16x8x8xbf16> to vector<128x8xbf16>
    %c2_131 = arith.constant 2 : index
    %c0_132 = arith.constant 0 : index
    %c8_133 = arith.constant 8 : index
    %c0_134 = arith.constant 0 : index
    %182 = vector.load %arg3[%c2_131, %c0_132, %c8_133, %c0_134] : memref<3x3x16x16xbf16, #tpu.memory_space<vmem>>, vector<1x1x8x8xbf16>
    %183 = vector.shape_cast %182 : vector<1x1x8x8xbf16> to vector<8x8xbf16>
    %cst_135 = arith.constant dense<0.000000e+00> : vector<128x8xf32>
    %184 = tpu.matmul %181, %183, %cst_135 {dimension_numbers = #tpu.dot_dimension_numbers<[1], [0], [0], [1], [0, 0, 1, 1], [], []>} : vector<128x8xbf16>, vector<8x8xbf16>, vector<128x8xf32> -> vector<128x8xf32>
    %185 = arith.addf %167, %184 : vector<128x8xf32>
    %c2_136 = arith.constant 2 : index
    %c9_137 = arith.constant 9 : index
    %c0_138 = arith.constant 0 : index
    %186 = vector.load %arg6[%c2_136, %c9_137, %c0_138] : memref<18x24x16xbf16, #tpu.memory_space<vmem>>, vector<16x8x8xbf16>
    %187 = vector.shape_cast %186 : vector<16x8x8xbf16> to vector<128x8xbf16>
    %c2_139 = arith.constant 2 : index
    %c2_140 = arith.constant 2 : index
    %c0_141 = arith.constant 0 : index
    %c8_142 = arith.constant 8 : index
    %188 = vector.load %arg3[%c2_139, %c2_140, %c0_141, %c8_142] : memref<3x3x16x16xbf16, #tpu.memory_space<vmem>>, vector<1x1x8x8xbf16>
    %189 = vector.shape_cast %188 : vector<1x1x8x8xbf16> to vector<8x8xbf16>
    %cst_143 = arith.constant dense<0.000000e+00> : vector<128x8xf32>
    %190 = tpu.matmul %187, %189, %cst_143 {dimension_numbers = #tpu.dot_dimension_numbers<[1], [0], [0], [1], [0, 0, 1, 1], [], []>} : vector<128x8xbf16>, vector<8x8xbf16>, vector<128x8xf32> -> vector<128x8xf32>
    %191 = arith.addf %173, %190 : vector<128x8xf32>
    %192 = tpu.concatenate %185, %191 in 1 : vector<128x8xf32>, vector<128x8xf32> -> vector<128x16xf32>
    %193 = arith.addf %179, %192 : vector<128x16xf32>
    %194 = arith.addf %193, %130 : vector<128x16xf32>
    %c1_144 = arith.constant 1 : index
    %c0_145 = arith.constant 0 : index
    %195 = vector.load %arg4[%c1_144, %c0_145] : memref<2x16xf32, #tpu.memory_space<vmem>>, vector<1x16xf32>
    %196 = vector.broadcast %195 : vector<1x16xf32> to vector<128x16xf32>
    %197 = arith.addf %194, %196 : vector<128x16xf32>
    %cst_146 = arith.constant 0.000000e+00 : f32
    %198 = vector.broadcast %cst_146 : f32 to vector<128x16xf32>
    %199 = arith.maximumf %197, %198 : vector<128x16xf32>
    %200 = vector.shape_cast %199 : vector<128x16xf32> to vector<16x8x16xf32>
    %201 = arith.truncf %200 : vector<16x8x16xf32> to vector<16x8x16xbf16>
    %c0_147 = arith.constant 0 : index
    %c0_148 = arith.constant 0 : index
    %c0_149 = arith.constant 0 : index
    %c0_150 = arith.constant 0 : index
    %202 = vector.load %arg5[%c0_147, %c0_148, %c0_149, %c0_150] : memref<1x16x8x16xbf16, #tpu.memory_space<vmem>>, vector<1x16x8x16xbf16>
    %203 = vector.shape_cast %202 : vector<1x16x8x16xbf16> to vector<16x8x16xbf16>
    %204 = vector.shape_cast %201 : vector<16x8x16xbf16> to vector<1x16x8x16xbf16>
    tpu.vector_store %arg5[%c0_147, %c0_148, %c0_149, %c0_150], %204 {strides = array<i32>} : memref<1x16x8x16xbf16, #tpu.memory_space<vmem>>, vector<1x16x8x16xbf16>,
    return
  }
  func.func @transform_0(%arg0: i32) -> (i32, i32, i32, i32) {
    %c0_i32 = arith.constant 0 : i32
    %c0_i32_0 = arith.constant 0 : i32
    %c0_i32_1 = arith.constant 0 : i32
    %c0_i32_2 = arith.constant 0 : i32
    return %arg0, %c0_i32, %c0_i32_0, %c0_i32_1 : i32, i32, i32, i32
  }
  func.func @transform_1(%arg0: i32) -> (i32, i32) {
    %c0_i32 = arith.constant 0 : i32
    %c0_i32_0 = arith.constant 0 : i32
    %c0_i32_1 = arith.constant 0 : i32
    return %c0_i32, %c0_i32_0 : i32, i32
  }
  func.func @transform_2(%arg0: i32) -> (i32, i32, i32, i32) {
    %c0_i32 = arith.constant 0 : i32
    %c0_i32_0 = arith.constant 0 : i32
    %c0_i32_1 = arith.constant 0 : i32
    %c0_i32_2 = arith.constant 0 : i32
    %c0_i32_3 = arith.constant 0 : i32
    return %c0_i32, %c0_i32_0, %c0_i32_1, %c0_i32_2 : i32, i32, i32, i32
  }
  func.func @transform_3(%arg0: i32) -> (i32, i32) {
    %c0_i32 = arith.constant 0 : i32
    %c0_i32_0 = arith.constant 0 : i32
    %c0_i32_1 = arith.constant 0 : i32
    return %c0_i32, %c0_i32_0 : i32, i32
  }
  func.func @transform_4(%arg0: i32) -> (i32, i32, i32, i32) {
    %c0_i32 = arith.constant 0 : i32
    %c0_i32_0 = arith.constant 0 : i32
    %c0_i32_1 = arith.constant 0 : i32
    %c0_i32_2 = arith.constant 0 : i32
    return %arg0, %c0_i32, %c0_i32_0, %c0_i32_1 : i32, i32, i32, i32
  }
}

</mosaic_0001>

<llo_original>
// kernel: upproj_forward.1
$region0: #{upproj_forward.1}
  #allocation0 [shape = 'u32[]', space=smem, size = 0x4, offset = 0x4, fixed_abs, tag = 'smem constant byte address 0x4 - core index']
  #allocation1 [shape = 'u32[144,128]{1,0:T(1,128)}', space=vmem, size = 0x12000, scoped, tag = 'internal scratch']
  #allocation2 [shape = 'bf16[18,24,16]{2,1,0:T(8,128)(2,1)}', space=vmem, size = 0x1b000, scoped, tag = 'scratch operand']
  %s0 = inlined_call_operand.vmem [shape: bf16[2,10,10,16], index: 0, kind: input, shape index: {}]
  %s1 = inlined_call_operand.vmem [shape: bf16[16,400], index: 1, kind: input, shape index: {}]
  %s2 = inlined_call_operand.vmem [shape: bf16[3,3,16,16], index: 2, kind: input, shape index: {}]
  %s3 = inlined_call_operand.vmem [shape: f32[2,16], index: 3, kind: input, shape index: {}]
  %s4 = inlined_call_operand.vmem [shape: bf16[2,16,8,16], index: 4, kind: output, shape index: {}]
  %s5 = sld [smem:[#allocation0]]
  $region49: #{upproj_forward.1} parent=0
    _
  %s7 = ssub.s32 1, %s5
  %s8 = scalar_select 0, %s7, %s5
  loop: start=0, step=1, limit=4
  $region2: #{upproj_forward.1} parent=0 // loop_pre_header
    _
  $region3: #{upproj_forward.1} parent=0 // loop_header
    %s10 = sphi 0, %s14
    %p11 = scmp.ge.s32.totalorder %s10, 4
    %s20 = sphi 0, %s22
    %s23 = sphi 0, %s20
    %s24 = sphi 0, %s23
    %s40 = sphi 0, %s24
    %s44 = sphi 0, %s44
    %s46 = sphi 0, %s44
    %s47 = sphi 0, %s46
    %s61 = sphi 0, %s47
    %s65 = sphi 0, %s65
    %s67 = sphi 0, %s65
    %s68 = sphi 0, %s67
    %s82 = sphi 0, %s68
    %s86 = sphi 0, %s86
    %s88 = sphi 0, %s86
    %s89 = sphi 0, %s88
    %s103 = sphi 0, %s89
    %s109 = sphi 0, %s111
    %s112 = sphi 0, %s109
    %s113 = sphi 0, %s112
    %s129 = sphi 0, %s113
  $region4: #{upproj_forward.1} parent=0 // loop_header_branch
    %13 = sbr.rel (%p11) target = $region8
  $region5: #{upproj_forward.1} parent=0 // loop_body
    %s15 = ssub.s32 %s10, 1
    %s16 = ssub.s32 %s10, 2
    %s17 = sadd.s32 %s10, 1
    %s18 = ssub.s32 %s10, %s17
    %p19 = scmp.eq.s32.totalorder %s18, 0
    %s21 = sadd.s32 %s20, 1
    %s22 = scalar_select %p19, %s20, %s21
    %p25 = pneg %p19
    %p26 = scmp.eq.s32.totalorder %s10, 1
    %p27 = por %p25, %p26
    %p28 = scmp.ne.s32.totalorder %s20, %s23
    %p29 = scmp.eq.s32.totalorder %s10, 0
    %p30 = por %p28, %p29
    %p31 = scmp.ne.s32.totalorder %s20, %s23
    %p32 = scmp.eq.s32.totalorder %s15, 1
    %p33 = por %p31, %p32
    %p34 = scmp.ne.s32.totalorder %s23, %s24
    %p35 = scmp.eq.s32.totalorder %s15, 0
    %p36 = por %p34, %p35
    %p37 = scmp.ne.s32.totalorder %s23, %s24
    %p38 = scmp.eq.s32.totalorder %s16, 1
    %p39 = por %p37, %p38
    %p41 = scmp.ne.s32.totalorder %s24, %s40
    %p42 = scmp.eq.s32.totalorder %s16, 0
    %p43 = por %p41, %p42
    %s45 = sadd.s32 %s44, 1
    %p48 = scmp.eq.s32.totalorder %s10, 1
    %p49 = scmp.ne.s32.totalorder %s44, %s46
    %p50 = scmp.eq.s32.totalorder %s10, 0
    %p51 = por %p49, %p50
    %p52 = scmp.ne.s32.totalorder %s44, %s46
    %p53 = scmp.eq.s32.totalorder %s15, 1
    %p54 = por %p52, %p53
    %p55 = scmp.ne.s32.totalorder %s46, %s47
    %p56 = scmp.eq.s32.totalorder %s15, 0
    %p57 = por %p55, %p56
    %p58 = scmp.ne.s32.totalorder %s46, %s47
    %p59 = scmp.eq.s32.totalorder %s16, 1
    %p60 = por %p58, %p59
    %p62 = scmp.ne.s32.totalorder %s47, %s61
    %p63 = scmp.eq.s32.totalorder %s16, 0
    %p64 = por %p62, %p63
    %s66 = sadd.s32 %s65, 1
    %p69 = scmp.eq.s32.totalorder %s10, 1
    %p70 = scmp.ne.s32.totalorder %s65, %s67
    %p71 = scmp.eq.s32.totalorder %s10, 0
    %p72 = por %p70, %p71
    %p73 = scmp.ne.s32.totalorder %s65, %s67
    %p74 = scmp.eq.s32.totalorder %s15, 1
    %p75 = por %p73, %p74
    %p76 = scmp.ne.s32.totalorder %s67, %s68
    %p77 = scmp.eq.s32.totalorder %s15, 0
    %p78 = por %p76, %p77
    %p79 = scmp.ne.s32.totalorder %s67, %s68
    %p80 = scmp.eq.s32.totalorder %s16, 1
    %p81 = por %p79, %p80
    %p83 = scmp.ne.s32.totalorder %s68, %s82
    %p84 = scmp.eq.s32.totalorder %s16, 0
    %p85 = por %p83, %p84
    %s87 = sadd.s32 %s86, 1
    %p90 = scmp.eq.s32.totalorder %s10, 1
    %p91 = scmp.ne.s32.totalorder %s86, %s88
    %p92 = scmp.eq.s32.totalorder %s10, 0
    %p93 = por %p91, %p92
    %p94 = scmp.ne.s32.totalorder %s86, %s88
    %p95 = scmp.eq.s32.totalorder %s15, 1
    %p96 = por %p94, %p95
    %p97 = scmp.ne.s32.totalorder %s88, %s89
    %p98 = scmp.eq.s32.totalorder %s15, 0
    %p99 = por %p97, %p98
    %p100 = scmp.ne.s32.totalorder %s88, %s89
    %p101 = scmp.eq.s32.totalorder %s16, 1
    %p102 = por %p100, %p101
    %p104 = scmp.ne.s32.totalorder %s89, %s103
    %p105 = scmp.eq.s32.totalorder %s16, 0
    %p106 = por %p104, %p105
    %s107 = ssub.s32 %s10, %s17
    %p108 = scmp.eq.s32.totalorder %s107, 0
    %s110 = sadd.s32 %s109, 1
    %s111 = scalar_select %p108, %s109, %s110
    %p114 = pneg %p108
    %p115 = scmp.eq.s32.totalorder %s10, 1
    %p116 = por %p114, %p115
    %p117 = scmp.ne.s32.totalorder %s109, %s112
    %p118 = scmp.eq.s32.totalorder %s10, 0
    %p119 = por %p117, %p118
    %p120 = scmp.ne.s32.totalorder %s109, %s112
    %p121 = scmp.eq.s32.totalorder %s15, 1
    %p122 = por %p120, %p121
    %p123 = scmp.ne.s32.totalorder %s112, %s113
    %p124 = scmp.eq.s32.totalorder %s15, 0
    %p125 = por %p123, %p124
    %p126 = scmp.ne.s32.totalorder %s112, %s113
    %p127 = scmp.eq.s32.totalorder %s16, 1
    %p128 = por %p126, %p127
    %p130 = scmp.ne.s32.totalorder %s113, %s129
    %p131 = scmp.eq.s32.totalorder %s16, 0
    %p132 = por %p130, %p131
    %p133 = scmp.le.s32.totalorder 1, %s10
    %p134 = scmp.lt.s32.totalorder %s10, 3
    %p135 = pnand %p133, %p134
    %p136 = pneg %p135
    // Predicated region
    $region9: #{upproj_forward.1} parent=5 // pred_check
      _
    $region10: #{upproj_forward.1} parent=5 // pred_check_branch
      %138 = sbr.rel (%p135) target = $region12
    $region11: #{upproj_forward.1} parent=5 // pred_region
      %s139 = ssub.s32 %s10, 1
      // Predicated region
      $region13: #{upproj_forward.1} parent=11 // pred_check
        %p140 = pneg %p57
      $region14: #{upproj_forward.1} parent=11 // pred_check_branch
        %142 = sbr.rel (%p140) target = $region16
      $region15: #{upproj_forward.1} parent=11 // pred_region
        _
      $region16: #{upproj_forward.1} parent=11 // pred_fallthru
        _
      // Predicated region
      $region17: #{upproj_forward.1} parent=11 // pred_check
        %p143 = pneg %p78
      $region18: #{upproj_forward.1} parent=11 // pred_check_branch
        %145 = sbr.rel (%p143) target = $region20
      $region19: #{upproj_forward.1} parent=11 // pred_region
        _
      $region20: #{upproj_forward.1} parent=11 // pred_fallthru
        _
      // Predicated region
      $region21: #{upproj_forward.1} parent=11 // pred_check
        %p146 = pneg %p99
      $region22: #{upproj_forward.1} parent=11 // pred_check_branch
        %148 = sbr.rel (%p146) target = $region24
      $region23: #{upproj_forward.1} parent=11 // pred_region
        _
      $region24: #{upproj_forward.1} parent=11 // pred_fallthru
        _
    $region12: #{upproj_forward.1} parent=5 // pred_fallthru
      _
    %p149 = scmp.lt.s32.totalorder %s10, 2
    // Predicated region
    $region25: #{upproj_forward.1} parent=5 // pred_check
      %p150 = pneg %p149
    $region26: #{upproj_forward.1} parent=5 // pred_check_branch
      %152 = sbr.rel (%p150) target = $region28
    $region27: #{upproj_forward.1} parent=5 // pred_region
      // Predicated region
      $region29: #{upproj_forward.1} parent=27 // pred_check
        %p153 = pneg %p30
      $region30: #{upproj_forward.1} parent=27 // pred_check_branch
        %155 = sbr.rel (%p153) target = $region32
      $region31: #{upproj_forward.1} parent=27 // pred_region
        %p156 = scmp.lt.s32.totalorder %s10, 1
        %s157 = scalar_select %p156, %s10, 1
        %s158 = smul.addr %s157, 20
        %s159 = smul.addr %s158, 4
        %s160 = scalar_lea.vmem %s0, %s159
      $region32: #{upproj_forward.1} parent=27 // pred_fallthru
        _
    $region28: #{upproj_forward.1} parent=5 // pred_fallthru
      _
    %p161 = scmp.le.s32.totalorder 1, %s10
    %p162 = scmp.lt.s32.totalorder %s10, 3
    %p163 = pnand %p161, %p162
    %p164 = pneg %p163
    // Predicated region
    $region33: #{upproj_forward.1} parent=5 // pred_check
      _
    $region34: #{upproj_forward.1} parent=5 // pred_check_branch
      %166 = sbr.rel (%p163) target = $region36
    $region35: #{upproj_forward.1} parent=5 // pred_region
      %s167 = ssub.s32 %s10, 1
      %p168 = scmp.lt.s32.totalorder %s15, 1
      %s169 = scalar_select %p168, %s15, 1
      %s170 = smul.addr %s169, 20
      %s171 = smul.addr %s170, 4
      %s172 = scalar_lea.vmem %s0, %s171
      %p173 = pneg %p36
      %p174 = pneg %p33
      %p175 = pneg %p57
      %p176 = pneg %p54
      %p177 = pneg %p78
      %p178 = pneg %p75
      %p179 = pneg %p99
      %p180 = pneg %p96
      %p181 = pneg %p125
      %p182 = pneg %p122
      %p183 = scmp.lt.s32.totalorder %s15, 1
      %s184 = scalar_select %p183, %s15, 1
      %s185 = smul.addr %s184, 16
      %s186 = smul.addr %s185, 4
      %s187 = scalar_lea.vmem %s4, %s186
      %p188 = scmp.lt.s32.totalorder %s15, 1
      %s189 = scalar_select %p188, %s15, 1
      %s190 = smul.addr %s189, 20
      %s191 = smul.addr %s190, 4
      %s192 = scalar_lea.vmem %s0, %s191
      %p193 = scmp.lt.s32.totalorder %s15, 1
      %s194 = scalar_select %p193, %s15, 1
      %s195 = smul.addr %s194, 16
      %s196 = smul.addr %s195, 4
      %s197 = scalar_lea.vmem %s4, %s196
      %v199 = vld [vmem:[%s192] sm:$0xf]
      %v200 = vld [vmem:[%s192 + $0x8] sm:$0xf]
      %v201 = vld [vmem:[%s192 + $0x10] sm:$0xf]
      %v202 = vld [vmem:[%s192 + $0x18] sm:$0xf]
      %v203 = vld [vmem:[%s192 + $0x20] sm:$0xf]
      %v204 = vld [vmem:[%s192 + $0x28] sm:$0xf]
      %v205 = vld [vmem:[%s192 + $0x30] sm:$0xf]
      %v206 = vld [vmem:[%s192 + $0x38] sm:$0xf]
      %v207 = vld [vmem:[%s1] sm:$0xf]
      %v208 = vld [vmem:[%s1 + $0x10] sm:$0xf]
      %v209 = vld [vmem:[%s192 + $0x4] sm:$0x1]
      %v210 = vld [vmem:[%s192 + $0xc] sm:$0x1]
      %v211 = vld [vmem:[%s192 + $0x14] sm:$0x1]
      %v212 = vld [vmem:[%s192 + $0x1c] sm:$0x1]
      %v213 = vld [vmem:[%s192 + $0x24] sm:$0x1]
      %v214 = vld [vmem:[%s192 + $0x2c] sm:$0x1]
      %v215 = vld [vmem:[%s192 + $0x34] sm:$0x1]
      %v216 = vld [vmem:[%s192 + $0x3c] sm:$0x1]
      %vm217 = vsmask.f32 3328
      %vm218 = vsmask.f32 7440
      %vm219 = vmor %vm217, %vm218
      %v221 = vshrl.u32 %v199, 16
      %v223 = vrot.slane %v221, 4
      %v224 = vshll.u32 %v199, 16
      %v226 = vrot.slane %v224, 5
      %v227 = vor.u32 %v223, %v226
      %v228 = vrot.slane %v227, 4
      %v230 = vshll.u32 %v209, 16
      %v232 = vrot.slane %v230, 5
      %v233 = vsel %vm219, %v228, %v232
      %v235 = vshrl.u32 %v200, 16
      %v237 = vrot.slane %v235, 4
      %v238 = vshll.u32 %v200, 16
      %v240 = vrot.slane %v238, 5
      %v241 = vor.u32 %v237, %v240
      %v242 = vrot.slane %v241, 4
      %v244 = vshll.u32 %v210, 16
      %v246 = vrot.slane %v244, 5
      %v247 = vsel %vm219, %v242, %v246
      %v249 = vshrl.u32 %v201, 16
      %v251 = vrot.slane %v249, 4
      %v252 = vshll.u32 %v201, 16
      %v254 = vrot.slane %v252, 5
      %v255 = vor.u32 %v251, %v254
      %v256 = vrot.slane %v255, 4
      %v258 = vshll.u32 %v211, 16
      %v260 = vrot.slane %v258, 5
      %v261 = vsel %vm219, %v256, %v260
      %v263 = vshrl.u32 %v202, 16
      %v265 = vrot.slane %v263, 4
      %v266 = vshll.u32 %v202, 16
      %v268 = vrot.slane %v266, 5
      %v269 = vor.u32 %v265, %v268
      %v270 = vrot.slane %v269, 4
      %v272 = vshll.u32 %v212, 16
      %v274 = vrot.slane %v272, 5
      %v275 = vsel %vm219, %v270, %v274
      %v277 = vshrl.u32 %v203, 16
      %v279 = vrot.slane %v277, 4
      %v280 = vshll.u32 %v203, 16
      %v282 = vrot.slane %v280, 5
      %v283 = vor.u32 %v279, %v282
      %v284 = vrot.slane %v283, 4
      %v286 = vshll.u32 %v213, 16
      %v288 = vrot.slane %v286, 5
      %v289 = vsel %vm219, %v284, %v288
      %v291 = vshrl.u32 %v204, 16
      %v293 = vrot.slane %v291, 4
      %v294 = vshll.u32 %v204, 16
      %v296 = vrot.slane %v294, 5
      %v297 = vor.u32 %v293, %v296
      %v298 = vrot.slane %v297, 4
      %v300 = vshll.u32 %v214, 16
      %v302 = vrot.slane %v300, 5
      %v303 = vsel %vm219, %v298, %v302
      %v305 = vshrl.u32 %v205, 16
      %v307 = vrot.slane %v305, 4
      %v308 = vshll.u32 %v205, 16
      %v310 = vrot.slane %v308, 5
      %v311 = vor.u32 %v307, %v310
      %v312 = vrot.slane %v311, 4
      %v314 = vshll.u32 %v215, 16
      %v316 = vrot.slane %v314, 5
      %v317 = vsel %vm219, %v312, %v316
      %v319 = vshrl.u32 %v206, 16
      %v321 = vrot.slane %v319, 4
      %v322 = vshll.u32 %v206, 16
      %v324 = vrot.slane %v322, 5
      %v325 = vor.u32 %v321, %v324
      %v326 = vrot.slane %v325, 4
      %v328 = vshll.u32 %v216, 16
      %v330 = vrot.slane %v328, 5
      %v331 = vsel %vm219, %v326, %v330
      %v332 = vunpack.c.l.b16 %v233
      %v333 = vunpack.c.l.b16 %v247
      %v334 = vunpack.c.l.b16 %v261
      %v335 = vunpack.c.l.b16 %v275
      %v336 = vunpack.c.l.b16 %v289
      %v337 = vunpack.c.l.b16 %v303
      %v338 = vunpack.c.l.b16 %v317
      %v339 = vunpack.c.l.b16 %v331
      %v340 = vpack.c.b16 %v333, %v332
      %v341 = vpack.c.b16 %v335, %v334
      %v342 = vpack.c.b16 %v337, %v336
      %v343 = vpack.c.b16 %v339, %v338
      %v346 = vunpack.c.l.b16 %v207
      %v347 = vunpack.c.l.b16 %v208
      %v348 = vpack.c.b16 %v347, %v346
      %349 = vrot.lane.b32.xlu0 %v348, 112
      %v350 = vpop.permute.xlu0 %349
      %vm352 = vcmask 130048
      %v354 = vsel %vm352, %v340, 0
      %v357 = vsel %vm352, %v341, 0
      %v360 = vsel %vm352, %v342, 0
      %v363 = vsel %vm352, %v343, 0
      %365 = vmatprep.subr.bf16.mxu0 0
      %366 = vmatpush1.bf16.msra.mxu0 %v350
      %367 = vmatprep.subr.bf16.mxu0 0
      %368 = vmatpush1.bf16.msra.mxu0 0
      %369 = vmatprep.subr.bf16.mxu0 0
      %370 = vmatpush1.bf16.msra.mxu0 0
      %371 = vmatprep.subr.bf16.mxu0 0
      %372 = vmatpush1.bf16.msra.mxu0 0
      %373 = vmatprep.subr.bf16.mxu0 0
      %374 = vmatpush1.bf16.msra.mxu0 0
      %375 = vmatprep.subr.bf16.mxu0 0
      %376 = vmatpush1.bf16.msra.mxu0 0
      %377 = vmatprep.subr.bf16.mxu0 0
      %378 = vmatpush1.bf16.msra.mxu0 0
      %379 = vmatprep.subr.bf16.mxu0 0
      %380 = vmatpush1.bf16.msra.mxu0 0
      %381 = vmatprep.subr.bf16.mxu0 0
      %382 = vmatpush1.bf16.msra.mxu0 0
      %383 = vmatprep.subr.bf16.mxu0 0
      %384 = vmatpush1.bf16.msra.mxu0 0
      %385 = vmatprep.subr.bf16.mxu0 0
      %386 = vmatpush1.bf16.msra.mxu0 0
      %387 = vmatprep.subr.bf16.mxu0 0
      %388 = vmatpush1.bf16.msra.mxu0 0
      %389 = vmatprep.subr.bf16.mxu0 0
      %390 = vmatpush1.bf16.msra.mxu0 0
      %391 = vmatprep.subr.bf16.mxu0 0
      %392 = vmatpush1.bf16.msra.mxu0 0
      %393 = vmatprep.subr.bf16.mxu0 0
      %394 = vmatpush1.bf16.msra.mxu0 0
      %395 = vmatprep.subr.bf16.mxu0 0
      %396 = vmatpush1.bf16.msra.mxu0 0
      %397 = vmatprep.mubr.bf16.mxu0 0
      %398 = vmatmul.mubr.bf16.gmra.mrb[0].mxu0 %v354
      %v399 = vpop.f32.mrb[0].mxu0
      %v400 = vadd.f32 0.0, %v399
      %v401 = vpop.f32.mrb[0].mxu0
      %v402 = vpop.f32.mrb[0].mxu0
      %v403 = vadd.f32 0.0, %v402
      %v404 = vpop.f32.mrb[0].mxu0
      %405 = vmatprep.mubr.bf16.mxu0 0
      %406 = vmatmul.mubr.bf16.gmra.mrb[0].mxu0 %v357
      %v407 = vpop.f32.mrb[0].mxu0
      %v408 = vadd.f32 0.0, %v407
      %v409 = vpop.f32.mrb[0].mxu0
      %v410 = vpop.f32.mrb[0].mxu0
      %v411 = vadd.f32 0.0, %v410
      %v412 = vpop.f32.mrb[0].mxu0
      %413 = vmatprep.mubr.bf16.mxu0 0
      %414 = vmatmul.mubr.bf16.gmra.mrb[0].mxu0 %v360
      %v415 = vpop.f32.mrb[0].mxu0
      %v416 = vadd.f32 0.0, %v415
      %v417 = vpop.f32.mrb[0].mxu0
      %v418 = vpop.f32.mrb[0].mxu0
      %v419 = vadd.f32 0.0, %v418
      %v420 = vpop.f32.mrb[0].mxu0
      %421 = vmatprep.mubr.bf16.mxu0 0
      %422 = vmatmul.mubr.bf16.gmra.mrb[0].mxu0 %v363
      %v423 = vpop.f32.mrb[0].mxu0
      %v424 = vadd.f32 0.0, %v423
      %v425 = vpop.f32.mrb[0].mxu0
      %v426 = vpop.f32.mrb[0].mxu0
      %v427 = vadd.f32 0.0, %v426
      %v428 = vpop.f32.mrb[0].mxu0
      %429 = vdwg.mxu0
      %v438 = vunpack.c.l.b16 %v199
      %v439 = vunpack.c.l.b16 %v200
      %v440 = vunpack.c.l.b16 %v201
      %v441 = vunpack.c.l.b16 %v202
      %v442 = vunpack.c.l.b16 %v203
      %v443 = vunpack.c.l.b16 %v204
      %v444 = vunpack.c.l.b16 %v205
      %v445 = vunpack.c.l.b16 %v206
      %v446 = vpack.c.b16 %v439, %v438
      %v447 = vpack.c.b16 %v441, %v440
      %v448 = vpack.c.b16 %v443, %v442
      %v449 = vpack.c.b16 %v445, %v444
      %v452 = vsel %vm352, %v446, 0
      %v455 = vsel %vm352, %v447, 0
      %v458 = vsel %vm352, %v448, 0
      %v461 = vsel %vm352, %v449, 0
      %463 = vmatprep.subr.bf16.mxu0 0
      %464 = vmatpush1.bf16.msra.mxu0 %v348
      %465 = vmatprep.subr.bf16.mxu0 0
      %466 = vmatpush1.bf16.msra.mxu0 0
      %467 = vmatprep.subr.bf16.mxu0 0
      %468 = vmatpush1.bf16.msra.mxu0 0
      %469 = vmatprep.subr.bf16.mxu0 0
      %470 = vmatpush1.bf16.msra.mxu0 0
      %471 = vmatprep.subr.bf16.mxu0 0
      %472 = vmatpush1.bf16.msra.mxu0 0
      %473 = vmatprep.subr.bf16.mxu0 0
      %474 = vmatpush1.bf16.msra.mxu0 0
      %475 = vmatprep.subr.bf16.mxu0 0
      %476 = vmatpush1.bf16.msra.mxu0 0
      %477 = vmatprep.subr.bf16.mxu0 0
      %478 = vmatpush1.bf16.msra.mxu0 0
      %479 = vmatprep.subr.bf16.mxu0 0
      %480 = vmatpush1.bf16.msra.mxu0 0
      %481 = vmatprep.subr.bf16.mxu0 0
      %482 = vmatpush1.bf16.msra.mxu0 0
      %483 = vmatprep.subr.bf16.mxu0 0
      %484 = vmatpush1.bf16.msra.mxu0 0
      %485 = vmatprep.subr.bf16.mxu0 0
      %486 = vmatpush1.bf16.msra.mxu0 0
      %487 = vmatprep.subr.bf16.mxu0 0
      %488 = vmatpush1.bf16.msra.mxu0 0
      %489 = vmatprep.subr.bf16.mxu0 0
      %490 = vmatpush1.bf16.msra.mxu0 0
      %491 = vmatprep.subr.bf16.mxu0 0
      %492 = vmatpush1.bf16.msra.mxu0 0
      %493 = vmatprep.subr.bf16.mxu0 0
      %494 = vmatpush1.bf16.msra.mxu0 0
      %495 = vmatprep.mubr.bf16.mxu0 0
      %496 = vmatmul.mubr.bf16.gmra.mrb[0].mxu0 %v452
      %v497 = vpop.f32.mrb[0].mxu0
      %v498 = vadd.f32 %v400, %v497
      %v499 = vpop.f32.mrb[0].mxu0
      %v500 = vpop.f32.mrb[0].mxu0
      %v501 = vadd.f32 %v403, %v500
      %v502 = vpop.f32.mrb[0].mxu0
      %503 = vmatprep.mubr.bf16.mxu0 0
      %504 = vmatmul.mubr.bf16.gmra.mrb[0].mxu0 %v455
      %v505 = vpop.f32.mrb[0].mxu0
      %v506 = vadd.f32 %v408, %v505
      %v507 = vpop.f32.mrb[0].mxu0
      %v508 = vpop.f32.mrb[0].mxu0
      %v509 = vadd.f32 %v411, %v508
      %v510 = vpop.f32.mrb[0].mxu0
      %511 = vmatprep.mubr.bf16.mxu0 0
      %512 = vmatmul.mubr.bf16.gmra.mrb[0].mxu0 %v458
      %v513 = vpop.f32.mrb[0].mxu0
      %v514 = vadd.f32 %v416, %v513
      %v515 = vpop.f32.mrb[0].mxu0
      %v516 = vpop.f32.mrb[0].mxu0
      %v517 = vadd.f32 %v419, %v516
      %v518 = vpop.f32.mrb[0].mxu0
      %519 = vmatprep.mubr.bf16.mxu0 0
      %520 = vmatmul.mubr.bf16.gmra.mrb[0].mxu0 %v461
      %v521 = vpop.f32.mrb[0].mxu0
      %v522 = vadd.f32 %v424, %v521
      %v523 = vpop.f32.mrb[0].mxu0
      %v524 = vpop.f32.mrb[0].mxu0
      %v525 = vadd.f32 %v427, %v524
      %v526 = vpop.f32.mrb[0].mxu0
      %527 = vdwg.mxu0
      %v528 = vld [vmem:[%s192] sm:$0xe]
      %v529 = vld [vmem:[%s192 + $0x8] sm:$0xe]
      %v530 = vld [vmem:[%s192 + $0x10] sm:$0xe]
      %v531 = vld [vmem:[%s192 + $0x18] sm:$0xe]
      %v532 = vld [vmem:[%s192 + $0x20] sm:$0xe]
      %v533 = vld [vmem:[%s192 + $0x28] sm:$0xe]
      %v534 = vld [vmem:[%s192 + $0x30] sm:$0xe]
      %v535 = vld [vmem:[%s192 + $0x38] sm:$0xe]
      %vm552 = vcmask 1042432
      %vm553 = vcmask 1046532
      %vm554 = vmor %vm552, %vm553
      %v555 = vrot.slane %v528, 5
      %v556 = vrot.slane %v555, 4
      %v557 = vrot.slane %v209, 5
      %v558 = vsel %vm554, %v556, %v557
      %v559 = vrot.slane %v529, 5
      %v560 = vrot.slane %v559, 4
      %v561 = vrot.slane %v210, 5
      %v562 = vsel %vm554, %v560, %v561
      %v563 = vrot.slane %v530, 5
      %v564 = vrot.slane %v563, 4
      %v565 = vrot.slane %v211, 5
      %v566 = vsel %vm554, %v564, %v565
      %v567 = vrot.slane %v531, 5
      %v568 = vrot.slane %v567, 4
      %v569 = vrot.slane %v212, 5
      %v570 = vsel %vm554, %v568, %v569
      %v571 = vrot.slane %v532, 5
      %v572 = vrot.slane %v571, 4
      %v573 = vrot.slane %v213, 5
      %v574 = vsel %vm554, %v572, %v573
      %v575 = vrot.slane %v533, 5
      %v576 = vrot.slane %v575, 4
      %v577 = vrot.slane %v214, 5
      %v578 = vsel %vm554, %v576, %v577
      %v579 = vrot.slane %v534, 5
      %v580 = vrot.slane %v579, 4
      %v581 = vrot.slane %v215, 5
      %v582 = vsel %vm554, %v580, %v581
      %v583 = vrot.slane %v535, 5
      %v584 = vrot.slane %v583, 4
      %v585 = vrot.slane %v216, 5
      %v586 = vsel %vm554, %v584, %v585
      %v587 = vunpack.c.l.b16 %v558
      %v588 = vunpack.c.l.b16 %v562
      %v589 = vunpack.c.l.b16 %v566
      %v590 = vunpack.c.l.b16 %v570
      %v591 = vunpack.c.l.b16 %v574
      %v592 = vunpack.c.l.b16 %v578
      %v593 = vunpack.c.l.b16 %v582
      %v594 = vunpack.c.l.b16 %v586
      %v595 = vpack.c.b16 %v588, %v587
      %v596 = vpack.c.b16 %v590, %v589
      %v597 = vpack.c.b16 %v592, %v591
      %v598 = vpack.c.b16 %v594, %v593
      %599 = vrot.lane.b32.xlu0 %v348, 80
      %v600 = vpop.permute.xlu0 %599
      %v603 = vsel %vm352, %v595, 0
      %v606 = vsel %vm352, %v596, 0
      %v609 = vsel %vm352, %v597, 0
      %v612 = vsel %vm352, %v598, 0
      %614 = vmatprep.subr.bf16.mxu0 0
      %615 = vmatpush1.bf16.msra.mxu0 %v600
      %616 = vmatprep.subr.bf16.mxu0 0
      %617 = vmatpush1.bf16.msra.mxu0 0
      %618 = vmatprep.subr.bf16.mxu0 0
      %619 = vmatpush1.bf16.msra.mxu0 0
      %620 = vmatprep.subr.bf16.mxu0 0
      %621 = vmatpush1.bf16.msra.mxu0 0
      %622 = vmatprep.subr.bf16.mxu0 0
      %623 = vmatpush1.bf16.msra.mxu0 0
      %624 = vmatprep.subr.bf16.mxu0 0
      %625 = vmatpush1.bf16.msra.mxu0 0
      %626 = vmatprep.subr.bf16.mxu0 0
      %627 = vmatpush1.bf16.msra.mxu0 0
      %628 = vmatprep.subr.bf16.mxu0 0
      %629 = vmatpush1.bf16.msra.mxu0 0
      %630 = vmatprep.subr.bf16.mxu0 0
      %631 = vmatpush1.bf16.msra.mxu0 0
      %632 = vmatprep.subr.bf16.mxu0 0
      %633 = vmatpush1.bf16.msra.mxu0 0
      %634 = vmatprep.subr.bf16.mxu0 0
      %635 = vmatpush1.bf16.msra.mxu0 0
      %636 = vmatprep.subr.bf16.mxu0 0
      %637 = vmatpush1.bf16.msra.mxu0 0
      %638 = vmatprep.subr.bf16.mxu0 0
      %639 = vmatpush1.bf16.msra.mxu0 0
      %640 = vmatprep.subr.bf16.mxu0 0
      %641 = vmatpush1.bf16.msra.mxu0 0
      %642 = vmatprep.subr.bf16.mxu0 0
      %643 = vmatpush1.bf16.msra.mxu0 0
      %644 = vmatprep.subr.bf16.mxu0 0
      %645 = vmatpush1.bf16.msra.mxu0 0
      %646 = vmatprep.mubr.bf16.mxu0 0
      %647 = vmatmul.mubr.bf16.gmra.mrb[0].mxu0 %v603
      %v648 = vpop.f32.mrb[0].mxu0
      %v649 = vadd.f32 0.0, %v648
      %v650 = vpop.f32.mrb[0].mxu0
      %v651 = vpop.f32.mrb[0].mxu0
      %v652 = vadd.f32 0.0, %v651
      %v653 = vpop.f32.mrb[0].mxu0
      %654 = vmatprep.mubr.bf16.mxu0 0
      %655 = vmatmul.mubr.bf16.gmra.mrb[0].mxu0 %v606
      %v656 = vpop.f32.mrb[0].mxu0
      %v657 = vadd.f32 0.0, %v656
      %v658 = vpop.f32.mrb[0].mxu0
      %v659 = vpop.f32.mrb[0].mxu0
      %v660 = vadd.f32 0.0, %v659
      %v661 = vpop.f32.mrb[0].mxu0
      %662 = vmatprep.mubr.bf16.mxu0 0
      %663 = vmatmul.mubr.bf16.gmra.mrb[0].mxu0 %v609
      %v664 = vpop.f32.mrb[0].mxu0
      %v665 = vadd.f32 0.0, %v664
      %v666 = vpop.f32.mrb[0].mxu0
      %v667 = vpop.f32.mrb[0].mxu0
      %v668 = vadd.f32 0.0, %v667
      %v669 = vpop.f32.mrb[0].mxu0
      %670 = vmatprep.mubr.bf16.mxu0 0
      %671 = vmatmul.mubr.bf16.gmra.mrb[0].mxu0 %v612
      %v672 = vpop.f32.mrb[0].mxu0
      %v673 = vadd.f32 0.0, %v672
      %v674 = vpop.f32.mrb[0].mxu0
      %v675 = vpop.f32.mrb[0].mxu0
      %v676 = vadd.f32 0.0, %v675
      %v677 = vpop.f32.mrb[0].mxu0
      %678 = vdwg.mxu0
      %v679 = vadd.f32 %v498, %v649
      %v680 = vadd.f32 %v501, %v652
      %v681 = vadd.f32 %v506, %v657
      %v682 = vadd.f32 %v509, %v660
      %v683 = vadd.f32 %v514, %v665
      %v684 = vadd.f32 %v517, %v668
      %v685 = vadd.f32 %v522, %v673
      %v686 = vadd.f32 %v525, %v676
      %v687 = vadd.f32 %v400, %v649
      %v688 = vadd.f32 %v403, %v652
      %v689 = vadd.f32 %v408, %v657
      %v690 = vadd.f32 %v411, %v660
      %v691 = vadd.f32 %v416, %v665
      %v692 = vadd.f32 %v419, %v668
      %v693 = vadd.f32 %v424, %v673
      %v694 = vadd.f32 %v427, %v676
      %s695 = scalar_lea.vmem %s192, 8
      %v696 = vld [vmem:[%s695] sm:$0xf]
      %v697 = vld [vmem:[%s695 + $0x8] sm:$0xf]
      %v698 = vld [vmem:[%s695 + $0x10] sm:$0xf]
      %v699 = vld [vmem:[%s695 + $0x18] sm:$0xf]
      %v700 = vld [vmem:[%s695 + $0x20] sm:$0xf]
      %v701 = vld [vmem:[%s695 + $0x28] sm:$0xf]
      %v702 = vld [vmem:[%s695 + $0x30] sm:$0xf]
      %v703 = vld [vmem:[%s695 + $0x38] sm:$0xf]
      %v712 = vunpack.c.l.b16 %v696
      %v713 = vunpack.c.l.b16 %v697
      %v714 = vunpack.c.l.b16 %v698
      %v715 = vunpack.c.l.b16 %v699
      %v716 = vunpack.c.l.b16 %v700
      %v717 = vunpack.c.l.b16 %v701
      %v718 = vunpack.c.l.b16 %v702
      %v719 = vunpack.c.l.b16 %v703
      %v720 = vpack.c.b16 %v713, %v712
      %v721 = vpack.c.b16 %v715, %v714
      %v722 = vpack.c.b16 %v717, %v716
      %v723 = vpack.c.b16 %v719, %v718
      %724 = vrot.lane.b32.xlu0 %v348, 48
      %v725 = vpop.permute.xlu0 %724
      %v728 = vsel %vm352, %v720, 0
      %v731 = vsel %vm352, %v721, 0
      %v734 = vsel %vm352, %v722, 0
      %v737 = vsel %vm352, %v723, 0
      %739 = vmatprep.subr.bf16.mxu0 0
      %740 = vmatpush1.bf16.msra.mxu0 %v725
      %741 = vmatprep.subr.bf16.mxu0 0
      %742 = vmatpush1.bf16.msra.mxu0 0
      %743 = vmatprep.subr.bf16.mxu0 0
      %744 = vmatpush1.bf16.msra.mxu0 0
      %745 = vmatprep.subr.bf16.mxu0 0
      %746 = vmatpush1.bf16.msra.mxu0 0
      %747 = vmatprep.subr.bf16.mxu0 0
      %748 = vmatpush1.bf16.msra.mxu0 0
      %749 = vmatprep.subr.bf16.mxu0 0
      %750 = vmatpush1.bf16.msra.mxu0 0
      %751 = vmatprep.subr.bf16.mxu0 0
      %752 = vmatpush1.bf16.msra.mxu0 0
      %753 = vmatprep.subr.bf16.mxu0 0
      %754 = vmatpush1.bf16.msra.mxu0 0
      %755 = vmatprep.subr.bf16.mxu0 0
      %756 = vmatpush1.bf16.msra.mxu0 0
      %757 = vmatprep.subr.bf16.mxu0 0
      %758 = vmatpush1.bf16.msra.mxu0 0
      %759 = vmatprep.subr.bf16.mxu0 0
      %760 = vmatpush1.bf16.msra.mxu0 0
      %761 = vmatprep.subr.bf16.mxu0 0
      %762 = vmatpush1.bf16.msra.mxu0 0
      %763 = vmatprep.subr.bf16.mxu0 0
      %764 = vmatpush1.bf16.msra.mxu0 0
      %765 = vmatprep.subr.bf16.mxu0 0
      %766 = vmatpush1.bf16.msra.mxu0 0
      %767 = vmatprep.subr.bf16.mxu0 0
      %768 = vmatpush1.bf16.msra.mxu0 0
      %769 = vmatprep.subr.bf16.mxu0 0
      %770 = vmatpush1.bf16.msra.mxu0 0
      %771 = vmatprep.mubr.bf16.mxu0 0
      %772 = vmatmul.mubr.bf16.gmra.mrb[0].mxu0 %v728
      %v773 = vpop.f32.mrb[0].mxu0
      %v774 = vadd.f32 0.0, %v773
      %v775 = vpop.f32.mrb[0].mxu0
      %v776 = vpop.f32.mrb[0].mxu0
      %v777 = vadd.f32 0.0, %v776
      %v778 = vpop.f32.mrb[0].mxu0
      %779 = vmatprep.mubr.bf16.mxu0 0
      %780 = vmatmul.mubr.bf16.gmra.mrb[0].mxu0 %v731
      %v781 = vpop.f32.mrb[0].mxu0
      %v782 = vadd.f32 0.0, %v781
      %v783 = vpop.f32.mrb[0].mxu0
      %v784 = vpop.f32.mrb[0].mxu0
      %v785 = vadd.f32 0.0, %v784
      %v786 = vpop.f32.mrb[0].mxu0
      %787 = vmatprep.mubr.bf16.mxu0 0
      %788 = vmatmul.mubr.bf16.gmra.mrb[0].mxu0 %v734
      %v789 = vpop.f32.mrb[0].mxu0
      %v790 = vadd.f32 0.0, %v789
      %v791 = vpop.f32.mrb[0].mxu0
      %v792 = vpop.f32.mrb[0].mxu0
      %v793 = vadd.f32 0.0, %v792
      %v794 = vpop.f32.mrb[0].mxu0
      %795 = vmatprep.mubr.bf16.mxu0 0
      %796 = vmatmul.mubr.bf16.gmra.mrb[0].mxu0 %v737
      %v797 = vpop.f32.mrb[0].mxu0
      %v798 = vadd.f32 0.0, %v797
      %v799 = vpop.f32.mrb[0].mxu0
      %v800 = vpop.f32.mrb[0].mxu0
      %v801 = vadd.f32 0.0, %v800
      %v802 = vpop.f32.mrb[0].mxu0
      %803 = vdwg.mxu0
      %v804 = vadd.f32 %v679, %v774
      %v805 = vadd.f32 %v680, %v777
      %v806 = vadd.f32 %v681, %v782
      %v807 = vadd.f32 %v682, %v785
      %v808 = vadd.f32 %v683, %v790
      %v809 = vadd.f32 %v684, %v793
      %v810 = vadd.f32 %v685, %v798
      %v811 = vadd.f32 %v686, %v801
      %v812 = vld [vmem:[%s695] sm:$0xf]
      %v813 = vld [vmem:[%s695 + $0x4] sm:$0x1]
      %v814 = vld [vmem:[%s695 + $0x8] sm:$0xf]
      %v815 = vld [vmem:[%s695 + $0xc] sm:$0x1]
      %v816 = vld [vmem:[%s695 + $0x10] sm:$0xf]
      %v817 = vld [vmem:[%s695 + $0x14] sm:$0x1]
      %v818 = vld [vmem:[%s695 + $0x18] sm:$0xf]
      %v819 = vld [vmem:[%s695 + $0x1c] sm:$0x1]
      %v820 = vld [vmem:[%s695 + $0x20] sm:$0xf]
      %v821 = vld [vmem:[%s695 + $0x24] sm:$0x1]
      %v822 = vld [vmem:[%s695 + $0x28] sm:$0xf]
      %v823 = vld [vmem:[%s695 + $0x2c] sm:$0x1]
      %v824 = vld [vmem:[%s695 + $0x30] sm:$0xf]
      %v825 = vld [vmem:[%s695 + $0x34] sm:$0x1]
      %v826 = vld [vmem:[%s695 + $0x38] sm:$0xf]
      %v827 = vld [vmem:[%s695 + $0x3c] sm:$0x1]
      %v829 = vshrl.u32 %v812, 16
      %v831 = vrot.slane %v829, 4
      %v832 = vshll.u32 %v812, 16
      %v834 = vrot.slane %v832, 5
      %v835 = vor.u32 %v831, %v834
      %v836 = vrot.slane %v835, 4
      %v838 = vshll.u32 %v813, 16
      %v840 = vrot.slane %v838, 5
      %v841 = vsel %vm219, %v836, %v840
      %v843 = vshrl.u32 %v814, 16
      %v845 = vrot.slane %v843, 4
      %v846 = vshll.u32 %v814, 16
      %v848 = vrot.slane %v846, 5
      %v849 = vor.u32 %v845, %v848
      %v850 = vrot.slane %v849, 4
      %v852 = vshll.u32 %v815, 16
      %v854 = vrot.slane %v852, 5
      %v855 = vsel %vm219, %v850, %v854
      %v857 = vshrl.u32 %v816, 16
      %v859 = vrot.slane %v857, 4
      %v860 = vshll.u32 %v816, 16
      %v862 = vrot.slane %v860, 5
      %v863 = vor.u32 %v859, %v862
      %v864 = vrot.slane %v863, 4
      %v866 = vshll.u32 %v817, 16
      %v868 = vrot.slane %v866, 5
      %v869 = vsel %vm219, %v864, %v868
      %v871 = vshrl.u32 %v818, 16
      %v873 = vrot.slane %v871, 4
      %v874 = vshll.u32 %v818, 16
      %v876 = vrot.slane %v874, 5
      %v877 = vor.u32 %v873, %v876
      %v878 = vrot.slane %v877, 4
      %v880 = vshll.u32 %v819, 16
      %v882 = vrot.slane %v880, 5
      %v883 = vsel %vm219, %v878, %v882
      %v885 = vshrl.u32 %v820, 16
      %v887 = vrot.slane %v885, 4
      %v888 = vshll.u32 %v820, 16
      %v890 = vrot.slane %v888, 5
      %v891 = vor.u32 %v887, %v890
      %v892 = vrot.slane %v891, 4
      %v894 = vshll.u32 %v821, 16
      %v896 = vrot.slane %v894, 5
      %v897 = vsel %vm219, %v892, %v896
      %v899 = vshrl.u32 %v822, 16
      %v901 = vrot.slane %v899, 4
      %v902 = vshll.u32 %v822, 16
      %v904 = vrot.slane %v902, 5
      %v905 = vor.u32 %v901, %v904
      %v906 = vrot.slane %v905, 4
      %v908 = vshll.u32 %v823, 16
      %v910 = vrot.slane %v908, 5
      %v911 = vsel %vm219, %v906, %v910
      %v913 = vshrl.u32 %v824, 16
      %v915 = vrot.slane %v913, 4
      %v916 = vshll.u32 %v824, 16
      %v918 = vrot.slane %v916, 5
      %v919 = vor.u32 %v915, %v918
      %v920 = vrot.slane %v919, 4
      %v922 = vshll.u32 %v825, 16
      %v924 = vrot.slane %v922, 5
      %v925 = vsel %vm219, %v920, %v924
      %v927 = vshrl.u32 %v826, 16
      %v929 = vrot.slane %v927, 4
      %v930 = vshll.u32 %v826, 16
      %v932 = vrot.slane %v930, 5
      %v933 = vor.u32 %v929, %v932
      %v934 = vrot.slane %v933, 4
      %v936 = vshll.u32 %v827, 16
      %v938 = vrot.slane %v936, 5
      %v939 = vsel %vm219, %v934, %v938
      %v940 = vld [vmem:[%s1] sm:$0xff]
      %v941 = vld [vmem:[%s1 + $0x10] sm:$0xff]
      %v942 = vunpack.c.l.b16 %v841
      %v943 = vunpack.c.l.b16 %v855
      %v944 = vunpack.c.l.b16 %v869
      %v945 = vunpack.c.l.b16 %v883
      %v946 = vunpack.c.l.b16 %v897
      %v947 = vunpack.c.l.b16 %v911
      %v948 = vunpack.c.l.b16 %v925
      %v949 = vunpack.c.l.b16 %v939
      %v950 = vpack.c.b16 %v943, %v942
      %v951 = vpack.c.b16 %v945, %v944
      %v952 = vpack.c.b16 %v947, %v946
      %v953 = vpack.c.b16 %v949, %v948
      %v956 = vunpack.c.l.b16 %v940
      %v957 = vunpack.c.h.b16 %v940
      %v958 = vunpack.c.l.b16 %v941
      %v959 = vunpack.c.h.b16 %v941
      %v960 = vpack.c.b16 %v958, %v956
      %v961 = vpack.c.b16 %v959, %v957
      %962 = vrot.lane.b32.xlu0 %v960, 16
      %v963 = vpop.permute.xlu0 %962
      %964 = vrot.lane.b32.xlu0 %v961, 16
      %v965 = vpop.permute.xlu0 %964
      %vm966 = vcmask 130048
      %v967 = vsel %vm966, %v963, %v965
      %v970 = vsel %vm352, %v950, 0
      %v973 = vsel %vm352, %v951, 0
      %v976 = vsel %vm352, %v952, 0
      %v979 = vsel %vm352, %v953, 0
      %981 = vmatprep.subr.bf16.mxu0 0
      %982 = vmatpush1.bf16.msra.mxu0 %v967
      %983 = vmatprep.subr.bf16.mxu0 0
      %984 = vmatpush1.bf16.msra.mxu0 0
      %985 = vmatprep.subr.bf16.mxu0 0
      %986 = vmatpush1.bf16.msra.mxu0 0
      %987 = vmatprep.subr.bf16.mxu0 0
      %988 = vmatpush1.bf16.msra.mxu0 0
      %989 = vmatprep.subr.bf16.mxu0 0
      %990 = vmatpush1.bf16.msra.mxu0 0
      %991 = vmatprep.subr.bf16.mxu0 0
      %992 = vmatpush1.bf16.msra.mxu0 0
      %993 = vmatprep.subr.bf16.mxu0 0
      %994 = vmatpush1.bf16.msra.mxu0 0
      %995 = vmatprep.subr.bf16.mxu0 0
      %996 = vmatpush1.bf16.msra.mxu0 0
      %997 = vmatprep.subr.bf16.mxu0 0
      %998 = vmatpush1.bf16.msra.mxu0 0
      %999 = vmatprep.subr.bf16.mxu0 0
      %1000 = vmatpush1.bf16.msra.mxu0 0
      %1001 = vmatprep.subr.bf16.mxu0 0
      %1002 = vmatpush1.bf16.msra.mxu0 0
      %1003 = vmatprep.subr.bf16.mxu0 0
      %1004 = vmatpush1.bf16.msra.mxu0 0
      %1005 = vmatprep.subr.bf16.mxu0 0
      %1006 = vmatpush1.bf16.msra.mxu0 0
      %1007 = vmatprep.subr.bf16.mxu0 0
      %1008 = vmatpush1.bf16.msra.mxu0 0
      %1009 = vmatprep.subr.bf16.mxu0 0
      %1010 = vmatpush1.bf16.msra.mxu0 0
      %1011 = vmatprep.subr.bf16.mxu0 0
      %1012 = vmatpush1.bf16.msra.mxu0 0
      %1013 = vmatprep.mubr.bf16.mxu0 0
      %1014 = vmatmul.mubr.bf16.gmra.mrb[0].mxu0 %v970
      %v1015 = vpop.f32.mrb[0].mxu0
      %v1016 = vadd.f32 0.0, %v1015
      %v1017 = vpop.f32.mrb[0].mxu0
      %v1018 = vpop.f32.mrb[0].mxu0
      %v1019 = vadd.f32 0.0, %v1018
      %v1020 = vpop.f32.mrb[0].mxu0
      %1021 = vmatprep.mubr.bf16.mxu0 0
      %1022 = vmatmul.mubr.bf16.gmra.mrb[0].mxu0 %v973
      %v1023 = vpop.f32.mrb[0].mxu0
      %v1024 = vadd.f32 0.0, %v1023
      %v1025 = vpop.f32.mrb[0].mxu0
      %v1026 = vpop.f32.mrb[0].mxu0
      %v1027 = vadd.f32 0.0, %v1026
      %v1028 = vpop.f32.mrb[0].mxu0
      %1029 = vmatprep.mubr.bf16.mxu0 0
      %1030 = vmatmul.mubr.bf16.gmra.mrb[0].mxu0 %v976
      %v1031 = vpop.f32.mrb[0].mxu0
      %v1032 = vadd.f32 0.0, %v1031
      %v1033 = vpop.f32.mrb[0].mxu0
      %v1034 = vpop.f32.mrb[0].mxu0
      %v1035 = vadd.f32 0.0, %v1034
      %v1036 = vpop.f32.mrb[0].mxu0
      %1037 = vmatprep.mubr.bf16.mxu0 0
      %1038 = vmatmul.mubr.bf16.gmra.mrb[0].mxu0 %v979
      %v1039 = vpop.f32.mrb[0].mxu0
      %v1040 = vadd.f32 0.0, %v1039
      %v1041 = vpop.f32.mrb[0].mxu0
      %v1042 = vpop.f32.mrb[0].mxu0
      %v1043 = vadd.f32 0.0, %v1042
      %v1044 = vpop.f32.mrb[0].mxu0
      %1045 = vdwg.mxu0
      %v1046 = vadd.f32 %v804, %v1016
      %v1047 = vadd.f32 %v805, %v1019
      %v1048 = vadd.f32 %v806, %v1024
      %v1049 = vadd.f32 %v807, %v1027
      %v1050 = vadd.f32 %v808, %v1032
      %v1051 = vadd.f32 %v809, %v1035
      %v1052 = vadd.f32 %v810, %v1040
      %v1053 = vadd.f32 %v811, %v1043
      %v1054 = vadd.f32 %v687, %v1016
      %v1055 = vadd.f32 %v688, %v1019
      %v1056 = vadd.f32 %v689, %v1024
      %v1057 = vadd.f32 %v690, %v1027
      %v1058 = vadd.f32 %v691, %v1032
      %v1059 = vadd.f32 %v692, %v1035
      %v1060 = vadd.f32 %v693, %v1040
      %v1061 = vadd.f32 %v694, %v1043
      %1070 = vrot.lane.b32.xlu0 %v1016, 112
      %v1071 = vpop.permute.xlu0 %1070
      %1072 = vrot.lane.b32.xlu0 %v1019, 112
      %v1073 = vpop.permute.xlu0 %1072
      %1074 = vrot.lane.b32.xlu0 %v1024, 112
      %v1075 = vpop.permute.xlu0 %1074
      %1076 = vrot.lane.b32.xlu0 %v1027, 112
      %v1077 = vpop.permute.xlu0 %1076
      %1078 = vrot.lane.b32.xlu0 %v1032, 112
      %v1079 = vpop.permute.xlu0 %1078
      %1080 = vrot.lane.b32.xlu0 %v1035, 112
      %v1081 = vpop.permute.xlu0 %1080
      %1082 = vrot.lane.b32.xlu0 %v1040, 112
      %v1083 = vpop.permute.xlu0 %1082
      %1084 = vrot.lane.b32.xlu0 %v1043, 112
      %v1085 = vpop.permute.xlu0 %1084
      %v1094 = vadd.f32 %v774, %v1071
      %v1095 = vadd.f32 %v777, %v1073
      %v1096 = vadd.f32 %v782, %v1075
      %v1097 = vadd.f32 %v785, %v1077
      %v1098 = vadd.f32 %v790, %v1079
      %v1099 = vadd.f32 %v793, %v1081
      %v1100 = vadd.f32 %v798, %v1083
      %v1101 = vadd.f32 %v801, %v1085
      %v1102 = vld [vmem:[%s695] sm:$0xe]
      %v1103 = vld [vmem:[%s695 + $0x8] sm:$0xe]
      %v1104 = vld [vmem:[%s695 + $0x10] sm:$0xe]
      %v1105 = vld [vmem:[%s695 + $0x18] sm:$0xe]
      %v1106 = vld [vmem:[%s695 + $0x20] sm:$0xe]
      %v1107 = vld [vmem:[%s695 + $0x28] sm:$0xe]
      %v1108 = vld [vmem:[%s695 + $0x30] sm:$0xe]
      %v1109 = vld [vmem:[%s695 + $0x38] sm:$0xe]
      %v1126 = vrot.slane %v1102, 5
      %v1127 = vrot.slane %v1126, 4
      %v1128 = vrot.slane %v813, 5
      %v1129 = vsel %vm554, %v1127, %v1128
      %v1130 = vrot.slane %v1103, 5
      %v1131 = vrot.slane %v1130, 4
      %v1132 = vrot.slane %v815, 5
      %v1133 = vsel %vm554, %v1131, %v1132
      %v1134 = vrot.slane %v1104, 5
      %v1135 = vrot.slane %v1134, 4
      %v1136 = vrot.slane %v817, 5
      %v1137 = vsel %vm554, %v1135, %v1136
      %v1138 = vrot.slane %v1105, 5
      %v1139 = vrot.slane %v1138, 4
      %v1140 = vrot.slane %v819, 5
      %v1141 = vsel %vm554, %v1139, %v1140
      %v1142 = vrot.slane %v1106, 5
      %v1143 = vrot.slane %v1142, 4
      %v1144 = vrot.slane %v821, 5
      %v1145 = vsel %vm554, %v1143, %v1144
      %v1146 = vrot.slane %v1107, 5
      %v1147 = vrot.slane %v1146, 4
      %v1148 = vrot.slane %v823, 5
      %v1149 = vsel %vm554, %v1147, %v1148
      %v1150 = vrot.slane %v1108, 5
      %v1151 = vrot.slane %v1150, 4
      %v1152 = vrot.slane %v825, 5
      %v1153 = vsel %vm554, %v1151, %v1152
      %v1154 = vrot.slane %v1109, 5
      %v1155 = vrot.slane %v1154, 4
      %v1156 = vrot.slane %v827, 5
      %v1157 = vsel %vm554, %v1155, %v1156
      %v1158 = vld [vmem:[%s1 + $0x4] sm:$0xf]
      %v1159 = vld [vmem:[%s1 + $0x14] sm:$0xf]
      %v1160 = vunpack.c.l.b16 %v1129
      %v1161 = vunpack.c.l.b16 %v1133
      %v1162 = vunpack.c.l.b16 %v1137
      %v1163 = vunpack.c.l.b16 %v1141
      %v1164 = vunpack.c.l.b16 %v1145
      %v1165 = vunpack.c.l.b16 %v1149
      %v1166 = vunpack.c.l.b16 %v1153
      %v1167 = vunpack.c.l.b16 %v1157
      %v1168 = vpack.c.b16 %v1161, %v1160
      %v1169 = vpack.c.b16 %v1163, %v1162
      %v1170 = vpack.c.b16 %v1165, %v1164
      %v1171 = vpack.c.b16 %v1167, %v1166
      %v1174 = vunpack.c.l.b16 %v1158
      %v1175 = vunpack.c.l.b16 %v1159
      %v1176 = vpack.c.b16 %v1175, %v1174
      %1177 = vrot.lane.b32.xlu0 %v1176, 80
      %v1178 = vpop.permute.xlu0 %1177
      %v1181 = vsel %vm352, %v1168, 0
      %v1184 = vsel %vm352, %v1169, 0
      %v1187 = vsel %vm352, %v1170, 0
      %v1190 = vsel %vm352, %v1171, 0
      %1192 = vmatprep.subr.bf16.mxu0 0
      %1193 = vmatpush1.bf16.msra.mxu0 %v1178
      %1194 = vmatprep.subr.bf16.mxu0 0
      %1195 = vmatpush1.bf16.msra.mxu0 0
      %1196 = vmatprep.subr.bf16.mxu0 0
      %1197 = vmatpush1.bf16.msra.mxu0 0
      %1198 = vmatprep.subr.bf16.mxu0 0
      %1199 = vmatpush1.bf16.msra.mxu0 0
      %1200 = vmatprep.subr.bf16.mxu0 0
      %1201 = vmatpush1.bf16.msra.mxu0 0
      %1202 = vmatprep.subr.bf16.mxu0 0
      %1203 = vmatpush1.bf16.msra.mxu0 0
      %1204 = vmatprep.subr.bf16.mxu0 0
      %1205 = vmatpush1.bf16.msra.mxu0 0
      %1206 = vmatprep.subr.bf16.mxu0 0
      %1207 = vmatpush1.bf16.msra.mxu0 0
      %1208 = vmatprep.subr.bf16.mxu0 0
      %1209 = vmatpush1.bf16.msra.mxu0 0
      %1210 = vmatprep.subr.bf16.mxu0 0
      %1211 = vmatpush1.bf16.msra.mxu0 0
      %1212 = vmatprep.subr.bf16.mxu0 0
      %1213 = vmatpush1.bf16.msra.mxu0 0
      %1214 = vmatprep.subr.bf16.mxu0 0
      %1215 = vmatpush1.bf16.msra.mxu0 0
      %1216 = vmatprep.subr.bf16.mxu0 0
      %1217 = vmatpush1.bf16.msra.mxu0 0
      %1218 = vmatprep.subr.bf16.mxu0 0
      %1219 = vmatpush1.bf16.msra.mxu0 0
      %1220 = vmatprep.subr.bf16.mxu0 0
      %1221 = vmatpush1.bf16.msra.mxu0 0
      %1222 = vmatprep.subr.bf16.mxu0 0
      %1223 = vmatpush1.bf16.msra.mxu0 0
      %1224 = vmatprep.mubr.bf16.mxu0 0
      %1225 = vmatmul.mubr.bf16.gmra.mrb[0].mxu0 %v1181
      %v1226 = vpop.f32.mrb[0].mxu0
      %v1227 = vadd.f32 0.0, %v1226
      %v1228 = vpop.f32.mrb[0].mxu0
      %v1229 = vpop.f32.mrb[0].mxu0
      %v1230 = vadd.f32 0.0, %v1229
      %v1231 = vpop.f32.mrb[0].mxu0
      %1232 = vmatprep.mubr.bf16.mxu0 0
      %1233 = vmatmul.mubr.bf16.gmra.mrb[0].mxu0 %v1184
      %v1234 = vpop.f32.mrb[0].mxu0
      %v1235 = vadd.f32 0.0, %v1234
      %v1236 = vpop.f32.mrb[0].mxu0
      %v1237 = vpop.f32.mrb[0].mxu0
      %v1238 = vadd.f32 0.0, %v1237
      %v1239 = vpop.f32.mrb[0].mxu0
      %1240 = vmatprep.mubr.bf16.mxu0 0
      %1241 = vmatmul.mubr.bf16.gmra.mrb[0].mxu0 %v1187
      %v1242 = vpop.f32.mrb[0].mxu0
      %v1243 = vadd.f32 0.0, %v1242
      %v1244 = vpop.f32.mrb[0].mxu0
      %v1245 = vpop.f32.mrb[0].mxu0
      %v1246 = vadd.f32 0.0, %v1245
      %v1247 = vpop.f32.mrb[0].mxu0
      %1248 = vmatprep.mubr.bf16.mxu0 0
      %1249 = vmatmul.mubr.bf16.gmra.mrb[0].mxu0 %v1190
      %v1250 = vpop.f32.mrb[0].mxu0
      %v1251 = vadd.f32 0.0, %v1250
      %v1252 = vpop.f32.mrb[0].mxu0
      %v1253 = vpop.f32.mrb[0].mxu0
      %v1254 = vadd.f32 0.0, %v1253
      %v1255 = vpop.f32.mrb[0].mxu0
      %1256 = vdwg.mxu0
      %v1257 = vadd.f32 %v1046, %v1227
      %v1258 = vadd.f32 %v1047, %v1230
      %v1259 = vadd.f32 %v1048, %v1235
      %v1260 = vadd.f32 %v1049, %v1238
      %v1261 = vadd.f32 %v1050, %v1243
      %v1262 = vadd.f32 %v1051, %v1246
      %v1263 = vadd.f32 %v1052, %v1251
      %v1264 = vadd.f32 %v1053, %v1254
      %v1265 = vadd.f32 %v1054, %v1227
      %v1266 = vadd.f32 %v1055, %v1230
      %v1267 = vadd.f32 %v1056, %v1235
      %v1268 = vadd.f32 %v1057, %v1238
      %v1269 = vadd.f32 %v1058, %v1243
      %v1270 = vadd.f32 %v1059, %v1246
      %v1271 = vadd.f32 %v1060, %v1251
      %v1272 = vadd.f32 %v1061, %v1254
      %1281 = vrot.lane.b32.xlu0 %v1227, 112
      %v1282 = vpop.permute.xlu0 %1281
      %1283 = vrot.lane.b32.xlu0 %v1230, 112
      %v1284 = vpop.permute.xlu0 %1283
      %1285 = vrot.lane.b32.xlu0 %v1235, 112
      %v1286 = vpop.permute.xlu0 %1285
      %1287 = vrot.lane.b32.xlu0 %v1238, 112
      %v1288 = vpop.permute.xlu0 %1287
      %1289 = vrot.lane.b32.xlu0 %v1243, 112
      %v1290 = vpop.permute.xlu0 %1289
      %1291 = vrot.lane.b32.xlu0 %v1246, 112
      %v1292 = vpop.permute.xlu0 %1291
      %1293 = vrot.lane.b32.xlu0 %v1251, 112
      %v1294 = vpop.permute.xlu0 %1293
      %1295 = vrot.lane.b32.xlu0 %v1254, 112
      %v1296 = vpop.permute.xlu0 %1295
      %v1305 = vadd.f32 %v1094, %v1282
      %v1306 = vadd.f32 %v1095, %v1284
      %v1307 = vadd.f32 %v1096, %v1286
      %v1308 = vadd.f32 %v1097, %v1288
      %v1309 = vadd.f32 %v1098, %v1290
      %v1310 = vadd.f32 %v1099, %v1292
      %v1311 = vadd.f32 %v1100, %v1294
      %v1312 = vadd.f32 %v1101, %v1296
      %v1313 = vadd.f32 %v1016, %v1227
      %v1314 = vadd.f32 %v1019, %v1230
      %v1315 = vadd.f32 %v1024, %v1235
      %v1316 = vadd.f32 %v1027, %v1238
      %v1317 = vadd.f32 %v1032, %v1243
      %v1318 = vadd.f32 %v1035, %v1246
      %v1319 = vadd.f32 %v1040, %v1251
      %v1320 = vadd.f32 %v1043, %v1254
      %s1321 = scalar_lea.vmem %s192, 16
      %v1322 = vld [vmem:[%s1321] sm:$0xf]
      %v1323 = vld [vmem:[%s1321 + $0x8] sm:$0xf]
      %v1324 = vld [vmem:[%s1321 + $0x10] sm:$0xf]
      %v1325 = vld [vmem:[%s1321 + $0x18] sm:$0xf]
      %v1326 = vld [vmem:[%s1321 + $0x20] sm:$0xf]
      %v1327 = vld [vmem:[%s1321 + $0x28] sm:$0xf]
      %v1328 = vld [vmem:[%s1321 + $0x30] sm:$0xf]
      %v1329 = vld [vmem:[%s1321 + $0x38] sm:$0xf]
      %v1330 = vld [vmem:[%s1 + $0x4] sm:$0xff]
      %v1331 = vld [vmem:[%s1 + $0x14] sm:$0xff]
      %v1340 = vunpack.c.l.b16 %v1322
      %v1341 = vunpack.c.l.b16 %v1323
      %v1342 = vunpack.c.l.b16 %v1324
      %v1343 = vunpack.c.l.b16 %v1325
      %v1344 = vunpack.c.l.b16 %v1326
      %v1345 = vunpack.c.l.b16 %v1327
      %v1346 = vunpack.c.l.b16 %v1328
      %v1347 = vunpack.c.l.b16 %v1329
      %v1348 = vpack.c.b16 %v1341, %v1340
      %v1349 = vpack.c.b16 %v1343, %v1342
      %v1350 = vpack.c.b16 %v1345, %v1344
      %v1351 = vpack.c.b16 %v1347, %v1346
      %v1354 = vunpack.c.l.b16 %v1330
      %v1355 = vunpack.c.h.b16 %v1330
      %v1356 = vunpack.c.l.b16 %v1331
      %v1357 = vunpack.c.h.b16 %v1331
      %v1358 = vpack.c.b16 %v1356, %v1354
      %v1359 = vpack.c.b16 %v1357, %v1355
      %1360 = vrot.lane.b32.xlu0 %v1358, 16
      %v1361 = vpop.permute.xlu0 %1360
      %1362 = vrot.lane.b32.xlu0 %v1359, 16
      %v1363 = vpop.permute.xlu0 %1362
      %v1364 = vsel %vm966, %v1361, %v1363
      %v1367 = vsel %vm352, %v1348, 0
      %v1370 = vsel %vm352, %v1349, 0
      %v1373 = vsel %vm352, %v1350, 0
      %v1376 = vsel %vm352, %v1351, 0
      %1378 = vmatprep.subr.bf16.mxu0 0
      %1379 = vmatpush1.bf16.msra.mxu0 %v1364
      %1380 = vmatprep.subr.bf16.mxu0 0
      %1381 = vmatpush1.bf16.msra.mxu0 0
      %1382 = vmatprep.subr.bf16.mxu0 0
      %1383 = vmatpush1.bf16.msra.mxu0 0
      %1384 = vmatprep.subr.bf16.mxu0 0
      %1385 = vmatpush1.bf16.msra.mxu0 0
      %1386 = vmatprep.subr.bf16.mxu0 0
      %1387 = vmatpush1.bf16.msra.mxu0 0
      %1388 = vmatprep.subr.bf16.mxu0 0
      %1389 = vmatpush1.bf16.msra.mxu0 0
      %1390 = vmatprep.subr.bf16.mxu0 0
      %1391 = vmatpush1.bf16.msra.mxu0 0
      %1392 = vmatprep.subr.bf16.mxu0 0
      %1393 = vmatpush1.bf16.msra.mxu0 0
      %1394 = vmatprep.subr.bf16.mxu0 0
      %1395 = vmatpush1.bf16.msra.mxu0 0
      %1396 = vmatprep.subr.bf16.mxu0 0
      %1397 = vmatpush1.bf16.msra.mxu0 0
      %1398 = vmatprep.subr.bf16.mxu0 0
      %1399 = vmatpush1.bf16.msra.mxu0 0
      %1400 = vmatprep.subr.bf16.mxu0 0
      %1401 = vmatpush1.bf16.msra.mxu0 0
      %1402 = vmatprep.subr.bf16.mxu0 0
      %1403 = vmatpush1.bf16.msra.mxu0 0
      %1404 = vmatprep.subr.bf16.mxu0 0
      %1405 = vmatpush1.bf16.msra.mxu0 0
      %1406 = vmatprep.subr.bf16.mxu0 0
      %1407 = vmatpush1.bf16.msra.mxu0 0
      %1408 = vmatprep.subr.bf16.mxu0 0
      %1409 = vmatpush1.bf16.msra.mxu0 0
      %1410 = vmatprep.mubr.bf16.mxu0 0
      %1411 = vmatmul.mubr.bf16.gmra.mrb[0].mxu0 %v1367
      %v1412 = vpop.f32.mrb[0].mxu0
      %v1413 = vadd.f32 0.0, %v1412
      %v1414 = vpop.f32.mrb[0].mxu0
      %v1415 = vpop.f32.mrb[0].mxu0
      %v1416 = vadd.f32 0.0, %v1415
      %v1417 = vpop.f32.mrb[0].mxu0
      %1418 = vmatprep.mubr.bf16.mxu0 0
      %1419 = vmatmul.mubr.bf16.gmra.mrb[0].mxu0 %v1370
      %v1420 = vpop.f32.mrb[0].mxu0
      %v1421 = vadd.f32 0.0, %v1420
      %v1422 = vpop.f32.mrb[0].mxu0
      %v1423 = vpop.f32.mrb[0].mxu0
      %v1424 = vadd.f32 0.0, %v1423
      %v1425 = vpop.f32.mrb[0].mxu0
      %1426 = vmatprep.mubr.bf16.mxu0 0
      %1427 = vmatmul.mubr.bf16.gmra.mrb[0].mxu0 %v1373
      %v1428 = vpop.f32.mrb[0].mxu0
      %v1429 = vadd.f32 0.0, %v1428
      %v1430 = vpop.f32.mrb[0].mxu0
      %v1431 = vpop.f32.mrb[0].mxu0
      %v1432 = vadd.f32 0.0, %v1431
      %v1433 = vpop.f32.mrb[0].mxu0
      %1434 = vmatprep.mubr.bf16.mxu0 0
      %1435 = vmatmul.mubr.bf16.gmra.mrb[0].mxu0 %v1376
      %v1436 = vpop.f32.mrb[0].mxu0
      %v1437 = vadd.f32 0.0, %v1436
      %v1438 = vpop.f32.mrb[0].mxu0
      %v1439 = vpop.f32.mrb[0].mxu0
      %v1440 = vadd.f32 0.0, %v1439
      %v1441 = vpop.f32.mrb[0].mxu0
      %1442 = vdwg.mxu0
      %v1443 = vadd.f32 %v1257, %v1413
      %v1444 = vadd.f32 %v1258, %v1416
      %v1445 = vadd.f32 %v1259, %v1421
      %v1446 = vadd.f32 %v1260, %v1424
      %v1447 = vadd.f32 %v1261, %v1429
      %v1448 = vadd.f32 %v1262, %v1432
      %v1449 = vadd.f32 %v1263, %v1437
      %v1450 = vadd.f32 %v1264, %v1440
      %v1451 = vadd.f32 %v1305, %v1413
      %v1452 = vadd.f32 %v1306, %v1416
      %v1453 = vadd.f32 %v1307, %v1421
      %v1454 = vadd.f32 %v1308, %v1424
      %v1455 = vadd.f32 %v1309, %v1429
      %v1456 = vadd.f32 %v1310, %v1432
      %v1457 = vadd.f32 %v1311, %v1437
      %v1458 = vadd.f32 %v1312, %v1440
      %v1459 = vld [vmem:[%s1321] sm:$0xf]
      %v1460 = vld [vmem:[%s1321 + $0x4] sm:$0x1]
      %v1461 = vld [vmem:[%s1321 + $0x8] sm:$0xf]
      %v1462 = vld [vmem:[%s1321 + $0xc] sm:$0x1]
      %v1463 = vld [vmem:[%s1321 + $0x10] sm:$0xf]
      %v1464 = vld [vmem:[%s1321 + $0x14] sm:$0x1]
      %v1465 = vld [vmem:[%s1321 + $0x18] sm:$0xf]
      %v1466 = vld [vmem:[%s1321 + $0x1c] sm:$0x1]
      %v1467 = vld [vmem:[%s1321 + $0x20] sm:$0xf]
      %v1468 = vld [vmem:[%s1321 + $0x24] sm:$0x1]
      %v1469 = vld [vmem:[%s1321 + $0x28] sm:$0xf]
      %v1470 = vld [vmem:[%s1321 + $0x2c] sm:$0x1]
      %v1471 = vld [vmem:[%s1321 + $0x30] sm:$0xf]
      %v1472 = vld [vmem:[%s1321 + $0x34] sm:$0x1]
      %v1473 = vld [vmem:[%s1321 + $0x38] sm:$0xf]
      %v1474 = vld [vmem:[%s1321 + $0x3c] sm:$0x1]
      %v1476 = vshrl.u32 %v1459, 16
      %v1478 = vrot.slane %v1476, 4
      %v1479 = vshll.u32 %v1459, 16
      %v1481 = vrot.slane %v1479, 5
      %v1482 = vor.u32 %v1478, %v1481
      %v1483 = vrot.slane %v1482, 4
      %v1485 = vshll.u32 %v1460, 16
      %v1487 = vrot.slane %v1485, 5
      %v1488 = vsel %vm219, %v1483, %v1487
      %v1490 = vshrl.u32 %v1461, 16
      %v1492 = vrot.slane %v1490, 4
      %v1493 = vshll.u32 %v1461, 16
      %v1495 = vrot.slane %v1493, 5
      %v1496 = vor.u32 %v1492, %v1495
      %v1497 = vrot.slane %v1496, 4
      %v1499 = vshll.u32 %v1462, 16
      %v1501 = vrot.slane %v1499, 5
      %v1502 = vsel %vm219, %v1497, %v1501
      %v1504 = vshrl.u32 %v1463, 16
      %v1506 = vrot.slane %v1504, 4
      %v1507 = vshll.u32 %v1463, 16
      %v1509 = vrot.slane %v1507, 5
      %v1510 = vor.u32 %v1506, %v1509
      %v1511 = vrot.slane %v1510, 4
      %v1513 = vshll.u32 %v1464, 16
      %v1515 = vrot.slane %v1513, 5
      %v1516 = vsel %vm219, %v1511, %v1515
      %v1518 = vshrl.u32 %v1465, 16
      %v1520 = vrot.slane %v1518, 4
      %v1521 = vshll.u32 %v1465, 16
      %v1523 = vrot.slane %v1521, 5
      %v1524 = vor.u32 %v1520, %v1523
      %v1525 = vrot.slane %v1524, 4
      %v1527 = vshll.u32 %v1466, 16
      %v1529 = vrot.slane %v1527, 5
      %v1530 = vsel %vm219, %v1525, %v1529
      %v1532 = vshrl.u32 %v1467, 16
      %v1534 = vrot.slane %v1532, 4
      %v1535 = vshll.u32 %v1467, 16
      %v1537 = vrot.slane %v1535, 5
      %v1538 = vor.u32 %v1534, %v1537
      %v1539 = vrot.slane %v1538, 4
      %v1541 = vshll.u32 %v1468, 16
      %v1543 = vrot.slane %v1541, 5
      %v1544 = vsel %vm219, %v1539, %v1543
      %v1546 = vshrl.u32 %v1469, 16
      %v1548 = vrot.slane %v1546, 4
      %v1549 = vshll.u32 %v1469, 16
      %v1551 = vrot.slane %v1549, 5
      %v1552 = vor.u32 %v1548, %v1551
      %v1553 = vrot.slane %v1552, 4
      %v1555 = vshll.u32 %v1470, 16
      %v1557 = vrot.slane %v1555, 5
      %v1558 = vsel %vm219, %v1553, %v1557
      %v1560 = vshrl.u32 %v1471, 16
      %v1562 = vrot.slane %v1560, 4
      %v1563 = vshll.u32 %v1471, 16
      %v1565 = vrot.slane %v1563, 5
      %v1566 = vor.u32 %v1562, %v1565
      %v1567 = vrot.slane %v1566, 4
      %v1569 = vshll.u32 %v1472, 16
      %v1571 = vrot.slane %v1569, 5
      %v1572 = vsel %vm219, %v1567, %v1571
      %v1574 = vshrl.u32 %v1473, 16
      %v1576 = vrot.slane %v1574, 4
      %v1577 = vshll.u32 %v1473, 16
      %v1579 = vrot.slane %v1577, 5
      %v1580 = vor.u32 %v1576, %v1579
      %v1581 = vrot.slane %v1580, 4
      %v1583 = vshll.u32 %v1474, 16
      %v1585 = vrot.slane %v1583, 5
      %v1586 = vsel %vm219, %v1581, %v1585
      %v1587 = vld [vmem:[%s1 + $0x8] sm:$0xf]
      %v1588 = vld [vmem:[%s1 + $0x18] sm:$0xf]
      %v1589 = vunpack.c.l.b16 %v1488
      %v1590 = vunpack.c.l.b16 %v1502
      %v1591 = vunpack.c.l.b16 %v1516
      %v1592 = vunpack.c.l.b16 %v1530
      %v1593 = vunpack.c.l.b16 %v1544
      %v1594 = vunpack.c.l.b16 %v1558
      %v1595 = vunpack.c.l.b16 %v1572
      %v1596 = vunpack.c.l.b16 %v1586
      %v1597 = vpack.c.b16 %v1590, %v1589
      %v1598 = vpack.c.b16 %v1592, %v1591
      %v1599 = vpack.c.b16 %v1594, %v1593
      %v1600 = vpack.c.b16 %v1596, %v1595
      %v1603 = vunpack.c.l.b16 %v1587
      %v1604 = vunpack.c.l.b16 %v1588
      %v1605 = vpack.c.b16 %v1604, %v1603
      %1606 = vrot.lane.b32.xlu0 %v1605, 112
      %v1607 = vpop.permute.xlu0 %1606
      %v1610 = vsel %vm352, %v1597, 0
      %v1613 = vsel %vm352, %v1598, 0
      %v1616 = vsel %vm352, %v1599, 0
      %v1619 = vsel %vm352, %v1600, 0
      %1621 = vmatprep.subr.bf16.mxu0 0
      %1622 = vmatpush1.bf16.msra.mxu0 %v1607
      %1623 = vmatprep.subr.bf16.mxu0 0
      %1624 = vmatpush1.bf16.msra.mxu0 0
      %1625 = vmatprep.subr.bf16.mxu0 0
      %1626 = vmatpush1.bf16.msra.mxu0 0
      %1627 = vmatprep.subr.bf16.mxu0 0
      %1628 = vmatpush1.bf16.msra.mxu0 0
      %1629 = vmatprep.subr.bf16.mxu0 0
      %1630 = vmatpush1.bf16.msra.mxu0 0
      %1631 = vmatprep.subr.bf16.mxu0 0
      %1632 = vmatpush1.bf16.msra.mxu0 0
      %1633 = vmatprep.subr.bf16.mxu0 0
      %1634 = vmatpush1.bf16.msra.mxu0 0
      %1635 = vmatprep.subr.bf16.mxu0 0
      %1636 = vmatpush1.bf16.msra.mxu0 0
      %1637 = vmatprep.subr.bf16.mxu0 0
      %1638 = vmatpush1.bf16.msra.mxu0 0
      %1639 = vmatprep.subr.bf16.mxu0 0
      %1640 = vmatpush1.bf16.msra.mxu0 0
      %1641 = vmatprep.subr.bf16.mxu0 0
      %1642 = vmatpush1.bf16.msra.mxu0 0
      %1643 = vmatprep.subr.bf16.mxu0 0
      %1644 = vmatpush1.bf16.msra.mxu0 0
      %1645 = vmatprep.subr.bf16.mxu0 0
      %1646 = vmatpush1.bf16.msra.mxu0 0
      %1647 = vmatprep.subr.bf16.mxu0 0
      %1648 = vmatpush1.bf16.msra.mxu0 0
      %1649 = vmatprep.subr.bf16.mxu0 0
      %1650 = vmatpush1.bf16.msra.mxu0 0
      %1651 = vmatprep.subr.bf16.mxu0 0
      %1652 = vmatpush1.bf16.msra.mxu0 0
      %1653 = vmatprep.mubr.bf16.mxu0 0
      %1654 = vmatmul.mubr.bf16.gmra.mrb[0].mxu0 %v1610
      %v1655 = vpop.f32.mrb[0].mxu0
      %v1656 = vadd.f32 0.0, %v1655
      %v1657 = vpop.f32.mrb[0].mxu0
      %v1658 = vpop.f32.mrb[0].mxu0
      %v1659 = vadd.f32 0.0, %v1658
      %v1660 = vpop.f32.mrb[0].mxu0
      %1661 = vmatprep.mubr.bf16.mxu0 0
      %1662 = vmatmul.mubr.bf16.gmra.mrb[0].mxu0 %v1613
      %v1663 = vpop.f32.mrb[0].mxu0
      %v1664 = vadd.f32 0.0, %v1663
      %v1665 = vpop.f32.mrb[0].mxu0
      %v1666 = vpop.f32.mrb[0].mxu0
      %v1667 = vadd.f32 0.0, %v1666
      %v1668 = vpop.f32.mrb[0].mxu0
      %1669 = vmatprep.mubr.bf16.mxu0 0
      %1670 = vmatmul.mubr.bf16.gmra.mrb[0].mxu0 %v1616
      %v1671 = vpop.f32.mrb[0].mxu0
      %v1672 = vadd.f32 0.0, %v1671
      %v1673 = vpop.f32.mrb[0].mxu0
      %v1674 = vpop.f32.mrb[0].mxu0
      %v1675 = vadd.f32 0.0, %v1674
      %v1676 = vpop.f32.mrb[0].mxu0
      %1677 = vmatprep.mubr.bf16.mxu0 0
      %1678 = vmatmul.mubr.bf16.gmra.mrb[0].mxu0 %v1619
      %v1679 = vpop.f32.mrb[0].mxu0
      %v1680 = vadd.f32 0.0, %v1679
      %v1681 = vpop.f32.mrb[0].mxu0
      %v1682 = vpop.f32.mrb[0].mxu0
      %v1683 = vadd.f32 0.0, %v1682
      %v1684 = vpop.f32.mrb[0].mxu0
      %1685 = vdwg.mxu0
      %v1686 = vadd.f32 %v1443, %v1656
      %v1687 = vadd.f32 %v1444, %v1659
      %v1688 = vadd.f32 %v1445, %v1664
      %v1689 = vadd.f32 %v1446, %v1667
      %v1690 = vadd.f32 %v1447, %v1672
      %v1691 = vadd.f32 %v1448, %v1675
      %v1692 = vadd.f32 %v1449, %v1680
      %v1693 = vadd.f32 %v1450, %v1683
      %v1694 = vadd.f32 %v1265, %v1656
      %v1695 = vadd.f32 %v1266, %v1659
      %v1696 = vadd.f32 %v1267, %v1664
      %v1697 = vadd.f32 %v1268, %v1667
      %v1698 = vadd.f32 %v1269, %v1672
      %v1699 = vadd.f32 %v1270, %v1675
      %v1700 = vadd.f32 %v1271, %v1680
      %v1701 = vadd.f32 %v1272, %v1683
      %1710 = vrot.lane.b32.xlu0 %v1656, 112
      %v1711 = vpop.permute.xlu0 %1710
      %1712 = vrot.lane.b32.xlu0 %v1659, 112
      %v1713 = vpop.permute.xlu0 %1712
      %1714 = vrot.lane.b32.xlu0 %v1664, 112
      %v1715 = vpop.permute.xlu0 %1714
      %1716 = vrot.lane.b32.xlu0 %v1667, 112
      %v1717 = vpop.permute.xlu0 %1716
      %1718 = vrot.lane.b32.xlu0 %v1672, 112
      %v1719 = vpop.permute.xlu0 %1718
      %1720 = vrot.lane.b32.xlu0 %v1675, 112
      %v1721 = vpop.permute.xlu0 %1720
      %1722 = vrot.lane.b32.xlu0 %v1680, 112
      %v1723 = vpop.permute.xlu0 %1722
      %1724 = vrot.lane.b32.xlu0 %v1683, 112
      %v1725 = vpop.permute.xlu0 %1724
      %v1734 = vadd.f32 %v1451, %v1711
      %v1735 = vadd.f32 %v1452, %v1713
      %v1736 = vadd.f32 %v1453, %v1715
      %v1737 = vadd.f32 %v1454, %v1717
      %v1738 = vadd.f32 %v1455, %v1719
      %v1739 = vadd.f32 %v1456, %v1721
      %v1740 = vadd.f32 %v1457, %v1723
      %v1741 = vadd.f32 %v1458, %v1725
      %v1742 = vadd.f32 %v1313, %v1656
      %v1743 = vadd.f32 %v1314, %v1659
      %v1744 = vadd.f32 %v1315, %v1664
      %v1745 = vadd.f32 %v1316, %v1667
      %v1746 = vadd.f32 %v1317, %v1672
      %v1747 = vadd.f32 %v1318, %v1675
      %v1748 = vadd.f32 %v1319, %v1680
      %v1749 = vadd.f32 %v1320, %v1683
      %v1750 = vld [vmem:[%s1321] sm:$0xe]
      %v1751 = vld [vmem:[%s1321 + $0x8] sm:$0xe]
      %v1752 = vld [vmem:[%s1321 + $0x10] sm:$0xe]
      %v1753 = vld [vmem:[%s1321 + $0x18] sm:$0xe]
      %v1754 = vld [vmem:[%s1321 + $0x20] sm:$0xe]
      %v1755 = vld [vmem:[%s1321 + $0x28] sm:$0xe]
      %v1756 = vld [vmem:[%s1321 + $0x30] sm:$0xe]
      %v1757 = vld [vmem:[%s1321 + $0x38] sm:$0xe]
      %v1774 = vrot.slane %v1750, 5
      %v1775 = vrot.slane %v1774, 4
      %v1776 = vrot.slane %v1460, 5
      %v1777 = vsel %vm554, %v1775, %v1776
      %v1778 = vrot.slane %v1751, 5
      %v1779 = vrot.slane %v1778, 4
      %v1780 = vrot.slane %v1462, 5
      %v1781 = vsel %vm554, %v1779, %v1780
      %v1782 = vrot.slane %v1752, 5
      %v1783 = vrot.slane %v1782, 4
      %v1784 = vrot.slane %v1464, 5
      %v1785 = vsel %vm554, %v1783, %v1784
      %v1786 = vrot.slane %v1753, 5
      %v1787 = vrot.slane %v1786, 4
      %v1788 = vrot.slane %v1466, 5
      %v1789 = vsel %vm554, %v1787, %v1788
      %v1790 = vrot.slane %v1754, 5
      %v1791 = vrot.slane %v1790, 4
      %v1792 = vrot.slane %v1468, 5
      %v1793 = vsel %vm554, %v1791, %v1792
      %v1794 = vrot.slane %v1755, 5
      %v1795 = vrot.slane %v1794, 4
      %v1796 = vrot.slane %v1470, 5
      %v1797 = vsel %vm554, %v1795, %v1796
      %v1798 = vrot.slane %v1756, 5
      %v1799 = vrot.slane %v1798, 4
      %v1800 = vrot.slane %v1472, 5
      %v1801 = vsel %vm554, %v1799, %v1800
      %v1802 = vrot.slane %v1757, 5
      %v1803 = vrot.slane %v1802, 4
      %v1804 = vrot.slane %v1474, 5
      %v1805 = vsel %vm554, %v1803, %v1804
      %v1806 = vld [vmem:[%s1 + $0x8] sm:$0xff]
      %v1807 = vld [vmem:[%s1 + $0x18] sm:$0xff]
      %v1808 = vunpack.c.l.b16 %v1777
      %v1809 = vunpack.c.l.b16 %v1781
      %v1810 = vunpack.c.l.b16 %v1785
      %v1811 = vunpack.c.l.b16 %v1789
      %v1812 = vunpack.c.l.b16 %v1793
      %v1813 = vunpack.c.l.b16 %v1797
      %v1814 = vunpack.c.l.b16 %v1801
      %v1815 = vunpack.c.l.b16 %v1805
      %v1816 = vpack.c.b16 %v1809, %v1808
      %v1817 = vpack.c.b16 %v1811, %v1810
      %v1818 = vpack.c.b16 %v1813, %v1812
      %v1819 = vpack.c.b16 %v1815, %v1814
      %v1822 = vunpack.c.l.b16 %v1806
      %v1823 = vunpack.c.h.b16 %v1806
      %v1824 = vunpack.c.l.b16 %v1807
      %v1825 = vunpack.c.h.b16 %v1807
      %v1826 = vpack.c.b16 %v1824, %v1822
      %v1827 = vpack.c.b16 %v1825, %v1823
      %1828 = vrot.lane.b32.xlu0 %v1826, 48
      %v1829 = vpop.permute.xlu0 %1828
      %1830 = vrot.lane.b32.xlu0 %v1827, 48
      %v1831 = vpop.permute.xlu0 %1830
      %vm1832 = vcmask 392192
      %v1833 = vsel %vm1832, %v1829, %v1831
      %v1836 = vsel %vm352, %v1816, 0
      %v1839 = vsel %vm352, %v1817, 0
      %v1842 = vsel %vm352, %v1818, 0
      %v1845 = vsel %vm352, %v1819, 0
      %1847 = vmatprep.subr.bf16.mxu0 0
      %1848 = vmatpush1.bf16.msra.mxu0 %v1833
      %1849 = vmatprep.subr.bf16.mxu0 0
      %1850 = vmatpush1.bf16.msra.mxu0 0
      %1851 = vmatprep.subr.bf16.mxu0 0
      %1852 = vmatpush1.bf16.msra.mxu0 0
      %1853 = vmatprep.subr.bf16.mxu0 0
      %1854 = vmatpush1.bf16.msra.mxu0 0
      %1855 = vmatprep.subr.bf16.mxu0 0
      %1856 = vmatpush1.bf16.msra.mxu0 0
      %1857 = vmatprep.subr.bf16.mxu0 0
      %1858 = vmatpush1.bf16.msra.mxu0 0
      %1859 = vmatprep.subr.bf16.mxu0 0
      %1860 = vmatpush1.bf16.msra.mxu0 0
      %1861 = vmatprep.subr.bf16.mxu0 0
      %1862 = vmatpush1.bf16.msra.mxu0 0
      %1863 = vmatprep.subr.bf16.mxu0 0
      %1864 = vmatpush1.bf16.msra.mxu0 0
      %1865 = vmatprep.subr.bf16.mxu0 0
      %1866 = vmatpush1.bf16.msra.mxu0 0
      %1867 = vmatprep.subr.bf16.mxu0 0
      %1868 = vmatpush1.bf16.msra.mxu0 0
      %1869 = vmatprep.subr.bf16.mxu0 0
      %1870 = vmatpush1.bf16.msra.mxu0 0
      %1871 = vmatprep.subr.bf16.mxu0 0
      %1872 = vmatpush1.bf16.msra.mxu0 0
      %1873 = vmatprep.subr.bf16.mxu0 0
      %1874 = vmatpush1.bf16.msra.mxu0 0
      %1875 = vmatprep.subr.bf16.mxu0 0
      %1876 = vmatpush1.bf16.msra.mxu0 0
      %1877 = vmatprep.subr.bf16.mxu0 0
      %1878 = vmatpush1.bf16.msra.mxu0 0
      %1879 = vmatprep.mubr.bf16.mxu0 0
      %1880 = vmatmul.mubr.bf16.gmra.mrb[0].mxu0 %v1836
      %v1881 = vpop.f32.mrb[0].mxu0
      %v1882 = vadd.f32 0.0, %v1881
      %v1883 = vpop.f32.mrb[0].mxu0
      %v1884 = vpop.f32.mrb[0].mxu0
      %v1885 = vadd.f32 0.0, %v1884
      %v1886 = vpop.f32.mrb[0].mxu0
      %1887 = vmatprep.mubr.bf16.mxu0 0
      %1888 = vmatmul.mubr.bf16.gmra.mrb[0].mxu0 %v1839
      %v1889 = vpop.f32.mrb[0].mxu0
      %v1890 = vadd.f32 0.0, %v1889
      %v1891 = vpop.f32.mrb[0].mxu0
      %v1892 = vpop.f32.mrb[0].mxu0
      %v1893 = vadd.f32 0.0, %v1892
      %v1894 = vpop.f32.mrb[0].mxu0
      %1895 = vmatprep.mubr.bf16.mxu0 0
      %1896 = vmatmul.mubr.bf16.gmra.mrb[0].mxu0 %v1842
      %v1897 = vpop.f32.mrb[0].mxu0
      %v1898 = vadd.f32 0.0, %v1897
      %v1899 = vpop.f32.mrb[0].mxu0
      %v1900 = vpop.f32.mrb[0].mxu0
      %v1901 = vadd.f32 0.0, %v1900
      %v1902 = vpop.f32.mrb[0].mxu0
      %1903 = vmatprep.mubr.bf16.mxu0 0
      %1904 = vmatmul.mubr.bf16.gmra.mrb[0].mxu0 %v1845
      %v1905 = vpop.f32.mrb[0].mxu0
      %v1906 = vadd.f32 0.0, %v1905
      %v1907 = vpop.f32.mrb[0].mxu0
      %v1908 = vpop.f32.mrb[0].mxu0
      %v1909 = vadd.f32 0.0, %v1908
      %v1910 = vpop.f32.mrb[0].mxu0
      %1911 = vdwg.mxu0
      %v1912 = vadd.f32 %v1686, %v1882
      %v1913 = vadd.f32 %v1687, %v1885
      %v1914 = vadd.f32 %v1688, %v1890
      %v1915 = vadd.f32 %v1689, %v1893
      %v1916 = vadd.f32 %v1690, %v1898
      %v1917 = vadd.f32 %v1691, %v1901
      %v1918 = vadd.f32 %v1692, %v1906
      %v1919 = vadd.f32 %v1693, %v1909
      %v1920 = vadd.f32 %v1694, %v1882
      %v1921 = vadd.f32 %v1695, %v1885
      %v1922 = vadd.f32 %v1696, %v1890
      %v1923 = vadd.f32 %v1697, %v1893
      %v1924 = vadd.f32 %v1698, %v1898
      %v1925 = vadd.f32 %v1699, %v1901
      %v1926 = vadd.f32 %v1700, %v1906
      %v1927 = vadd.f32 %v1701, %v1909
      %1936 = vrot.lane.b32.xlu0 %v1882, 112
      %v1937 = vpop.permute.xlu0 %1936
      %1938 = vrot.lane.b32.xlu0 %v1885, 112
      %v1939 = vpop.permute.xlu0 %1938
      %1940 = vrot.lane.b32.xlu0 %v1890, 112
      %v1941 = vpop.permute.xlu0 %1940
      %1942 = vrot.lane.b32.xlu0 %v1893, 112
      %v1943 = vpop.permute.xlu0 %1942
      %1944 = vrot.lane.b32.xlu0 %v1898, 112
      %v1945 = vpop.permute.xlu0 %1944
      %1946 = vrot.lane.b32.xlu0 %v1901, 112
      %v1947 = vpop.permute.xlu0 %1946
      %1948 = vrot.lane.b32.xlu0 %v1906, 112
      %v1949 = vpop.permute.xlu0 %1948
      %1950 = vrot.lane.b32.xlu0 %v1909, 112
      %v1951 = vpop.permute.xlu0 %1950
      %v1960 = vadd.f32 %v1734, %v1937
      %v1961 = vadd.f32 %v1735, %v1939
      %v1962 = vadd.f32 %v1736, %v1941
      %v1963 = vadd.f32 %v1737, %v1943
      %v1964 = vadd.f32 %v1738, %v1945
      %v1965 = vadd.f32 %v1739, %v1947
      %v1966 = vadd.f32 %v1740, %v1949
      %v1967 = vadd.f32 %v1741, %v1951
      %v1968 = vadd.f32 %v1742, %v1882
      %v1969 = vadd.f32 %v1743, %v1885
      %v1970 = vadd.f32 %v1744, %v1890
      %v1971 = vadd.f32 %v1745, %v1893
      %v1972 = vadd.f32 %v1746, %v1898
      %v1973 = vadd.f32 %v1747, %v1901
      %v1974 = vadd.f32 %v1748, %v1906
      %v1975 = vadd.f32 %v1749, %v1909
      %v1976 = vld [vmem:[%s3] sm:$0x1]
      %v1977 = vlaneseq
      %v1978 = vshrl.u32 %v1977, 7
      %v1979 = vsub.s32 0, %v1978
      %v1980 = vrot.slane %v1976, %v1979
      %v1981 = vadd.f32 %v1912, %v1980
      %v1982 = vadd.f32 %v1913, %v1980
      %v1983 = vadd.f32 %v1914, %v1980
      %v1984 = vadd.f32 %v1915, %v1980
      %v1985 = vadd.f32 %v1916, %v1980
      %v1986 = vadd.f32 %v1917, %v1980
      %v1987 = vadd.f32 %v1918, %v1980
      %v1988 = vadd.f32 %v1919, %v1980
      %v1989 = vmax.f32 %v1981, 0.0
      %v1990 = vmax.f32 %v1982, 0.0
      %v1991 = vmax.f32 %v1983, 0.0
      %v1992 = vmax.f32 %v1984, 0.0
      %v1993 = vmax.f32 %v1985, 0.0
      %v1994 = vmax.f32 %v1986, 0.0
      %v1995 = vmax.f32 %v1987, 0.0
      %v1996 = vmax.f32 %v1988, 0.0
      %1998 = vrot.lane.b32.xlu0 %v1980, 16
      %v1999 = vpop.permute.xlu0 %1998
      %v2001 = vadd.f32 %v1920, %v1999
      %v2002 = vadd.f32 %v1921, %v1999
      %v2003 = vadd.f32 %v1922, %v1999
      %v2004 = vadd.f32 %v1923, %v1999
      %v2005 = vadd.f32 %v1924, %v1999
      %v2006 = vadd.f32 %v1925, %v1999
      %v2007 = vadd.f32 %v1926, %v1999
      %v2008 = vadd.f32 %v1927, %v1999
      %v2009 = vmax.f32 %v2001, 0.0
      %v2010 = vmax.f32 %v2002, 0.0
      %v2011 = vmax.f32 %v2003, 0.0
      %v2012 = vmax.f32 %v2004, 0.0
      %v2013 = vmax.f32 %v2005, 0.0
      %v2014 = vmax.f32 %v2006, 0.0
      %v2015 = vmax.f32 %v2007, 0.0
      %v2016 = vmax.f32 %v2008, 0.0
      %2025 = vrot.lane.b32.xlu0 %v2009, 120
      %v2026 = vpop.permute.xlu0 %2025
      %2027 = vrot.lane.b32.xlu0 %v2010, 120
      %v2028 = vpop.permute.xlu0 %2027
      %2029 = vrot.lane.b32.xlu0 %v2011, 120
      %v2030 = vpop.permute.xlu0 %2029
      %2031 = vrot.lane.b32.xlu0 %v2012, 120
      %v2032 = vpop.permute.xlu0 %2031
      %2033 = vrot.lane.b32.xlu0 %v2013, 120
      %v2034 = vpop.permute.xlu0 %2033
      %2035 = vrot.lane.b32.xlu0 %v2014, 120
      %v2036 = vpop.permute.xlu0 %2035
      %2037 = vrot.lane.b32.xlu0 %v2015, 120
      %v2038 = vpop.permute.xlu0 %2037
      %2039 = vrot.lane.b32.xlu0 %v2016, 120
      %v2040 = vpop.permute.xlu0 %2039
      %vm2049 = vcmask 64512
      %v2050 = vsel %vm2049, %v1989, %v2026
      %v2051 = vsel %vm2049, %v1990, %v2028
      %v2052 = vsel %vm2049, %v1991, %v2030
      %v2053 = vsel %vm2049, %v1992, %v2032
      %v2054 = vsel %vm2049, %v1993, %v2034
      %v2055 = vsel %vm2049, %v1994, %v2036
      %v2056 = vsel %vm2049, %v1995, %v2038
      %v2057 = vsel %vm2049, %v1996, %v2040
      %2066 = vrot.lane.b32.xlu0 %v1912, 120
      %v2067 = vpop.permute.xlu0 %2066
      %2068 = vrot.lane.b32.xlu0 %v1913, 120
      %v2069 = vpop.permute.xlu0 %2068
      %2070 = vrot.lane.b32.xlu0 %v1914, 120
      %v2071 = vpop.permute.xlu0 %2070
      %2072 = vrot.lane.b32.xlu0 %v1915, 120
      %v2073 = vpop.permute.xlu0 %2072
      %2074 = vrot.lane.b32.xlu0 %v1916, 120
      %v2075 = vpop.permute.xlu0 %2074
      %2076 = vrot.lane.b32.xlu0 %v1917, 120
      %v2077 = vpop.permute.xlu0 %2076
      %2078 = vrot.lane.b32.xlu0 %v1918, 120
      %v2079 = vpop.permute.xlu0 %2078
      %2080 = vrot.lane.b32.xlu0 %v1919, 120
      %v2081 = vpop.permute.xlu0 %2080
      %2098 = vrot.lane.b32.xlu0 %v1920, 112
      %v2099 = vpop.permute.xlu0 %2098
      %2100 = vrot.lane.b32.xlu0 %v1921, 112
      %v2101 = vpop.permute.xlu0 %2100
      %2102 = vrot.lane.b32.xlu0 %v1922, 112
      %v2103 = vpop.permute.xlu0 %2102
      %2104 = vrot.lane.b32.xlu0 %v1923, 112
      %v2105 = vpop.permute.xlu0 %2104
      %2106 = vrot.lane.b32.xlu0 %v1924, 112
      %v2107 = vpop.permute.xlu0 %2106
      %2108 = vrot.lane.b32.xlu0 %v1925, 112
      %v2109 = vpop.permute.xlu0 %2108
      %2110 = vrot.lane.b32.xlu0 %v1926, 112
      %v2111 = vpop.permute.xlu0 %2110
      %2112 = vrot.lane.b32.xlu0 %v1927, 112
      %v2113 = vpop.permute.xlu0 %2112
      %v2122 = vsel %vm2049, %v2067, %v2099
      %v2123 = vsel %vm2049, %v2069, %v2101
      %v2124 = vsel %vm2049, %v2071, %v2103
      %v2125 = vsel %vm2049, %v2073, %v2105
      %v2126 = vsel %vm2049, %v2075, %v2107
      %v2127 = vsel %vm2049, %v2077, %v2109
      %v2128 = vsel %vm2049, %v2079, %v2111
      %v2129 = vsel %vm2049, %v2081, %v2113
      %v2130 = vadd.f32 %v1960, %v1999
      %v2131 = vadd.f32 %v1961, %v1999
      %v2132 = vadd.f32 %v1962, %v1999
      %v2133 = vadd.f32 %v1963, %v1999
      %v2134 = vadd.f32 %v1964, %v1999
      %v2135 = vadd.f32 %v1965, %v1999
      %v2136 = vadd.f32 %v1966, %v1999
      %v2137 = vadd.f32 %v1967, %v1999
      %v2138 = vmax.f32 %v2130, 0.0
      %v2139 = vmax.f32 %v2131, 0.0
      %v2140 = vmax.f32 %v2132, 0.0
      %v2141 = vmax.f32 %v2133, 0.0
      %v2142 = vmax.f32 %v2134, 0.0
      %v2143 = vmax.f32 %v2135, 0.0
      %v2144 = vmax.f32 %v2136, 0.0
      %v2145 = vmax.f32 %v2137, 0.0
      %2146 = vrot.lane.b32.xlu0 %v1980, 48
      %v2147 = vpop.permute.xlu0 %2146
      %v2149 = vadd.f32 %v1968, %v2147
      %v2150 = vadd.f32 %v1969, %v2147
      %v2151 = vadd.f32 %v1970, %v2147
      %v2152 = vadd.f32 %v1971, %v2147
      %v2153 = vadd.f32 %v1972, %v2147
      %v2154 = vadd.f32 %v1973, %v2147
      %v2155 = vadd.f32 %v1974, %v2147
      %v2156 = vadd.f32 %v1975, %v2147
      %v2157 = vmax.f32 %v2149, 0.0
      %v2158 = vmax.f32 %v2150, 0.0
      %v2159 = vmax.f32 %v2151, 0.0
      %v2160 = vmax.f32 %v2152, 0.0
      %v2161 = vmax.f32 %v2153, 0.0
      %v2162 = vmax.f32 %v2154, 0.0
      %v2163 = vmax.f32 %v2155, 0.0
      %v2164 = vmax.f32 %v2156, 0.0
      %2173 = vrot.lane.b32.xlu0 %v2138, 112
      %v2174 = vpop.permute.xlu0 %2173
      %2175 = vrot.lane.b32.xlu0 %v2139, 112
      %v2176 = vpop.permute.xlu0 %2175
      %2177 = vrot.lane.b32.xlu0 %v2140, 112
      %v2178 = vpop.permute.xlu0 %2177
      %2179 = vrot.lane.b32.xlu0 %v2141, 112
      %v2180 = vpop.permute.xlu0 %2179
      %2181 = vrot.lane.b32.xlu0 %v2142, 112
      %v2182 = vpop.permute.xlu0 %2181
      %2183 = vrot.lane.b32.xlu0 %v2143, 112
      %v2184 = vpop.permute.xlu0 %2183
      %2185 = vrot.lane.b32.xlu0 %v2144, 112
      %v2186 = vpop.permute.xlu0 %2185
      %2187 = vrot.lane.b32.xlu0 %v2145, 112
      %v2188 = vpop.permute.xlu0 %2187
      %2205 = vrot.lane.b32.xlu0 %v2157, 88
      %v2206 = vpop.permute.xlu0 %2205
      %2207 = vrot.lane.b32.xlu0 %v2158, 88
      %v2208 = vpop.permute.xlu0 %2207
      %2209 = vrot.lane.b32.xlu0 %v2159, 88
      %v2210 = vpop.permute.xlu0 %2209
      %2211 = vrot.lane.b32.xlu0 %v2160, 88
      %v2212 = vpop.permute.xlu0 %2211
      %2213 = vrot.lane.b32.xlu0 %v2161, 88
      %v2214 = vpop.permute.xlu0 %2213
      %2215 = vrot.lane.b32.xlu0 %v2162, 88
      %v2216 = vpop.permute.xlu0 %2215
      %2217 = vrot.lane.b32.xlu0 %v2163, 88
      %v2218 = vpop.permute.xlu0 %2217
      %2219 = vrot.lane.b32.xlu0 %v2164, 88
      %v2220 = vpop.permute.xlu0 %2219
      %v2229 = vsel %vm2049, %v2174, %v2206
      %v2230 = vsel %vm2049, %v2176, %v2208
      %v2231 = vsel %vm2049, %v2178, %v2210
      %v2232 = vsel %vm2049, %v2180, %v2212
      %v2233 = vsel %vm2049, %v2182, %v2214
      %v2234 = vsel %vm2049, %v2184, %v2216
      %v2235 = vsel %vm2049, %v2186, %v2218
      %v2236 = vsel %vm2049, %v2188, %v2220
      %2245 = vrot.lane.b32.xlu0 %v1960, 104
      %v2246 = vpop.permute.xlu0 %2245
      %2247 = vrot.lane.b32.xlu0 %v1961, 104
      %v2248 = vpop.permute.xlu0 %2247
      %2249 = vrot.lane.b32.xlu0 %v1962, 104
      %v2250 = vpop.permute.xlu0 %2249
      %2251 = vrot.lane.b32.xlu0 %v1963, 104
      %v2252 = vpop.permute.xlu0 %2251
      %2253 = vrot.lane.b32.xlu0 %v1964, 104
      %v2254 = vpop.permute.xlu0 %2253
      %2255 = vrot.lane.b32.xlu0 %v1965, 104
      %v2256 = vpop.permute.xlu0 %2255
      %2257 = vrot.lane.b32.xlu0 %v1966, 104
      %v2258 = vpop.permute.xlu0 %2257
      %2259 = vrot.lane.b32.xlu0 %v1967, 104
      %v2260 = vpop.permute.xlu0 %2259
      %2277 = vrot.lane.b32.xlu0 %v1968, 80
      %v2278 = vpop.permute.xlu0 %2277
      %2279 = vrot.lane.b32.xlu0 %v1969, 80
      %v2280 = vpop.permute.xlu0 %2279
      %2281 = vrot.lane.b32.xlu0 %v1970, 80
      %v2282 = vpop.permute.xlu0 %2281
      %2283 = vrot.lane.b32.xlu0 %v1971, 80
      %v2284 = vpop.permute.xlu0 %2283
      %2285 = vrot.lane.b32.xlu0 %v1972, 80
      %v2286 = vpop.permute.xlu0 %2285
      %2287 = vrot.lane.b32.xlu0 %v1973, 80
      %v2288 = vpop.permute.xlu0 %2287
      %2289 = vrot.lane.b32.xlu0 %v1974, 80
      %v2290 = vpop.permute.xlu0 %2289
      %2291 = vrot.lane.b32.xlu0 %v1975, 80
      %v2292 = vpop.permute.xlu0 %2291
      %v2301 = vsel %vm2049, %v2246, %v2278
      %v2302 = vsel %vm2049, %v2248, %v2280
      %v2303 = vsel %vm2049, %v2250, %v2282
      %v2304 = vsel %vm2049, %v2252, %v2284
      %v2305 = vsel %vm2049, %v2254, %v2286
      %v2306 = vsel %vm2049, %v2256, %v2288
      %v2307 = vsel %vm2049, %v2258, %v2290
      %v2308 = vsel %vm2049, %v2260, %v2292
      %vm2309 = vcmask 125952
      %2310 = vst.msk [vmem:[#allocation2] sm:$0xf] %vm2309, 0
      %2311 = vst.msk [vmem:[#allocation2 + $0x4] sm:$0xf] %vm2309, 0
      %2312 = vst.msk [vmem:[#allocation2 + $0x8] sm:$0xf] %vm2309, 0
      %s2313 = scalar_lea.vmem [#allocation2], 204
      %2314 = vst.msk [vmem:[%s2313] sm:$0xf] %vm2309, 0
      %2315 = vst.msk [vmem:[%s2313 + $0x4] sm:$0xf] %vm2309, 0
      %2316 = vst.msk [vmem:[%s2313 + $0x8] sm:$0xf] %vm2309, 0
      %vm2317 = vcmask 125955
      %vm2318 = vsmask.f32 7950
      %vm2319 = vmand %vm2317, %vm2318
      %v2320 = vld [vmem:[#allocation2] sm:$0x8]
      %v2321 = vsel %vm2319, 0, %v2320
      %2322 = vst [vmem:[#allocation2] sm:$0x8] %v2321
      %v2323 = vld [vmem:[#allocation2 + $0xc] sm:$0x8]
      %v2324 = vsel %vm2319, 0, %v2323
      %2325 = vst [vmem:[#allocation2 + $0xc] sm:$0x8] %v2324
      %v2326 = vld [vmem:[#allocation2 + $0x18] sm:$0x8]
      %v2327 = vsel %vm2319, 0, %v2326
      %2328 = vst [vmem:[#allocation2 + $0x18] sm:$0x8] %v2327
      %v2329 = vld [vmem:[#allocation2 + $0x24] sm:$0x8]
      %v2330 = vsel %vm2319, 0, %v2329
      %2331 = vst [vmem:[#allocation2 + $0x24] sm:$0x8] %v2330
      %v2332 = vld [vmem:[#allocation2 + $0x30] sm:$0x8]
      %v2333 = vsel %vm2319, 0, %v2332
      %2334 = vst [vmem:[#allocation2 + $0x30] sm:$0x8] %v2333
      %v2335 = vld [vmem:[#allocation2 + $0x3c] sm:$0x8]
      %v2336 = vsel %vm2319, 0, %v2335
      %2337 = vst [vmem:[#allocation2 + $0x3c] sm:$0x8] %v2336
      %v2338 = vld [vmem:[#allocation2 + $0x48] sm:$0x8]
      %v2339 = vsel %vm2319, 0, %v2338
      %2340 = vst [vmem:[#allocation2 + $0x48] sm:$0x8] %v2339
      %v2341 = vld [vmem:[#allocation2 + $0x54] sm:$0x8]
      %v2342 = vsel %vm2319, 0, %v2341
      %2343 = vst [vmem:[#allocation2 + $0x54] sm:$0x8] %v2342
      %v2344 = vld [vmem:[#allocation2 + $0x60] sm:$0x8]
      %v2345 = vsel %vm2319, 0, %v2344
      %2346 = vst [vmem:[#allocation2 + $0x60] sm:$0x8] %v2345
      %v2347 = vld [vmem:[#allocation2 + $0x6c] sm:$0x8]
      %v2348 = vsel %vm2319, 0, %v2347
      %2349 = vst [vmem:[#allocation2 + $0x6c] sm:$0x8] %v2348
      %v2350 = vld [vmem:[#allocation2 + $0x78] sm:$0x8]
      %v2351 = vsel %vm2319, 0, %v2350
      %2352 = vst [vmem:[#allocation2 + $0x78] sm:$0x8] %v2351
      %v2353 = vld [vmem:[#allocation2 + $0x84] sm:$0x8]
      %v2354 = vsel %vm2319, 0, %v2353
      %2355 = vst [vmem:[#allocation2 + $0x84] sm:$0x8] %v2354
      %v2356 = vld [vmem:[#allocation2 + $0x90] sm:$0x8]
      %v2357 = vsel %vm2319, 0, %v2356
      %2358 = vst [vmem:[#allocation2 + $0x90] sm:$0x8] %v2357
      %v2359 = vld [vmem:[#allocation2 + $0x9c] sm:$0x8]
      %v2360 = vsel %vm2319, 0, %v2359
      %2361 = vst [vmem:[#allocation2 + $0x9c] sm:$0x8] %v2360
      %v2362 = vld [vmem:[#allocation2 + $0xa8] sm:$0x8]
      %v2363 = vsel %vm2319, 0, %v2362
      %2364 = vst [vmem:[#allocation2 + $0xa8] sm:$0x8] %v2363
      %v2365 = vld [vmem:[#allocation2 + $0xb4] sm:$0x8]
      %v2366 = vsel %vm2319, 0, %v2365
      %2367 = vst [vmem:[#allocation2 + $0xb4] sm:$0x8] %v2366
      %v2368 = vld [vmem:[#allocation2 + $0xc0] sm:$0x8]
      %v2369 = vsel %vm2319, 0, %v2368
      %2370 = vst [vmem:[#allocation2 + $0xc0] sm:$0x8] %v2369
      %v2371 = vld [vmem:[#allocation2 + $0xcc] sm:$0x8]
      %v2372 = vsel %vm2319, 0, %v2371
      %2373 = vst [vmem:[#allocation2 + $0xcc] sm:$0x8] %v2372
      %vm2374 = vcmask 122880
      %vm2375 = vsmask.f32 256
      %vm2376 = vmand %vm2374, %vm2375
      %v2377 = vld [vmem:[#allocation2 + $0x8] sm:$0x1]
      %v2378 = vsel %vm2376, 0, %v2377
      %2379 = vst [vmem:[#allocation2 + $0x8] sm:$0x1] %v2378
      %v2380 = vld [vmem:[#allocation2 + $0x14] sm:$0x1]
      %v2381 = vsel %vm2376, 0, %v2380
      %2382 = vst [vmem:[#allocation2 + $0x14] sm:$0x1] %v2381
      %v2383 = vld [vmem:[#allocation2 + $0x20] sm:$0x1]
      %v2384 = vsel %vm2376, 0, %v2383
      %2385 = vst [vmem:[#allocation2 + $0x20] sm:$0x1] %v2384
      %v2386 = vld [vmem:[#allocation2 + $0x2c] sm:$0x1]
      %v2387 = vsel %vm2376, 0, %v2386
      %2388 = vst [vmem:[#allocation2 + $0x2c] sm:$0x1] %v2387
      %v2389 = vld [vmem:[#allocation2 + $0x38] sm:$0x1]
      %v2390 = vsel %vm2376, 0, %v2389
      %2391 = vst [vmem:[#allocation2 + $0x38] sm:$0x1] %v2390
      %v2392 = vld [vmem:[#allocation2 + $0x44] sm:$0x1]
      %v2393 = vsel %vm2376, 0, %v2392
      %2394 = vst [vmem:[#allocation2 + $0x44] sm:$0x1] %v2393
      %v2395 = vld [vmem:[#allocation2 + $0x50] sm:$0x1]
      %v2396 = vsel %vm2376, 0, %v2395
      %2397 = vst [vmem:[#allocation2 + $0x50] sm:$0x1] %v2396
      %v2398 = vld [vmem:[#allocation2 + $0x5c] sm:$0x1]
      %v2399 = vsel %vm2376, 0, %v2398
      %2400 = vst [vmem:[#allocation2 + $0x5c] sm:$0x1] %v2399
      %v2401 = vld [vmem:[#allocation2 + $0x68] sm:$0x1]
      %v2402 = vsel %vm2376, 0, %v2401
      %2403 = vst [vmem:[#allocation2 + $0x68] sm:$0x1] %v2402
      %v2404 = vld [vmem:[#allocation2 + $0x74] sm:$0x1]
      %v2405 = vsel %vm2376, 0, %v2404
      %2406 = vst [vmem:[#allocation2 + $0x74] sm:$0x1] %v2405
      %v2407 = vld [vmem:[#allocation2 + $0x80] sm:$0x1]
      %v2408 = vsel %vm2376, 0, %v2407
      %2409 = vst [vmem:[#allocation2 + $0x80] sm:$0x1] %v2408
      %v2410 = vld [vmem:[#allocation2 + $0x8c] sm:$0x1]
      %v2411 = vsel %vm2376, 0, %v2410
      %2412 = vst [vmem:[#allocation2 + $0x8c] sm:$0x1] %v2411
      %v2413 = vld [vmem:[#allocation2 + $0x98] sm:$0x1]
      %v2414 = vsel %vm2376, 0, %v2413
      %2415 = vst [vmem:[#allocation2 + $0x98] sm:$0x1] %v2414
      %v2416 = vld [vmem:[#allocation2 + $0xa4] sm:$0x1]
      %v2417 = vsel %vm2376, 0, %v2416
      %2418 = vst [vmem:[#allocation2 + $0xa4] sm:$0x1] %v2417
      %v2419 = vld [vmem:[#allocation2 + $0xb0] sm:$0x1]
      %v2420 = vsel %vm2376, 0, %v2419
      %2421 = vst [vmem:[#allocation2 + $0xb0] sm:$0x1] %v2420
      %v2422 = vld [vmem:[#allocation2 + $0xbc] sm:$0x1]
      %v2423 = vsel %vm2376, 0, %v2422
      %2424 = vst [vmem:[#allocation2 + $0xbc] sm:$0x1] %v2423
      %v2425 = vld [vmem:[#allocation2 + $0xc8] sm:$0x1]
      %v2426 = vsel %vm2376, 0, %v2425
      %2427 = vst [vmem:[#allocation2 + $0xc8] sm:$0x1] %v2426
      %v2428 = vld [vmem:[#allocation2 + $0xd4] sm:$0x1]
      %v2429 = vsel %vm2376, 0, %v2428
      %2430 = vst [vmem:[#allocation2 + $0xd4] sm:$0x1] %v2429
      %v2431 = vpack.c.bf16 %v2050, %v2050
      %v2432 = vpack.c.bf16 %v2229, %v2229
      %v2433 = vpack.c.bf16 %v2051, %v2051
      %v2434 = vpack.c.bf16 %v2230, %v2230
      %v2435 = vpack.c.bf16 %v2052, %v2052
      %v2436 = vpack.c.bf16 %v2231, %v2231
      %v2437 = vpack.c.bf16 %v2053, %v2053
      %v2438 = vpack.c.bf16 %v2232, %v2232
      %v2439 = vpack.c.bf16 %v2054, %v2054
      %v2440 = vpack.c.bf16 %v2233, %v2233
      %v2441 = vpack.c.bf16 %v2055, %v2055
      %v2442 = vpack.c.bf16 %v2234, %v2234
      %v2443 = vpack.c.bf16 %v2056, %v2056
      %v2444 = vpack.c.bf16 %v2235, %v2235
      %v2445 = vpack.c.bf16 %v2057, %v2057
      %v2446 = vpack.c.bf16 %v2236, %v2236
      %s2447 = scalar_lea.vmem [#allocation2], 12
      %2448 = vst.msk [vmem:[%s2447 + $0x4] sm:$0xf] %vm2309, %v2431
      %2449 = vst.msk [vmem:[%s2447 + $0x10] sm:$0xf] %vm2309, %v2432
      %2450 = vst.msk [vmem:[%s2447 + $0x1c] sm:$0xf] %vm2309, %v2433
      %2451 = vst.msk [vmem:[%s2447 + $0x28] sm:$0xf] %vm2309, %v2434
      %2452 = vst.msk [vmem:[%s2447 + $0x34] sm:$0xf] %vm2309, %v2435
      %2453 = vst.msk [vmem:[%s2447 + $0x40] sm:$0xf] %vm2309, %v2436
      %2454 = vst.msk [vmem:[%s2447 + $0x4c] sm:$0xf] %vm2309, %v2437
      %2455 = vst.msk [vmem:[%s2447 + $0x58] sm:$0xf] %vm2309, %v2438
      %2456 = vst.msk [vmem:[%s2447 + $0x64] sm:$0xf] %vm2309, %v2439
      %2457 = vst.msk [vmem:[%s2447 + $0x70] sm:$0xf] %vm2309, %v2440
      %2458 = vst.msk [vmem:[%s2447 + $0x7c] sm:$0xf] %vm2309, %v2441
      %2459 = vst.msk [vmem:[%s2447 + $0x88] sm:$0xf] %vm2309, %v2442
      %2460 = vst.msk [vmem:[%s2447 + $0x94] sm:$0xf] %vm2309, %v2443
      %2461 = vst.msk [vmem:[%s2447 + $0xa0] sm:$0xf] %vm2309, %v2444
      %2462 = vst.msk [vmem:[%s2447 + $0xac] sm:$0xf] %vm2309, %v2445
      %2463 = vst.msk [vmem:[%s2447 + $0xb8] sm:$0xf] %vm2309, %v2446
      %v2464 = vld [vmem:[#allocation2 + $0x4] sm:$0xf]
      %v2465 = vld [vmem:[#allocation2 + $0x10] sm:$0xf]
      %v2466 = vld [vmem:[#allocation2 + $0x1c] sm:$0xf]
      %v2467 = vld [vmem:[#allocation2 + $0x28] sm:$0xf]
      %v2468 = vld [vmem:[#allocation2 + $0x34] sm:$0xf]
      %v2469 = vld [vmem:[#allocation2 + $0x40] sm:$0xf]
      %v2470 = vld [vmem:[#allocation2 + $0x4c] sm:$0xf]
      %v2471 = vld [vmem:[#allocation2 + $0x58] sm:$0xf]
      %v2472 = vld [vmem:[#allocation2 + $0x64] sm:$0xf]
      %v2473 = vld [vmem:[#allocation2 + $0x70] sm:$0xf]
      %v2474 = vld [vmem:[#allocation2 + $0x7c] sm:$0xf]
      %v2475 = vld [vmem:[#allocation2 + $0x88] sm:$0xf]
      %v2476 = vld [vmem:[#allocation2 + $0x94] sm:$0xf]
      %v2477 = vld [vmem:[#allocation2 + $0xa0] sm:$0xf]
      %v2478 = vld [vmem:[#allocation2 + $0xac] sm:$0xf]
      %v2479 = vld [vmem:[#allocation2 + $0xb8] sm:$0xf]
      %s2480 = scalar_lea.vmem %s2, 8
      %v2481 = vld [vmem:[%s2480] sm:$0xf]
      %v2482 = vld [vmem:[%s2480 + $0x4] sm:$0xf]
      %v2483 = vld [vmem:[#allocation2] sm:$0x8]
      %v2484 = vld [vmem:[#allocation2 + $0xc] sm:$0x8]
      %v2485 = vld [vmem:[#allocation2 + $0x18] sm:$0x8]
      %v2486 = vld [vmem:[#allocation2 + $0x24] sm:$0x8]
      %v2487 = vld [vmem:[#allocation2 + $0x30] sm:$0x8]
      %v2488 = vld [vmem:[#allocation2 + $0x3c] sm:$0x8]
      %v2489 = vld [vmem:[#allocation2 + $0x48] sm:$0x8]
      %v2490 = vld [vmem:[#allocation2 + $0x54] sm:$0x8]
      %v2491 = vld [vmem:[#allocation2 + $0x60] sm:$0x8]
      %v2492 = vld [vmem:[#allocation2 + $0x6c] sm:$0x8]
      %v2493 = vld [vmem:[#allocation2 + $0x78] sm:$0x8]
      %v2494 = vld [vmem:[#allocation2 + $0x84] sm:$0x8]
      %v2495 = vld [vmem:[#allocation2 + $0x90] sm:$0x8]
      %v2496 = vld [vmem:[#allocation2 + $0x9c] sm:$0x8]
      %v2497 = vld [vmem:[#allocation2 + $0xa8] sm:$0x8]
      %v2498 = vld [vmem:[#allocation2 + $0xb4] sm:$0x8]
      %vm2499 = vsmask.f32 4368
      %vm2500 = vmor %vm2375, %vm2499
      %v2502 = vshrl.u32 %v2483, 16
      %v2504 = vrot.slane %v2502, 7
      %v2505 = vrot.slane %v2504, 4
      %v2507 = vshrl.u32 %v2464, 16
      %v2509 = vrot.slane %v2507, 7
      %v2510 = vshll.u32 %v2464, 16
      %v2512 = vor.u32 %v2509, %v2510
      %v2513 = vsel %vm2500, %v2505, %v2512
      %v2515 = vshrl.u32 %v2484, 16
      %v2517 = vrot.slane %v2515, 7
      %v2518 = vrot.slane %v2517, 4
      %v2520 = vshrl.u32 %v2465, 16
      %v2522 = vrot.slane %v2520, 7
      %v2523 = vshll.u32 %v2465, 16
      %v2525 = vor.u32 %v2522, %v2523
      %v2526 = vsel %vm2500, %v2518, %v2525
      %v2528 = vshrl.u32 %v2485, 16
      %v2530 = vrot.slane %v2528, 7
      %v2531 = vrot.slane %v2530, 4
      %v2533 = vshrl.u32 %v2466, 16
      %v2535 = vrot.slane %v2533, 7
      %v2536 = vshll.u32 %v2466, 16
      %v2538 = vor.u32 %v2535, %v2536
      %v2539 = vsel %vm2500, %v2531, %v2538
      %v2541 = vshrl.u32 %v2486, 16
      %v2543 = vrot.slane %v2541, 7
      %v2544 = vrot.slane %v2543, 4
      %v2546 = vshrl.u32 %v2467, 16
      %v2548 = vrot.slane %v2546, 7
      %v2549 = vshll.u32 %v2467, 16
      %v2551 = vor.u32 %v2548, %v2549
      %v2552 = vsel %vm2500, %v2544, %v2551
      %v2554 = vshrl.u32 %v2487, 16
      %v2556 = vrot.slane %v2554, 7
      %v2557 = vrot.slane %v2556, 4
      %v2559 = vshrl.u32 %v2468, 16
      %v2561 = vrot.slane %v2559, 7
      %v2562 = vshll.u32 %v2468, 16
      %v2564 = vor.u32 %v2561, %v2562
      %v2565 = vsel %vm2500, %v2557, %v2564
      %v2567 = vshrl.u32 %v2488, 16
      %v2569 = vrot.slane %v2567, 7
      %v2570 = vrot.slane %v2569, 4
      %v2572 = vshrl.u32 %v2469, 16
      %v2574 = vrot.slane %v2572, 7
      %v2575 = vshll.u32 %v2469, 16
      %v2577 = vor.u32 %v2574, %v2575
      %v2578 = vsel %vm2500, %v2570, %v2577
      %v2580 = vshrl.u32 %v2489, 16
      %v2582 = vrot.slane %v2580, 7
      %v2583 = vrot.slane %v2582, 4
      %v2585 = vshrl.u32 %v2470, 16
      %v2587 = vrot.slane %v2585, 7
      %v2588 = vshll.u32 %v2470, 16
      %v2590 = vor.u32 %v2587, %v2588
      %v2591 = vsel %vm2500, %v2583, %v2590
      %v2593 = vshrl.u32 %v2490, 16
      %v2595 = vrot.slane %v2593, 7
      %v2596 = vrot.slane %v2595, 4
      %v2598 = vshrl.u32 %v2471, 16
      %v2600 = vrot.slane %v2598, 7
      %v2601 = vshll.u32 %v2471, 16
      %v2603 = vor.u32 %v2600, %v2601
      %v2604 = vsel %vm2500, %v2596, %v2603
      %v2606 = vshrl.u32 %v2491, 16
      %v2608 = vrot.slane %v2606, 7
      %v2609 = vrot.slane %v2608, 4
      %v2611 = vshrl.u32 %v2472, 16
      %v2613 = vrot.slane %v2611, 7
      %v2614 = vshll.u32 %v2472, 16
      %v2616 = vor.u32 %v2613, %v2614
      %v2617 = vsel %vm2500, %v2609, %v2616
      %v2619 = vshrl.u32 %v2492, 16
      %v2621 = vrot.slane %v2619, 7
      %v2622 = vrot.slane %v2621, 4
      %v2624 = vshrl.u32 %v2473, 16
      %v2626 = vrot.slane %v2624, 7
      %v2627 = vshll.u32 %v2473, 16
      %v2629 = vor.u32 %v2626, %v2627
      %v2630 = vsel %vm2500, %v2622, %v2629
      %v2632 = vshrl.u32 %v2493, 16
      %v2634 = vrot.slane %v2632, 7
      %v2635 = vrot.slane %v2634, 4
      %v2637 = vshrl.u32 %v2474, 16
      %v2639 = vrot.slane %v2637, 7
      %v2640 = vshll.u32 %v2474, 16
      %v2642 = vor.u32 %v2639, %v2640
      %v2643 = vsel %vm2500, %v2635, %v2642
      %v2645 = vshrl.u32 %v2494, 16
      %v2647 = vrot.slane %v2645, 7
      %v2648 = vrot.slane %v2647, 4
      %v2650 = vshrl.u32 %v2475, 16
      %v2652 = vrot.slane %v2650, 7
      %v2653 = vshll.u32 %v2475, 16
      %v2655 = vor.u32 %v2652, %v2653
      %v2656 = vsel %vm2500, %v2648, %v2655
      %v2658 = vshrl.u32 %v2495, 16
      %v2660 = vrot.slane %v2658, 7
      %v2661 = vrot.slane %v2660, 4
      %v2663 = vshrl.u32 %v2476, 16
      %v2665 = vrot.slane %v2663, 7
      %v2666 = vshll.u32 %v2476, 16
      %v2668 = vor.u32 %v2665, %v2666
      %v2669 = vsel %vm2500, %v2661, %v2668
      %v2671 = vshrl.u32 %v2496, 16
      %v2673 = vrot.slane %v2671, 7
      %v2674 = vrot.slane %v2673, 4
      %v2676 = vshrl.u32 %v2477, 16
      %v2678 = vrot.slane %v2676, 7
      %v2679 = vshll.u32 %v2477, 16
      %v2681 = vor.u32 %v2678, %v2679
      %v2682 = vsel %vm2500, %v2674, %v2681
      %v2684 = vshrl.u32 %v2497, 16
      %v2686 = vrot.slane %v2684, 7
      %v2687 = vrot.slane %v2686, 4
      %v2689 = vshrl.u32 %v2478, 16
      %v2691 = vrot.slane %v2689, 7
      %v2692 = vshll.u32 %v2478, 16
      %v2694 = vor.u32 %v2691, %v2692
      %v2695 = vsel %vm2500, %v2687, %v2694
      %v2697 = vshrl.u32 %v2498, 16
      %v2699 = vrot.slane %v2697, 7
      %v2700 = vrot.slane %v2699, 4
      %v2702 = vshrl.u32 %v2479, 16
      %v2704 = vrot.slane %v2702, 7
      %v2705 = vshll.u32 %v2479, 16
      %v2707 = vor.u32 %v2704, %v2705
      %v2708 = vsel %vm2500, %v2700, %v2707
      %v2709 = vld [vmem:[%s2 + $0x4] sm:$0xf]
      %v2710 = vld [vmem:[#allocation2 + $0x8] sm:$0x1]
      %v2711 = vld [vmem:[#allocation2 + $0x14] sm:$0x1]
      %v2712 = vld [vmem:[#allocation2 + $0x20] sm:$0x1]
      %v2713 = vld [vmem:[#allocation2 + $0x2c] sm:$0x1]
      %v2714 = vld [vmem:[#allocation2 + $0x38] sm:$0x1]
      %v2715 = vld [vmem:[#allocation2 + $0x44] sm:$0x1]
      %v2716 = vld [vmem:[#allocation2 + $0x50] sm:$0x1]
      %v2717 = vld [vmem:[#allocation2 + $0x5c] sm:$0x1]
      %v2718 = vld [vmem:[#allocation2 + $0x68] sm:$0x1]
      %v2719 = vld [vmem:[#allocation2 + $0x74] sm:$0x1]
      %v2720 = vld [vmem:[#allocation2 + $0x80] sm:$0x1]
      %v2721 = vld [vmem:[#allocation2 + $0x8c] sm:$0x1]
      %v2722 = vld [vmem:[#allocation2 + $0x98] sm:$0x1]
      %v2723 = vld [vmem:[#allocation2 + $0xa4] sm:$0x1]
      %v2724 = vld [vmem:[#allocation2 + $0xb0] sm:$0x1]
      %v2725 = vld [vmem:[#allocation2 + $0xbc] sm:$0x1]
      %v2726 = vrot.slane %v2507, 4
      %v2727 = vrot.slane %v2510, 5
      %v2728 = vor.u32 %v2726, %v2727
      %v2729 = vrot.slane %v2728, 4
      %v2731 = vshll.u32 %v2710, 16
      %v2733 = vrot.slane %v2731, 5
      %v2734 = vsel %vm219, %v2729, %v2733
      %v2735 = vrot.slane %v2520, 4
      %v2736 = vrot.slane %v2523, 5
      %v2737 = vor.u32 %v2735, %v2736
      %v2738 = vrot.slane %v2737, 4
      %v2740 = vshll.u32 %v2711, 16
      %v2742 = vrot.slane %v2740, 5
      %v2743 = vsel %vm219, %v2738, %v2742
      %v2744 = vrot.slane %v2533, 4
      %v2745 = vrot.slane %v2536, 5
      %v2746 = vor.u32 %v2744, %v2745
      %v2747 = vrot.slane %v2746, 4
      %v2749 = vshll.u32 %v2712, 16
      %v2751 = vrot.slane %v2749, 5
      %v2752 = vsel %vm219, %v2747, %v2751
      %v2753 = vrot.slane %v2546, 4
      %v2754 = vrot.slane %v2549, 5
      %v2755 = vor.u32 %v2753, %v2754
      %v2756 = vrot.slane %v2755, 4
      %v2758 = vshll.u32 %v2713, 16
      %v2760 = vrot.slane %v2758, 5
      %v2761 = vsel %vm219, %v2756, %v2760
      %v2762 = vrot.slane %v2559, 4
      %v2763 = vrot.slane %v2562, 5
      %v2764 = vor.u32 %v2762, %v2763
      %v2765 = vrot.slane %v2764, 4
      %v2767 = vshll.u32 %v2714, 16
      %v2769 = vrot.slane %v2767, 5
      %v2770 = vsel %vm219, %v2765, %v2769
      %v2771 = vrot.slane %v2572, 4
      %v2772 = vrot.slane %v2575, 5
      %v2773 = vor.u32 %v2771, %v2772
      %v2774 = vrot.slane %v2773, 4
      %v2776 = vshll.u32 %v2715, 16
      %v2778 = vrot.slane %v2776, 5
      %v2779 = vsel %vm219, %v2774, %v2778
      %v2780 = vrot.slane %v2585, 4
      %v2781 = vrot.slane %v2588, 5
      %v2782 = vor.u32 %v2780, %v2781
      %v2783 = vrot.slane %v2782, 4
      %v2785 = vshll.u32 %v2716, 16
      %v2787 = vrot.slane %v2785, 5
      %v2788 = vsel %vm219, %v2783, %v2787
      %v2789 = vrot.slane %v2598, 4
      %v2790 = vrot.slane %v2601, 5
      %v2791 = vor.u32 %v2789, %v2790
      %v2792 = vrot.slane %v2791, 4
      %v2794 = vshll.u32 %v2717, 16
      %v2796 = vrot.slane %v2794, 5
      %v2797 = vsel %vm219, %v2792, %v2796
      %v2798 = vrot.slane %v2611, 4
      %v2799 = vrot.slane %v2614, 5
      %v2800 = vor.u32 %v2798, %v2799
      %v2801 = vrot.slane %v2800, 4
      %v2803 = vshll.u32 %v2718, 16
      %v2805 = vrot.slane %v2803, 5
      %v2806 = vsel %vm219, %v2801, %v2805
      %v2807 = vrot.slane %v2624, 4
      %v2808 = vrot.slane %v2627, 5
      %v2809 = vor.u32 %v2807, %v2808
      %v2810 = vrot.slane %v2809, 4
      %v2812 = vshll.u32 %v2719, 16
      %v2814 = vrot.slane %v2812, 5
      %v2815 = vsel %vm219, %v2810, %v2814
      %v2816 = vrot.slane %v2637, 4
      %v2817 = vrot.slane %v2640, 5
      %v2818 = vor.u32 %v2816, %v2817
      %v2819 = vrot.slane %v2818, 4
      %v2821 = vshll.u32 %v2720, 16
      %v2823 = vrot.slane %v2821, 5
      %v2824 = vsel %vm219, %v2819, %v2823
      %v2825 = vrot.slane %v2650, 4
      %v2826 = vrot.slane %v2653, 5
      %v2827 = vor.u32 %v2825, %v2826
      %v2828 = vrot.slane %v2827, 4
      %v2830 = vshll.u32 %v2721, 16
      %v2832 = vrot.slane %v2830, 5
      %v2833 = vsel %vm219, %v2828, %v2832
      %v2834 = vrot.slane %v2663, 4
      %v2835 = vrot.slane %v2666, 5
      %v2836 = vor.u32 %v2834, %v2835
      %v2837 = vrot.slane %v2836, 4
      %v2839 = vshll.u32 %v2722, 16
      %v2841 = vrot.slane %v2839, 5
      %v2842 = vsel %vm219, %v2837, %v2841
      %v2843 = vrot.slane %v2676, 4
      %v2844 = vrot.slane %v2679, 5
      %v2845 = vor.u32 %v2843, %v2844
      %v2846 = vrot.slane %v2845, 4
      %v2848 = vshll.u32 %v2723, 16
      %v2850 = vrot.slane %v2848, 5
      %v2851 = vsel %vm219, %v2846, %v2850
      %v2852 = vrot.slane %v2689, 4
      %v2853 = vrot.slane %v2692, 5
      %v2854 = vor.u32 %v2852, %v2853
      %v2855 = vrot.slane %v2854, 4
      %v2857 = vshll.u32 %v2724, 16
      %v2859 = vrot.slane %v2857, 5
      %v2860 = vsel %vm219, %v2855, %v2859
      %v2861 = vrot.slane %v2702, 4
      %v2862 = vrot.slane %v2705, 5
      %v2863 = vor.u32 %v2861, %v2862
      %v2864 = vrot.slane %v2863, 4
      %v2866 = vshll.u32 %v2725, 16
      %v2868 = vrot.slane %v2866, 5
      %v2869 = vsel %vm219, %v2864, %v2868
      %s2870 = scalar_lea.vmem %s2, 16
      %v2871 = vld [vmem:[%s2870] sm:$0xf]
      %v2872 = vld [vmem:[%s2447 + $0x4] sm:$0xf]
      %v2873 = vld [vmem:[%s2447 + $0x10] sm:$0xf]
      %v2874 = vld [vmem:[%s2447 + $0x1c] sm:$0xf]
      %v2875 = vld [vmem:[%s2447 + $0x28] sm:$0xf]
      %v2876 = vld [vmem:[%s2447 + $0x34] sm:$0xf]
      %v2877 = vld [vmem:[%s2447 + $0x40] sm:$0xf]
      %v2878 = vld [vmem:[%s2447 + $0x4c] sm:$0xf]
      %v2879 = vld [vmem:[%s2447 + $0x58] sm:$0xf]
      %v2880 = vld [vmem:[%s2447 + $0x64] sm:$0xf]
      %v2881 = vld [vmem:[%s2447 + $0x70] sm:$0xf]
      %v2882 = vld [vmem:[%s2447 + $0x7c] sm:$0xf]
      %v2883 = vld [vmem:[%s2447 + $0x88] sm:$0xf]
      %v2884 = vld [vmem:[%s2447 + $0x94] sm:$0xf]
      %v2885 = vld [vmem:[%s2447 + $0xa0] sm:$0xf]
      %v2886 = vld [vmem:[%s2447 + $0xac] sm:$0xf]
      %v2887 = vld [vmem:[%s2447 + $0xb8] sm:$0xf]
      %s2888 = scalar_lea.vmem %s2, 32
      %v2889 = vld [vmem:[%s2888] sm:$0xf]
      %v2890 = vld [vmem:[%s2888 + $0x4] sm:$0xf]
      %v2907 = vunpack.c.l.b16 %v2872
      %v2908 = vunpack.c.l.b16 %v2873
      %v2909 = vunpack.c.l.b16 %v2874
      %v2910 = vunpack.c.l.b16 %v2875
      %v2911 = vunpack.c.l.b16 %v2876
      %v2912 = vunpack.c.l.b16 %v2877
      %v2913 = vunpack.c.l.b16 %v2878
      %v2914 = vunpack.c.l.b16 %v2879
      %v2915 = vunpack.c.l.b16 %v2880
      %v2916 = vunpack.c.l.b16 %v2881
      %v2917 = vunpack.c.l.b16 %v2882
      %v2918 = vunpack.c.l.b16 %v2883
      %v2919 = vunpack.c.l.b16 %v2884
      %v2920 = vunpack.c.l.b16 %v2885
      %v2921 = vunpack.c.l.b16 %v2886
      %v2922 = vunpack.c.l.b16 %v2887
      %v2923 = vpack.c.b16 %v2908, %v2907
      %v2924 = vpack.c.b16 %v2910, %v2909
      %v2925 = vpack.c.b16 %v2912, %v2911
      %v2926 = vpack.c.b16 %v2914, %v2913
      %v2927 = vpack.c.b16 %v2916, %v2915
      %v2928 = vpack.c.b16 %v2918, %v2917
      %v2929 = vpack.c.b16 %v2920, %v2919
      %v2930 = vpack.c.b16 %v2922, %v2921
      %v2933 = vunpack.c.l.b16 %v2889
      %v2934 = vunpack.c.l.b16 %v2890
      %v2935 = vpack.c.b16 %v2934, %v2933
      %v2938 = vsel %vm352, %v2923, 0
      %v2941 = vsel %vm352, %v2924, 0
      %v2944 = vsel %vm352, %v2925, 0
      %v2947 = vsel %vm352, %v2926, 0
      %v2950 = vsel %vm352, %v2927, 0
      %v2953 = vsel %vm352, %v2928, 0
      %v2956 = vsel %vm352, %v2929, 0
      %v2959 = vsel %vm352, %v2930, 0
      %2961 = vmatprep.subr.bf16.mxu0 0
      %2962 = vmatpush1.bf16.msra.mxu0 %v2935
      %2963 = vmatprep.subr.bf16.mxu0 0
      %2964 = vmatpush1.bf16.msra.mxu0 0
      %2965 = vmatprep.subr.bf16.mxu0 0
      %2966 = vmatpush1.bf16.msra.mxu0 0
      %2967 = vmatprep.subr.bf16.mxu0 0
      %2968 = vmatpush1.bf16.msra.mxu0 0
      %2969 = vmatprep.subr.bf16.mxu0 0
      %2970 = vmatpush1.bf16.msra.mxu0 0
      %2971 = vmatprep.subr.bf16.mxu0 0
      %2972 = vmatpush1.bf16.msra.mxu0 0
      %2973 = vmatprep.subr.bf16.mxu0 0
      %2974 = vmatpush1.bf16.msra.mxu0 0
      %2975 = vmatprep.subr.bf16.mxu0 0
      %2976 = vmatpush1.bf16.msra.mxu0 0
      %2977 = vmatprep.subr.bf16.mxu0 0
      %2978 = vmatpush1.bf16.msra.mxu0 0
      %2979 = vmatprep.subr.bf16.mxu0 0
      %2980 = vmatpush1.bf16.msra.mxu0 0
      %2981 = vmatprep.subr.bf16.mxu0 0
      %2982 = vmatpush1.bf16.msra.mxu0 0
      %2983 = vmatprep.subr.bf16.mxu0 0
      %2984 = vmatpush1.bf16.msra.mxu0 0
      %2985 = vmatprep.subr.bf16.mxu0 0
      %2986 = vmatpush1.bf16.msra.mxu0 0
      %2987 = vmatprep.subr.bf16.mxu0 0
      %2988 = vmatpush1.bf16.msra.mxu0 0
      %2989 = vmatprep.subr.bf16.mxu0 0
      %2990 = vmatpush1.bf16.msra.mxu0 0
      %2991 = vmatprep.subr.bf16.mxu0 0
      %2992 = vmatpush1.bf16.msra.mxu0 0
      %2993 = vmatprep.mubr.bf16.mxu0 0
      %2994 = vmatmul.mubr.bf16.gmra.mrb[0].mxu0 %v2938
      %v2995 = vpop.f32.mrb[0].mxu0
      %v2996 = vadd.f32 0.0, %v2995
      %v2997 = vpop.f32.mrb[0].mxu0
      %v2998 = vpop.f32.mrb[0].mxu0
      %v2999 = vadd.f32 0.0, %v2998
      %v3000 = vpop.f32.mrb[0].mxu0
      %3001 = vmatprep.mubr.bf16.mxu0 0
      %3002 = vmatmul.mubr.bf16.gmra.mrb[0].mxu0 %v2941
      %v3003 = vpop.f32.mrb[0].mxu0
      %v3004 = vadd.f32 0.0, %v3003
      %v3005 = vpop.f32.mrb[0].mxu0
      %v3006 = vpop.f32.mrb[0].mxu0
      %v3007 = vadd.f32 0.0, %v3006
      %v3008 = vpop.f32.mrb[0].mxu0
      %3009 = vmatprep.mubr.bf16.mxu0 0
      %3010 = vmatmul.mubr.bf16.gmra.mrb[0].mxu0 %v2944
      %v3011 = vpop.f32.mrb[0].mxu0
      %v3012 = vadd.f32 0.0, %v3011
      %v3013 = vpop.f32.mrb[0].mxu0
      %v3014 = vpop.f32.mrb[0].mxu0
      %v3015 = vadd.f32 0.0, %v3014
      %v3016 = vpop.f32.mrb[0].mxu0
      %3017 = vmatprep.mubr.bf16.mxu0 0
      %3018 = vmatmul.mubr.bf16.gmra.mrb[0].mxu0 %v2947
      %v3019 = vpop.f32.mrb[0].mxu0
      %v3020 = vadd.f32 0.0, %v3019
      %v3021 = vpop.f32.mrb[0].mxu0
      %v3022 = vpop.f32.mrb[0].mxu0
      %v3023 = vadd.f32 0.0, %v3022
      %v3024 = vpop.f32.mrb[0].mxu0
      %3025 = vmatprep.mubr.bf16.mxu0 0
      %3026 = vmatmul.mubr.bf16.gmra.mrb[0].mxu0 %v2950
      %v3027 = vpop.f32.mrb[0].mxu0
      %v3028 = vadd.f32 0.0, %v3027
      %v3029 = vpop.f32.mrb[0].mxu0
      %v3030 = vpop.f32.mrb[0].mxu0
      %v3031 = vadd.f32 0.0, %v3030
      %v3032 = vpop.f32.mrb[0].mxu0
      %3033 = vmatprep.mubr.bf16.mxu0 0
      %3034 = vmatmul.mubr.bf16.gmra.mrb[0].mxu0 %v2953
      %v3035 = vpop.f32.mrb[0].mxu0
      %v3036 = vadd.f32 0.0, %v3035
      %v3037 = vpop.f32.mrb[0].mxu0
      %v3038 = vpop.f32.mrb[0].mxu0
      %v3039 = vadd.f32 0.0, %v3038
      %v3040 = vpop.f32.mrb[0].mxu0
      %3041 = vmatprep.mubr.bf16.mxu0 0
      %3042 = vmatmul.mubr.bf16.gmra.mrb[0].mxu0 %v2956
      %v3043 = vpop.f32.mrb[0].mxu0
      %v3044 = vadd.f32 0.0, %v3043
      %v3045 = vpop.f32.mrb[0].mxu0
      %v3046 = vpop.f32.mrb[0].mxu0
      %v3047 = vadd.f32 0.0, %v3046
      %v3048 = vpop.f32.mrb[0].mxu0
      %3049 = vmatprep.mubr.bf16.mxu0 0
      %3050 = vmatmul.mubr.bf16.gmra.mrb[0].mxu0 %v2959
      %v3051 = vpop.f32.mrb[0].mxu0
      %v3052 = vadd.f32 0.0, %v3051
      %v3053 = vpop.f32.mrb[0].mxu0
      %v3054 = vpop.f32.mrb[0].mxu0
      %v3055 = vadd.f32 0.0, %v3054
      %v3056 = vpop.f32.mrb[0].mxu0
      %3057 = vdwg.mxu0
      %v3074 = vunpack.c.l.b16 %v2464
      %v3075 = vunpack.c.l.b16 %v2465
      %v3076 = vunpack.c.l.b16 %v2466
      %v3077 = vunpack.c.l.b16 %v2467
      %v3078 = vunpack.c.l.b16 %v2468
      %v3079 = vunpack.c.l.b16 %v2469
      %v3080 = vunpack.c.l.b16 %v2470
      %v3081 = vunpack.c.l.b16 %v2471
      %v3082 = vunpack.c.l.b16 %v2472
      %v3083 = vunpack.c.l.b16 %v2473
      %v3084 = vunpack.c.l.b16 %v2474
      %v3085 = vunpack.c.l.b16 %v2475
      %v3086 = vunpack.c.l.b16 %v2476
      %v3087 = vunpack.c.l.b16 %v2477
      %v3088 = vunpack.c.l.b16 %v2478
      %v3089 = vunpack.c.l.b16 %v2479
      %v3090 = vpack.c.b16 %v3075, %v3074
      %v3091 = vpack.c.b16 %v3077, %v3076
      %v3092 = vpack.c.b16 %v3079, %v3078
      %v3093 = vpack.c.b16 %v3081, %v3080
      %v3094 = vpack.c.b16 %v3083, %v3082
      %v3095 = vpack.c.b16 %v3085, %v3084
      %v3096 = vpack.c.b16 %v3087, %v3086
      %v3097 = vpack.c.b16 %v3089, %v3088
      %v3100 = vunpack.c.l.b16 %v2481
      %v3101 = vunpack.c.l.b16 %v2482
      %v3102 = vpack.c.b16 %v3101, %v3100
      %v3105 = vsel %vm352, %v3090, 0
      %v3108 = vsel %vm352, %v3091, 0
      %v3111 = vsel %vm352, %v3092, 0
      %v3114 = vsel %vm352, %v3093, 0
      %v3117 = vsel %vm352, %v3094, 0
      %v3120 = vsel %vm352, %v3095, 0
      %v3123 = vsel %vm352, %v3096, 0
      %v3126 = vsel %vm352, %v3097, 0
      %3128 = vmatprep.subr.bf16.mxu0 0
      %3129 = vmatpush1.bf16.msra.mxu0 %v3102
      %3130 = vmatprep.subr.bf16.mxu0 0
      %3131 = vmatpush1.bf16.msra.mxu0 0
      %3132 = vmatprep.subr.bf16.mxu0 0
      %3133 = vmatpush1.bf16.msra.mxu0 0
      %3134 = vmatprep.subr.bf16.mxu0 0
      %3135 = vmatpush1.bf16.msra.mxu0 0
      %3136 = vmatprep.subr.bf16.mxu0 0
      %3137 = vmatpush1.bf16.msra.mxu0 0
      %3138 = vmatprep.subr.bf16.mxu0 0
      %3139 = vmatpush1.bf16.msra.mxu0 0
      %3140 = vmatprep.subr.bf16.mxu0 0
      %3141 = vmatpush1.bf16.msra.mxu0 0
      %3142 = vmatprep.subr.bf16.mxu0 0
      %3143 = vmatpush1.bf16.msra.mxu0 0
      %3144 = vmatprep.subr.bf16.mxu0 0
      %3145 = vmatpush1.bf16.msra.mxu0 0
      %3146 = vmatprep.subr.bf16.mxu0 0
      %3147 = vmatpush1.bf16.msra.mxu0 0
      %3148 = vmatprep.subr.bf16.mxu0 0
      %3149 = vmatpush1.bf16.msra.mxu0 0
      %3150 = vmatprep.subr.bf16.mxu0 0
      %3151 = vmatpush1.bf16.msra.mxu0 0
      %3152 = vmatprep.subr.bf16.mxu0 0
      %3153 = vmatpush1.bf16.msra.mxu0 0
      %3154 = vmatprep.subr.bf16.mxu0 0
      %3155 = vmatpush1.bf16.msra.mxu0 0
      %3156 = vmatprep.subr.bf16.mxu0 0
      %3157 = vmatpush1.bf16.msra.mxu0 0
      %3158 = vmatprep.subr.bf16.mxu0 0
      %3159 = vmatpush1.bf16.msra.mxu0 0
      %3160 = vmatprep.mubr.bf16.mxu0 0
      %3161 = vmatmul.mubr.bf16.gmra.mrb[0].mxu0 %v3105
      %v3162 = vpop.f32.mrb[0].mxu0
      %v3163 = vadd.f32 %v2996, %v3162
      %v3164 = vpop.f32.mrb[0].mxu0
      %v3165 = vpop.f32.mrb[0].mxu0
      %v3166 = vadd.f32 %v2999, %v3165
      %v3167 = vpop.f32.mrb[0].mxu0
      %3168 = vmatprep.mubr.bf16.mxu0 0
      %3169 = vmatmul.mubr.bf16.gmra.mrb[0].mxu0 %v3108
      %v3170 = vpop.f32.mrb[0].mxu0
      %v3171 = vadd.f32 %v3004, %v3170
      %v3172 = vpop.f32.mrb[0].mxu0
      %v3173 = vpop.f32.mrb[0].mxu0
      %v3174 = vadd.f32 %v3007, %v3173
      %v3175 = vpop.f32.mrb[0].mxu0
      %3176 = vmatprep.mubr.bf16.mxu0 0
      %3177 = vmatmul.mubr.bf16.gmra.mrb[0].mxu0 %v3111
      %v3178 = vpop.f32.mrb[0].mxu0
      %v3179 = vadd.f32 %v3012, %v3178
      %v3180 = vpop.f32.mrb[0].mxu0
      %v3181 = vpop.f32.mrb[0].mxu0
      %v3182 = vadd.f32 %v3015, %v3181
      %v3183 = vpop.f32.mrb[0].mxu0
      %3184 = vmatprep.mubr.bf16.mxu0 0
      %3185 = vmatmul.mubr.bf16.gmra.mrb[0].mxu0 %v3114
      %v3186 = vpop.f32.mrb[0].mxu0
      %v3187 = vadd.f32 %v3020, %v3186
      %v3188 = vpop.f32.mrb[0].mxu0
      %v3189 = vpop.f32.mrb[0].mxu0
      %v3190 = vadd.f32 %v3023, %v3189
      %v3191 = vpop.f32.mrb[0].mxu0
      %3192 = vmatprep.mubr.bf16.mxu0 0
      %3193 = vmatmul.mubr.bf16.gmra.mrb[0].mxu0 %v3117
      %v3194 = vpop.f32.mrb[0].mxu0
      %v3195 = vadd.f32 %v3028, %v3194
      %v3196 = vpop.f32.mrb[0].mxu0
      %v3197 = vpop.f32.mrb[0].mxu0
      %v3198 = vadd.f32 %v3031, %v3197
      %v3199 = vpop.f32.mrb[0].mxu0
      %3200 = vmatprep.mubr.bf16.mxu0 0
      %3201 = vmatmul.mubr.bf16.gmra.mrb[0].mxu0 %v3120
      %v3202 = vpop.f32.mrb[0].mxu0
      %v3203 = vadd.f32 %v3036, %v3202
      %v3204 = vpop.f32.mrb[0].mxu0
      %v3205 = vpop.f32.mrb[0].mxu0
      %v3206 = vadd.f32 %v3039, %v3205
      %v3207 = vpop.f32.mrb[0].mxu0
      %3208 = vmatprep.mubr.bf16.mxu0 0
      %3209 = vmatmul.mubr.bf16.gmra.mrb[0].mxu0 %v3123
      %v3210 = vpop.f32.mrb[0].mxu0
      %v3211 = vadd.f32 %v3044, %v3210
      %v3212 = vpop.f32.mrb[0].mxu0
      %v3213 = vpop.f32.mrb[0].mxu0
      %v3214 = vadd.f32 %v3047, %v3213
      %v3215 = vpop.f32.mrb[0].mxu0
      %3216 = vmatprep.mubr.bf16.mxu0 0
      %3217 = vmatmul.mubr.bf16.gmra.mrb[0].mxu0 %v3126
      %v3218 = vpop.f32.mrb[0].mxu0
      %v3219 = vadd.f32 %v3052, %v3218
      %v3220 = vpop.f32.mrb[0].mxu0
      %v3221 = vpop.f32.mrb[0].mxu0
      %v3222 = vadd.f32 %v3055, %v3221
      %v3223 = vpop.f32.mrb[0].mxu0
      %3224 = vdwg.mxu0
      %v3225 = vld [vmem:[%s2447] sm:$0x8]
      %v3226 = vld [vmem:[%s2447 + $0xc] sm:$0x8]
      %v3227 = vld [vmem:[%s2447 + $0x18] sm:$0x8]
      %v3228 = vld [vmem:[%s2447 + $0x24] sm:$0x8]
      %v3229 = vld [vmem:[%s2447 + $0x30] sm:$0x8]
      %v3230 = vld [vmem:[%s2447 + $0x3c] sm:$0x8]
      %v3231 = vld [vmem:[%s2447 + $0x48] sm:$0x8]
      %v3232 = vld [vmem:[%s2447 + $0x54] sm:$0x8]
      %v3233 = vld [vmem:[%s2447 + $0x60] sm:$0x8]
      %v3234 = vld [vmem:[%s2447 + $0x6c] sm:$0x8]
      %v3235 = vld [vmem:[%s2447 + $0x78] sm:$0x8]
      %v3236 = vld [vmem:[%s2447 + $0x84] sm:$0x8]
      %v3237 = vld [vmem:[%s2447 + $0x90] sm:$0x8]
      %v3238 = vld [vmem:[%s2447 + $0x9c] sm:$0x8]
      %v3239 = vld [vmem:[%s2447 + $0xa8] sm:$0x8]
      %v3240 = vld [vmem:[%s2447 + $0xb4] sm:$0x8]
      %v3242 = vshrl.u32 %v3225, 16
      %v3244 = vrot.slane %v3242, 7
      %v3245 = vrot.slane %v3244, 4
      %v3247 = vshrl.u32 %v2872, 16
      %v3249 = vrot.slane %v3247, 7
      %v3250 = vshll.u32 %v2872, 16
      %v3252 = vor.u32 %v3249, %v3250
      %v3253 = vsel %vm2500, %v3245, %v3252
      %v3255 = vshrl.u32 %v3226, 16
      %v3257 = vrot.slane %v3255, 7
      %v3258 = vrot.slane %v3257, 4
      %v3260 = vshrl.u32 %v2873, 16
      %v3262 = vrot.slane %v3260, 7
      %v3263 = vshll.u32 %v2873, 16
      %v3265 = vor.u32 %v3262, %v3263
      %v3266 = vsel %vm2500, %v3258, %v3265
      %v3268 = vshrl.u32 %v3227, 16
      %v3270 = vrot.slane %v3268, 7
      %v3271 = vrot.slane %v3270, 4
      %v3273 = vshrl.u32 %v2874, 16
      %v3275 = vrot.slane %v3273, 7
      %v3276 = vshll.u32 %v2874, 16
      %v3278 = vor.u32 %v3275, %v3276
      %v3279 = vsel %vm2500, %v3271, %v3278
      %v3281 = vshrl.u32 %v3228, 16
      %v3283 = vrot.slane %v3281, 7
      %v3284 = vrot.slane %v3283, 4
      %v3286 = vshrl.u32 %v2875, 16
      %v3288 = vrot.slane %v3286, 7
      %v3289 = vshll.u32 %v2875, 16
      %v3291 = vor.u32 %v3288, %v3289
      %v3292 = vsel %vm2500, %v3284, %v3291
      %v3294 = vshrl.u32 %v3229, 16
      %v3296 = vrot.slane %v3294, 7
      %v3297 = vrot.slane %v3296, 4
      %v3299 = vshrl.u32 %v2876, 16
      %v3301 = vrot.slane %v3299, 7
      %v3302 = vshll.u32 %v2876, 16
      %v3304 = vor.u32 %v3301, %v3302
      %v3305 = vsel %vm2500, %v3297, %v3304
      %v3307 = vshrl.u32 %v3230, 16
      %v3309 = vrot.slane %v3307, 7
      %v3310 = vrot.slane %v3309, 4
      %v3312 = vshrl.u32 %v2877, 16
      %v3314 = vrot.slane %v3312, 7
      %v3315 = vshll.u32 %v2877, 16
      %v3317 = vor.u32 %v3314, %v3315
      %v3318 = vsel %vm2500, %v3310, %v3317
      %v3320 = vshrl.u32 %v3231, 16
      %v3322 = vrot.slane %v3320, 7
      %v3323 = vrot.slane %v3322, 4
      %v3325 = vshrl.u32 %v2878, 16
      %v3327 = vrot.slane %v3325, 7
      %v3328 = vshll.u32 %v2878, 16
      %v3330 = vor.u32 %v3327, %v3328
      %v3331 = vsel %vm2500, %v3323, %v3330
      %v3333 = vshrl.u32 %v3232, 16
      %v3335 = vrot.slane %v3333, 7
      %v3336 = vrot.slane %v3335, 4
      %v3338 = vshrl.u32 %v2879, 16
      %v3340 = vrot.slane %v3338, 7
      %v3341 = vshll.u32 %v2879, 16
      %v3343 = vor.u32 %v3340, %v3341
      %v3344 = vsel %vm2500, %v3336, %v3343
      %v3346 = vshrl.u32 %v3233, 16
      %v3348 = vrot.slane %v3346, 7
      %v3349 = vrot.slane %v3348, 4
      %v3351 = vshrl.u32 %v2880, 16
      %v3353 = vrot.slane %v3351, 7
      %v3354 = vshll.u32 %v2880, 16
      %v3356 = vor.u32 %v3353, %v3354
      %v3357 = vsel %vm2500, %v3349, %v3356
      %v3359 = vshrl.u32 %v3234, 16
      %v3361 = vrot.slane %v3359, 7
      %v3362 = vrot.slane %v3361, 4
      %v3364 = vshrl.u32 %v2881, 16
      %v3366 = vrot.slane %v3364, 7
      %v3367 = vshll.u32 %v2881, 16
      %v3369 = vor.u32 %v3366, %v3367
      %v3370 = vsel %vm2500, %v3362, %v3369
      %v3372 = vshrl.u32 %v3235, 16
      %v3374 = vrot.slane %v3372, 7
      %v3375 = vrot.slane %v3374, 4
      %v3377 = vshrl.u32 %v2882, 16
      %v3379 = vrot.slane %v3377, 7
      %v3380 = vshll.u32 %v2882, 16
      %v3382 = vor.u32 %v3379, %v3380
      %v3383 = vsel %vm2500, %v3375, %v3382
      %v3385 = vshrl.u32 %v3236, 16
      %v3387 = vrot.slane %v3385, 7
      %v3388 = vrot.slane %v3387, 4
      %v3390 = vshrl.u32 %v2883, 16
      %v3392 = vrot.slane %v3390, 7
      %v3393 = vshll.u32 %v2883, 16
      %v3395 = vor.u32 %v3392, %v3393
      %v3396 = vsel %vm2500, %v3388, %v3395
      %v3398 = vshrl.u32 %v3237, 16
      %v3400 = vrot.slane %v3398, 7
      %v3401 = vrot.slane %v3400, 4
      %v3403 = vshrl.u32 %v2884, 16
      %v3405 = vrot.slane %v3403, 7
      %v3406 = vshll.u32 %v2884, 16
      %v3408 = vor.u32 %v3405, %v3406
      %v3409 = vsel %vm2500, %v3401, %v3408
      %v3411 = vshrl.u32 %v3238, 16
      %v3413 = vrot.slane %v3411, 7
      %v3414 = vrot.slane %v3413, 4
      %v3416 = vshrl.u32 %v2885, 16
      %v3418 = vrot.slane %v3416, 7
      %v3419 = vshll.u32 %v2885, 16
      %v3421 = vor.u32 %v3418, %v3419
      %v3422 = vsel %vm2500, %v3414, %v3421
      %v3424 = vshrl.u32 %v3239, 16
      %v3426 = vrot.slane %v3424, 7
      %v3427 = vrot.slane %v3426, 4
      %v3429 = vshrl.u32 %v2886, 16
      %v3431 = vrot.slane %v3429, 7
      %v3432 = vshll.u32 %v2886, 16
      %v3434 = vor.u32 %v3431, %v3432
      %v3435 = vsel %vm2500, %v3427, %v3434
      %v3437 = vshrl.u32 %v3240, 16
      %v3439 = vrot.slane %v3437, 7
      %v3440 = vrot.slane %v3439, 4
      %v3442 = vshrl.u32 %v2887, 16
      %v3444 = vrot.slane %v3442, 7
      %v3445 = vshll.u32 %v2887, 16
      %v3447 = vor.u32 %v3444, %v3445
      %v3448 = vsel %vm2500, %v3440, %v3447
      %s3449 = scalar_lea.vmem %s2, 24
      %v3450 = vld [vmem:[%s3449 + $0x4] sm:$0xf]
      %v3451 = vunpack.c.l.b16 %v3253
      %v3452 = vunpack.c.l.b16 %v3266
      %v3453 = vunpack.c.l.b16 %v3279
      %v3454 = vunpack.c.l.b16 %v3292
      %v3455 = vunpack.c.l.b16 %v3305
      %v3456 = vunpack.c.l.b16 %v3318
      %v3457 = vunpack.c.l.b16 %v3331
      %v3458 = vunpack.c.l.b16 %v3344
      %v3459 = vunpack.c.l.b16 %v3357
      %v3460 = vunpack.c.l.b16 %v3370
      %v3461 = vunpack.c.l.b16 %v3383
      %v3462 = vunpack.c.l.b16 %v3396
      %v3463 = vunpack.c.l.b16 %v3409
      %v3464 = vunpack.c.l.b16 %v3422
      %v3465 = vunpack.c.l.b16 %v3435
      %v3466 = vunpack.c.l.b16 %v3448
      %v3467 = vpack.c.b16 %v3452, %v3451
      %v3468 = vpack.c.b16 %v3454, %v3453
      %v3469 = vpack.c.b16 %v3456, %v3455
      %v3470 = vpack.c.b16 %v3458, %v3457
      %v3471 = vpack.c.b16 %v3460, %v3459
      %v3472 = vpack.c.b16 %v3462, %v3461
      %v3473 = vpack.c.b16 %v3464, %v3463
      %v3474 = vpack.c.b16 %v3466, %v3465
      %3475 = vrot.lane.b32.xlu0 %v3467, 120
      %v3476 = vpop.permute.xlu0 %3475
      %3477 = vrot.lane.b32.xlu0 %v3468, 120
      %v3478 = vpop.permute.xlu0 %3477
      %3479 = vrot.lane.b32.xlu0 %v3469, 120
      %v3480 = vpop.permute.xlu0 %3479
      %3481 = vrot.lane.b32.xlu0 %v3470, 120
      %v3482 = vpop.permute.xlu0 %3481
      %3483 = vrot.lane.b32.xlu0 %v3471, 120
      %v3484 = vpop.permute.xlu0 %3483
      %3485 = vrot.lane.b32.xlu0 %v3472, 120
      %v3486 = vpop.permute.xlu0 %3485
      %3487 = vrot.lane.b32.xlu0 %v3473, 120
      %v3488 = vpop.permute.xlu0 %3487
      %3489 = vrot.lane.b32.xlu0 %v3474, 120
      %v3490 = vpop.permute.xlu0 %3489
      %v3492 = vsel %vm2049, %v3476, 0
      %v3495 = vsel %vm2049, %v3478, 0
      %v3498 = vsel %vm2049, %v3480, 0
      %v3501 = vsel %vm2049, %v3482, 0
      %v3504 = vsel %vm2049, %v3484, 0
      %v3507 = vsel %vm2049, %v3486, 0
      %v3510 = vsel %vm2049, %v3488, 0
      %v3513 = vsel %vm2049, %v3490, 0
      %vm3515 = vcmask 1043456
      %v3517 = vsel %vm3515, %v3450, 0
      %3519 = vmatprep.subr.bf16.mxu0 0
      %3520 = vmatpush1.bf16.msra.mxu0 %v3517
      %3521 = vmatprep.subr.bf16.mxu0 0
      %3522 = vmatpush1.bf16.msra.mxu0 0
      %3523 = vmatprep.subr.bf16.mxu0 0
      %3524 = vmatpush1.bf16.msra.mxu0 0
      %3525 = vmatprep.subr.bf16.mxu0 0
      %3526 = vmatpush1.bf16.msra.mxu0 0
      %3527 = vmatprep.subr.bf16.mxu0 0
      %3528 = vmatpush1.bf16.msra.mxu0 0
      %3529 = vmatprep.subr.bf16.mxu0 0
      %3530 = vmatpush1.bf16.msra.mxu0 0
      %3531 = vmatprep.subr.bf16.mxu0 0
      %3532 = vmatpush1.bf16.msra.mxu0 0
      %3533 = vmatprep.subr.bf16.mxu0 0
      %3534 = vmatpush1.bf16.msra.mxu0 0
      %3535 = vmatprep.subr.bf16.mxu0 0
      %3536 = vmatpush1.bf16.msra.mxu0 0
      %3537 = vmatprep.subr.bf16.mxu0 0
      %3538 = vmatpush1.bf16.msra.mxu0 0
      %3539 = vmatprep.subr.bf16.mxu0 0
      %3540 = vmatpush1.bf16.msra.mxu0 0
      %3541 = vmatprep.subr.bf16.mxu0 0
      %3542 = vmatpush1.bf16.msra.mxu0 0
      %3543 = vmatprep.subr.bf16.mxu0 0
      %3544 = vmatpush1.bf16.msra.mxu0 0
      %3545 = vmatprep.subr.bf16.mxu0 0
      %3546 = vmatpush1.bf16.msra.mxu0 0
      %3547 = vmatprep.subr.bf16.mxu0 0
      %3548 = vmatpush1.bf16.msra.mxu0 0
      %3549 = vmatprep.subr.bf16.mxu0 0
      %3550 = vmatpush1.bf16.msra.mxu0 0
      %3551 = vmatprep.mubr.bf16.mxu0 0
      %3552 = vmatmul.mubr.bf16.gmra.mrb[0].mxu0 %v3492
      %v3553 = vpop.f32.mrb[0].mxu0
      %v3554 = vadd.f32 0.0, %v3553
      %v3555 = vpop.f32.mrb[0].mxu0
      %v3556 = vpop.f32.mrb[0].mxu0
      %v3557 = vadd.f32 0.0, %v3556
      %v3558 = vpop.f32.mrb[0].mxu0
      %3559 = vmatprep.mubr.bf16.mxu0 0
      %3560 = vmatmul.mubr.bf16.gmra.mrb[0].mxu0 %v3495
      %v3561 = vpop.f32.mrb[0].mxu0
      %v3562 = vadd.f32 0.0, %v3561
      %v3563 = vpop.f32.mrb[0].mxu0
      %v3564 = vpop.f32.mrb[0].mxu0
      %v3565 = vadd.f32 0.0, %v3564
      %v3566 = vpop.f32.mrb[0].mxu0
      %3567 = vmatprep.mubr.bf16.mxu0 0
      %3568 = vmatmul.mubr.bf16.gmra.mrb[0].mxu0 %v3498
      %v3569 = vpop.f32.mrb[0].mxu0
      %v3570 = vadd.f32 0.0, %v3569
      %v3571 = vpop.f32.mrb[0].mxu0
      %v3572 = vpop.f32.mrb[0].mxu0
      %v3573 = vadd.f32 0.0, %v3572
      %v3574 = vpop.f32.mrb[0].mxu0
      %3575 = vmatprep.mubr.bf16.mxu0 0
      %3576 = vmatmul.mubr.bf16.gmra.mrb[0].mxu0 %v3501
      %v3577 = vpop.f32.mrb[0].mxu0
      %v3578 = vadd.f32 0.0, %v3577
      %v3579 = vpop.f32.mrb[0].mxu0
      %v3580 = vpop.f32.mrb[0].mxu0
      %v3581 = vadd.f32 0.0, %v3580
      %v3582 = vpop.f32.mrb[0].mxu0
      %3583 = vmatprep.mubr.bf16.mxu0 0
      %3584 = vmatmul.mubr.bf16.gmra.mrb[0].mxu0 %v3504
      %v3585 = vpop.f32.mrb[0].mxu0
      %v3586 = vadd.f32 0.0, %v3585
      %v3587 = vpop.f32.mrb[0].mxu0
      %v3588 = vpop.f32.mrb[0].mxu0
      %v3589 = vadd.f32 0.0, %v3588
      %v3590 = vpop.f32.mrb[0].mxu0
      %3591 = vmatprep.mubr.bf16.mxu0 0
      %3592 = vmatmul.mubr.bf16.gmra.mrb[0].mxu0 %v3507
      %v3593 = vpop.f32.mrb[0].mxu0
      %v3594 = vadd.f32 0.0, %v3593
      %v3595 = vpop.f32.mrb[0].mxu0
      %v3596 = vpop.f32.mrb[0].mxu0
      %v3597 = vadd.f32 0.0, %v3596
      %v3598 = vpop.f32.mrb[0].mxu0
      %3599 = vmatprep.mubr.bf16.mxu0 0
      %3600 = vmatmul.mubr.bf16.gmra.mrb[0].mxu0 %v3510
      %v3601 = vpop.f32.mrb[0].mxu0
      %v3602 = vadd.f32 0.0, %v3601
      %v3603 = vpop.f32.mrb[0].mxu0
      %v3604 = vpop.f32.mrb[0].mxu0
      %v3605 = vadd.f32 0.0, %v3604
      %v3606 = vpop.f32.mrb[0].mxu0
      %3607 = vmatprep.mubr.bf16.mxu0 0
      %3608 = vmatmul.mubr.bf16.gmra.mrb[0].mxu0 %v3513
      %v3609 = vpop.f32.mrb[0].mxu0
      %v3610 = vadd.f32 0.0, %v3609
      %v3611 = vpop.f32.mrb[0].mxu0
      %v3612 = vpop.f32.mrb[0].mxu0
      %v3613 = vadd.f32 0.0, %v3612
      %v3614 = vpop.f32.mrb[0].mxu0
      %3615 = vdwg.mxu0
      %v3616 = vunpack.c.l.b16 %v2513
      %v3617 = vunpack.c.l.b16 %v2526
      %v3618 = vunpack.c.l.b16 %v2539
      %v3619 = vunpack.c.l.b16 %v2552
      %v3620 = vunpack.c.l.b16 %v2565
      %v3621 = vunpack.c.l.b16 %v2578
      %v3622 = vunpack.c.l.b16 %v2591
      %v3623 = vunpack.c.l.b16 %v2604
      %v3624 = vunpack.c.l.b16 %v2617
      %v3625 = vunpack.c.l.b16 %v2630
      %v3626 = vunpack.c.l.b16 %v2643
      %v3627 = vunpack.c.l.b16 %v2656
      %v3628 = vunpack.c.l.b16 %v2669
      %v3629 = vunpack.c.l.b16 %v2682
      %v3630 = vunpack.c.l.b16 %v2695
      %v3631 = vunpack.c.l.b16 %v2708
      %v3632 = vpack.c.b16 %v3617, %v3616
      %v3633 = vpack.c.b16 %v3619, %v3618
      %v3634 = vpack.c.b16 %v3621, %v3620
      %v3635 = vpack.c.b16 %v3623, %v3622
      %v3636 = vpack.c.b16 %v3625, %v3624
      %v3637 = vpack.c.b16 %v3627, %v3626
      %v3638 = vpack.c.b16 %v3629, %v3628
      %v3639 = vpack.c.b16 %v3631, %v3630
      %3640 = vrot.lane.b32.xlu0 %v3632, 120
      %v3641 = vpop.permute.xlu0 %3640
      %3642 = vrot.lane.b32.xlu0 %v3633, 120
      %v3643 = vpop.permute.xlu0 %3642
      %3644 = vrot.lane.b32.xlu0 %v3634, 120
      %v3645 = vpop.permute.xlu0 %3644
      %3646 = vrot.lane.b32.xlu0 %v3635, 120
      %v3647 = vpop.permute.xlu0 %3646
      %3648 = vrot.lane.b32.xlu0 %v3636, 120
      %v3649 = vpop.permute.xlu0 %3648
      %3650 = vrot.lane.b32.xlu0 %v3637, 120
      %v3651 = vpop.permute.xlu0 %3650
      %3652 = vrot.lane.b32.xlu0 %v3638, 120
      %v3653 = vpop.permute.xlu0 %3652
      %3654 = vrot.lane.b32.xlu0 %v3639, 120
      %v3655 = vpop.permute.xlu0 %3654
      %v3657 = vsel %vm2049, %v3641, 0
      %v3660 = vsel %vm2049, %v3643, 0
      %v3663 = vsel %vm2049, %v3645, 0
      %v3666 = vsel %vm2049, %v3647, 0
      %v3669 = vsel %vm2049, %v3649, 0
      %v3672 = vsel %vm2049, %v3651, 0
      %v3675 = vsel %vm2049, %v3653, 0
      %v3678 = vsel %vm2049, %v3655, 0
      %v3681 = vsel %vm3515, %v2709, 0
      %3683 = vmatprep.subr.bf16.mxu0 0
      %3684 = vmatpush1.bf16.msra.mxu0 %v3681
      %3685 = vmatprep.subr.bf16.mxu0 0
      %3686 = vmatpush1.bf16.msra.mxu0 0
      %3687 = vmatprep.subr.bf16.mxu0 0
      %3688 = vmatpush1.bf16.msra.mxu0 0
      %3689 = vmatprep.subr.bf16.mxu0 0
      %3690 = vmatpush1.bf16.msra.mxu0 0
      %3691 = vmatprep.subr.bf16.mxu0 0
      %3692 = vmatpush1.bf16.msra.mxu0 0
      %3693 = vmatprep.subr.bf16.mxu0 0
      %3694 = vmatpush1.bf16.msra.mxu0 0
      %3695 = vmatprep.subr.bf16.mxu0 0
      %3696 = vmatpush1.bf16.msra.mxu0 0
      %3697 = vmatprep.subr.bf16.mxu0 0
      %3698 = vmatpush1.bf16.msra.mxu0 0
      %3699 = vmatprep.subr.bf16.mxu0 0
      %3700 = vmatpush1.bf16.msra.mxu0 0
      %3701 = vmatprep.subr.bf16.mxu0 0
      %3702 = vmatpush1.bf16.msra.mxu0 0
      %3703 = vmatprep.subr.bf16.mxu0 0
      %3704 = vmatpush1.bf16.msra.mxu0 0
      %3705 = vmatprep.subr.bf16.mxu0 0
      %3706 = vmatpush1.bf16.msra.mxu0 0
      %3707 = vmatprep.subr.bf16.mxu0 0
      %3708 = vmatpush1.bf16.msra.mxu0 0
      %3709 = vmatprep.subr.bf16.mxu0 0
      %3710 = vmatpush1.bf16.msra.mxu0 0
      %3711 = vmatprep.subr.bf16.mxu0 0
      %3712 = vmatpush1.bf16.msra.mxu0 0
      %3713 = vmatprep.subr.bf16.mxu0 0
      %3714 = vmatpush1.bf16.msra.mxu0 0
      %3715 = vmatprep.mubr.bf16.mxu0 0
      %3716 = vmatmul.mubr.bf16.gmra.mrb[0].mxu0 %v3657
      %v3717 = vpop.f32.mrb[0].mxu0
      %v3718 = vadd.f32 %v3554, %v3717
      %v3719 = vpop.f32.mrb[0].mxu0
      %v3720 = vpop.f32.mrb[0].mxu0
      %v3721 = vadd.f32 %v3557, %v3720
      %v3722 = vpop.f32.mrb[0].mxu0
      %3723 = vmatprep.mubr.bf16.mxu0 0
      %3724 = vmatmul.mubr.bf16.gmra.mrb[0].mxu0 %v3660
      %v3725 = vpop.f32.mrb[0].mxu0
      %v3726 = vadd.f32 %v3562, %v3725
      %v3727 = vpop.f32.mrb[0].mxu0
      %v3728 = vpop.f32.mrb[0].mxu0
      %v3729 = vadd.f32 %v3565, %v3728
      %v3730 = vpop.f32.mrb[0].mxu0
      %3731 = vmatprep.mubr.bf16.mxu0 0
      %3732 = vmatmul.mubr.bf16.gmra.mrb[0].mxu0 %v3663
      %v3733 = vpop.f32.mrb[0].mxu0
      %v3734 = vadd.f32 %v3570, %v3733
      %v3735 = vpop.f32.mrb[0].mxu0
      %v3736 = vpop.f32.mrb[0].mxu0
      %v3737 = vadd.f32 %v3573, %v3736
      %v3738 = vpop.f32.mrb[0].mxu0
      %3739 = vmatprep.mubr.bf16.mxu0 0
      %3740 = vmatmul.mubr.bf16.gmra.mrb[0].mxu0 %v3666
      %v3741 = vpop.f32.mrb[0].mxu0
      %v3742 = vadd.f32 %v3578, %v3741
      %v3743 = vpop.f32.mrb[0].mxu0
      %v3744 = vpop.f32.mrb[0].mxu0
      %v3745 = vadd.f32 %v3581, %v3744
      %v3746 = vpop.f32.mrb[0].mxu0
      %3747 = vmatprep.mubr.bf16.mxu0 0
      %3748 = vmatmul.mubr.bf16.gmra.mrb[0].mxu0 %v3669
      %v3749 = vpop.f32.mrb[0].mxu0
      %v3750 = vadd.f32 %v3586, %v3749
      %v3751 = vpop.f32.mrb[0].mxu0
      %v3752 = vpop.f32.mrb[0].mxu0
      %v3753 = vadd.f32 %v3589, %v3752
      %v3754 = vpop.f32.mrb[0].mxu0
      %3755 = vmatprep.mubr.bf16.mxu0 0
      %3756 = vmatmul.mubr.bf16.gmra.mrb[0].mxu0 %v3672
      %v3757 = vpop.f32.mrb[0].mxu0
      %v3758 = vadd.f32 %v3594, %v3757
      %v3759 = vpop.f32.mrb[0].mxu0
      %v3760 = vpop.f32.mrb[0].mxu0
      %v3761 = vadd.f32 %v3597, %v3760
      %v3762 = vpop.f32.mrb[0].mxu0
      %3763 = vmatprep.mubr.bf16.mxu0 0
      %3764 = vmatmul.mubr.bf16.gmra.mrb[0].mxu0 %v3675
      %v3765 = vpop.f32.mrb[0].mxu0
      %v3766 = vadd.f32 %v3602, %v3765
      %v3767 = vpop.f32.mrb[0].mxu0
      %v3768 = vpop.f32.mrb[0].mxu0
      %v3769 = vadd.f32 %v3605, %v3768
      %v3770 = vpop.f32.mrb[0].mxu0
      %3771 = vmatprep.mubr.bf16.mxu0 0
      %3772 = vmatmul.mubr.bf16.gmra.mrb[0].mxu0 %v3678
      %v3773 = vpop.f32.mrb[0].mxu0
      %v3774 = vadd.f32 %v3610, %v3773
      %v3775 = vpop.f32.mrb[0].mxu0
      %v3776 = vpop.f32.mrb[0].mxu0
      %v3777 = vadd.f32 %v3613, %v3776
      %v3778 = vpop.f32.mrb[0].mxu0
      %3779 = vdwg.mxu0
      %v3780 = vld [vmem:[%s2447 + $0x4] sm:$0xf]
      %v3781 = vld [vmem:[%s2447 + $0x8] sm:$0x1]
      %v3782 = vld [vmem:[%s2447 + $0x10] sm:$0xf]
      %v3783 = vld [vmem:[%s2447 + $0x14] sm:$0x1]
      %v3784 = vld [vmem:[%s2447 + $0x1c] sm:$0xf]
      %v3785 = vld [vmem:[%s2447 + $0x20] sm:$0x1]
      %v3786 = vld [vmem:[%s2447 + $0x28] sm:$0xf]
      %v3787 = vld [vmem:[%s2447 + $0x2c] sm:$0x1]
      %v3788 = vld [vmem:[%s2447 + $0x34] sm:$0xf]
      %v3789 = vld [vmem:[%s2447 + $0x38] sm:$0x1]
      %v3790 = vld [vmem:[%s2447 + $0x40] sm:$0xf]
      %v3791 = vld [vmem:[%s2447 + $0x44] sm:$0x1]
      %v3792 = vld [vmem:[%s2447 + $0x4c] sm:$0xf]
      %v3793 = vld [vmem:[%s2447 + $0x50] sm:$0x1]
      %v3794 = vld [vmem:[%s2447 + $0x58] sm:$0xf]
      %v3795 = vld [vmem:[%s2447 + $0x5c] sm:$0x1]
      %v3796 = vld [vmem:[%s2447 + $0x64] sm:$0xf]
      %v3797 = vld [vmem:[%s2447 + $0x68] sm:$0x1]
      %v3798 = vld [vmem:[%s2447 + $0x70] sm:$0xf]
      %v3799 = vld [vmem:[%s2447 + $0x74] sm:$0x1]
      %v3800 = vld [vmem:[%s2447 + $0x7c] sm:$0xf]
      %v3801 = vld [vmem:[%s2447 + $0x80] sm:$0x1]
      %v3802 = vld [vmem:[%s2447 + $0x88] sm:$0xf]
      %v3803 = vld [vmem:[%s2447 + $0x8c] sm:$0x1]
      %v3804 = vld [vmem:[%s2447 + $0x94] sm:$0xf]
      %v3805 = vld [vmem:[%s2447 + $0x98] sm:$0x1]
      %v3806 = vld [vmem:[%s2447 + $0xa0] sm:$0xf]
      %v3807 = vld [vmem:[%s2447 + $0xa4] sm:$0x1]
      %v3808 = vld [vmem:[%s2447 + $0xac] sm:$0xf]
      %v3809 = vld [vmem:[%s2447 + $0xb0] sm:$0x1]
      %v3810 = vld [vmem:[%s2447 + $0xb8] sm:$0xf]
      %v3811 = vld [vmem:[%s2447 + $0xbc] sm:$0x1]
      %v3813 = vshrl.u32 %v3780, 16
      %v3815 = vrot.slane %v3813, 4
      %v3816 = vshll.u32 %v3780, 16
      %v3818 = vrot.slane %v3816, 5
      %v3819 = vor.u32 %v3815, %v3818
      %v3820 = vrot.slane %v3819, 4
      %v3822 = vshll.u32 %v3781, 16
      %v3824 = vrot.slane %v3822, 5
      %v3825 = vsel %vm219, %v3820, %v3824
      %v3827 = vshrl.u32 %v3782, 16
      %v3829 = vrot.slane %v3827, 4
      %v3830 = vshll.u32 %v3782, 16
      %v3832 = vrot.slane %v3830, 5
      %v3833 = vor.u32 %v3829, %v3832
      %v3834 = vrot.slane %v3833, 4
      %v3836 = vshll.u32 %v3783, 16
      %v3838 = vrot.slane %v3836, 5
      %v3839 = vsel %vm219, %v3834, %v3838
      %v3841 = vshrl.u32 %v3784, 16
      %v3843 = vrot.slane %v3841, 4
      %v3844 = vshll.u32 %v3784, 16
      %v3846 = vrot.slane %v3844, 5
      %v3847 = vor.u32 %v3843, %v3846
      %v3848 = vrot.slane %v3847, 4
      %v3850 = vshll.u32 %v3785, 16
      %v3852 = vrot.slane %v3850, 5
      %v3853 = vsel %vm219, %v3848, %v3852
      %v3855 = vshrl.u32 %v3786, 16
      %v3857 = vrot.slane %v3855, 4
      %v3858 = vshll.u32 %v3786, 16
      %v3860 = vrot.slane %v3858, 5
      %v3861 = vor.u32 %v3857, %v3860
      %v3862 = vrot.slane %v3861, 4
      %v3864 = vshll.u32 %v3787, 16
      %v3866 = vrot.slane %v3864, 5
      %v3867 = vsel %vm219, %v3862, %v3866
      %v3869 = vshrl.u32 %v3788, 16
      %v3871 = vrot.slane %v3869, 4
      %v3872 = vshll.u32 %v3788, 16
      %v3874 = vrot.slane %v3872, 5
      %v3875 = vor.u32 %v3871, %v3874
      %v3876 = vrot.slane %v3875, 4
      %v3878 = vshll.u32 %v3789, 16
      %v3880 = vrot.slane %v3878, 5
      %v3881 = vsel %vm219, %v3876, %v3880
      %v3883 = vshrl.u32 %v3790, 16
      %v3885 = vrot.slane %v3883, 4
      %v3886 = vshll.u32 %v3790, 16
      %v3888 = vrot.slane %v3886, 5
      %v3889 = vor.u32 %v3885, %v3888
      %v3890 = vrot.slane %v3889, 4
      %v3892 = vshll.u32 %v3791, 16
      %v3894 = vrot.slane %v3892, 5
      %v3895 = vsel %vm219, %v3890, %v3894
      %v3897 = vshrl.u32 %v3792, 16
      %v3899 = vrot.slane %v3897, 4
      %v3900 = vshll.u32 %v3792, 16
      %v3902 = vrot.slane %v3900, 5
      %v3903 = vor.u32 %v3899, %v3902
      %v3904 = vrot.slane %v3903, 4
      %v3906 = vshll.u32 %v3793, 16
      %v3908 = vrot.slane %v3906, 5
      %v3909 = vsel %vm219, %v3904, %v3908
      %v3911 = vshrl.u32 %v3794, 16
      %v3913 = vrot.slane %v3911, 4
      %v3914 = vshll.u32 %v3794, 16
      %v3916 = vrot.slane %v3914, 5
      %v3917 = vor.u32 %v3913, %v3916
      %v3918 = vrot.slane %v3917, 4
      %v3920 = vshll.u32 %v3795, 16
      %v3922 = vrot.slane %v3920, 5
      %v3923 = vsel %vm219, %v3918, %v3922
      %v3925 = vshrl.u32 %v3796, 16
      %v3927 = vrot.slane %v3925, 4
      %v3928 = vshll.u32 %v3796, 16
      %v3930 = vrot.slane %v3928, 5
      %v3931 = vor.u32 %v3927, %v3930
      %v3932 = vrot.slane %v3931, 4
      %v3934 = vshll.u32 %v3797, 16
      %v3936 = vrot.slane %v3934, 5
      %v3937 = vsel %vm219, %v3932, %v3936
      %v3939 = vshrl.u32 %v3798, 16
      %v3941 = vrot.slane %v3939, 4
      %v3942 = vshll.u32 %v3798, 16
      %v3944 = vrot.slane %v3942, 5
      %v3945 = vor.u32 %v3941, %v3944
      %v3946 = vrot.slane %v3945, 4
      %v3948 = vshll.u32 %v3799, 16
      %v3950 = vrot.slane %v3948, 5
      %v3951 = vsel %vm219, %v3946, %v3950
      %v3953 = vshrl.u32 %v3800, 16
      %v3955 = vrot.slane %v3953, 4
      %v3956 = vshll.u32 %v3800, 16
      %v3958 = vrot.slane %v3956, 5
      %v3959 = vor.u32 %v3955, %v3958
      %v3960 = vrot.slane %v3959, 4
      %v3962 = vshll.u32 %v3801, 16
      %v3964 = vrot.slane %v3962, 5
      %v3965 = vsel %vm219, %v3960, %v3964
      %v3967 = vshrl.u32 %v3802, 16
      %v3969 = vrot.slane %v3967, 4
      %v3970 = vshll.u32 %v3802, 16
      %v3972 = vrot.slane %v3970, 5
      %v3973 = vor.u32 %v3969, %v3972
      %v3974 = vrot.slane %v3973, 4
      %v3976 = vshll.u32 %v3803, 16
      %v3978 = vrot.slane %v3976, 5
      %v3979 = vsel %vm219, %v3974, %v3978
      %v3981 = vshrl.u32 %v3804, 16
      %v3983 = vrot.slane %v3981, 4
      %v3984 = vshll.u32 %v3804, 16
      %v3986 = vrot.slane %v3984, 5
      %v3987 = vor.u32 %v3983, %v3986
      %v3988 = vrot.slane %v3987, 4
      %v3990 = vshll.u32 %v3805, 16
      %v3992 = vrot.slane %v3990, 5
      %v3993 = vsel %vm219, %v3988, %v3992
      %v3995 = vshrl.u32 %v3806, 16
      %v3997 = vrot.slane %v3995, 4
      %v3998 = vshll.u32 %v3806, 16
      %v4000 = vrot.slane %v3998, 5
      %v4001 = vor.u32 %v3997, %v4000
      %v4002 = vrot.slane %v4001, 4
      %v4004 = vshll.u32 %v3807, 16
      %v4006 = vrot.slane %v4004, 5
      %v4007 = vsel %vm219, %v4002, %v4006
      %v4009 = vshrl.u32 %v3808, 16
      %v4011 = vrot.slane %v4009, 4
      %v4012 = vshll.u32 %v3808, 16
      %v4014 = vrot.slane %v4012, 5
      %v4015 = vor.u32 %v4011, %v4014
      %v4016 = vrot.slane %v4015, 4
      %v4018 = vshll.u32 %v3809, 16
      %v4020 = vrot.slane %v4018, 5
      %v4021 = vsel %vm219, %v4016, %v4020
      %v4023 = vshrl.u32 %v3810, 16
      %v4025 = vrot.slane %v4023, 4
      %v4026 = vshll.u32 %v3810, 16
      %v4028 = vrot.slane %v4026, 5
      %v4029 = vor.u32 %v4025, %v4028
      %v4030 = vrot.slane %v4029, 4
      %v4032 = vshll.u32 %v3811, 16
      %v4034 = vrot.slane %v4032, 5
      %v4035 = vsel %vm219, %v4030, %v4034
      %s4036 = scalar_lea.vmem %s2, 40
      %v4037 = vld [vmem:[%s4036] sm:$0xf]
      %v4038 = vunpack.c.l.b16 %v3825
      %v4039 = vunpack.c.l.b16 %v3839
      %v4040 = vunpack.c.l.b16 %v3853
      %v4041 = vunpack.c.l.b16 %v3867
      %v4042 = vunpack.c.l.b16 %v3881
      %v4043 = vunpack.c.l.b16 %v3895
      %v4044 = vunpack.c.l.b16 %v3909
      %v4045 = vunpack.c.l.b16 %v3923
      %v4046 = vunpack.c.l.b16 %v3937
      %v4047 = vunpack.c.l.b16 %v3951
      %v4048 = vunpack.c.l.b16 %v3965
      %v4049 = vunpack.c.l.b16 %v3979
      %v4050 = vunpack.c.l.b16 %v3993
      %v4051 = vunpack.c.l.b16 %v4007
      %v4052 = vunpack.c.l.b16 %v4021
      %v4053 = vunpack.c.l.b16 %v4035
      %v4054 = vpack.c.b16 %v4039, %v4038
      %v4055 = vpack.c.b16 %v4041, %v4040
      %v4056 = vpack.c.b16 %v4043, %v4042
      %v4057 = vpack.c.b16 %v4045, %v4044
      %v4058 = vpack.c.b16 %v4047, %v4046
      %v4059 = vpack.c.b16 %v4049, %v4048
      %v4060 = vpack.c.b16 %v4051, %v4050
      %v4061 = vpack.c.b16 %v4053, %v4052
      %v4063 = vunpack.c.l.b16 %v4037
      %v4064 = vpack.c.b16 %v4063, %v4063
      %4065 = vrot.lane.b32.xlu0 %v4064, 120
      %v4066 = vpop.permute.xlu0 %4065
      %v4068 = vsel %vm2049, %v4054, 0
      %v4071 = vsel %vm2049, %v4055, 0
      %v4074 = vsel %vm2049, %v4056, 0
      %v4077 = vsel %vm2049, %v4057, 0
      %v4080 = vsel %vm2049, %v4058, 0
      %v4083 = vsel %vm2049, %v4059, 0
      %v4086 = vsel %vm2049, %v4060, 0
      %v4089 = vsel %vm2049, %v4061, 0
      %v4092 = vsel %vm3515, %v4066, 0
      %4094 = vmatprep.subr.bf16.mxu0 0
      %4095 = vmatpush1.bf16.msra.mxu0 %v4092
      %4096 = vmatprep.subr.bf16.mxu0 0
      %4097 = vmatpush1.bf16.msra.mxu0 0
      %4098 = vmatprep.subr.bf16.mxu0 0
      %4099 = vmatpush1.bf16.msra.mxu0 0
      %4100 = vmatprep.subr.bf16.mxu0 0
      %4101 = vmatpush1.bf16.msra.mxu0 0
      %4102 = vmatprep.subr.bf16.mxu0 0
      %4103 = vmatpush1.bf16.msra.mxu0 0
      %4104 = vmatprep.subr.bf16.mxu0 0
      %4105 = vmatpush1.bf16.msra.mxu0 0
      %4106 = vmatprep.subr.bf16.mxu0 0
      %4107 = vmatpush1.bf16.msra.mxu0 0
      %4108 = vmatprep.subr.bf16.mxu0 0
      %4109 = vmatpush1.bf16.msra.mxu0 0
      %4110 = vmatprep.subr.bf16.mxu0 0
      %4111 = vmatpush1.bf16.msra.mxu0 0
      %4112 = vmatprep.subr.bf16.mxu0 0
      %4113 = vmatpush1.bf16.msra.mxu0 0
      %4114 = vmatprep.subr.bf16.mxu0 0
      %4115 = vmatpush1.bf16.msra.mxu0 0
      %4116 = vmatprep.subr.bf16.mxu0 0
      %4117 = vmatpush1.bf16.msra.mxu0 0
      %4118 = vmatprep.subr.bf16.mxu0 0
      %4119 = vmatpush1.bf16.msra.mxu0 0
      %4120 = vmatprep.subr.bf16.mxu0 0
      %4121 = vmatpush1.bf16.msra.mxu0 0
      %4122 = vmatprep.subr.bf16.mxu0 0
      %4123 = vmatpush1.bf16.msra.mxu0 0
      %4124 = vmatprep.subr.bf16.mxu0 0
      %4125 = vmatpush1.bf16.msra.mxu0 0
      %4126 = vmatprep.mubr.bf16.mxu0 0
      %4127 = vmatmul.mubr.bf16.gmra.mrb[0].mxu0 %v4068
      %v4128 = vpop.f32.mrb[0].mxu0
      %v4129 = vadd.f32 0.0, %v4128
      %v4130 = vpop.f32.mrb[0].mxu0
      %v4131 = vpop.f32.mrb[0].mxu0
      %v4132 = vadd.f32 0.0, %v4131
      %v4133 = vpop.f32.mrb[0].mxu0
      %4134 = vmatprep.mubr.bf16.mxu0 0
      %4135 = vmatmul.mubr.bf16.gmra.mrb[0].mxu0 %v4071
      %v4136 = vpop.f32.mrb[0].mxu0
      %v4137 = vadd.f32 0.0, %v4136
      %v4138 = vpop.f32.mrb[0].mxu0
      %v4139 = vpop.f32.mrb[0].mxu0
      %v4140 = vadd.f32 0.0, %v4139
      %v4141 = vpop.f32.mrb[0].mxu0
      %4142 = vmatprep.mubr.bf16.mxu0 0
      %4143 = vmatmul.mubr.bf16.gmra.mrb[0].mxu0 %v4074
      %v4144 = vpop.f32.mrb[0].mxu0
      %v4145 = vadd.f32 0.0, %v4144
      %v4146 = vpop.f32.mrb[0].mxu0
      %v4147 = vpop.f32.mrb[0].mxu0
      %v4148 = vadd.f32 0.0, %v4147
      %v4149 = vpop.f32.mrb[0].mxu0
      %4150 = vmatprep.mubr.bf16.mxu0 0
      %4151 = vmatmul.mubr.bf16.gmra.mrb[0].mxu0 %v4077
      %v4152 = vpop.f32.mrb[0].mxu0
      %v4153 = vadd.f32 0.0, %v4152
      %v4154 = vpop.f32.mrb[0].mxu0
      %v4155 = vpop.f32.mrb[0].mxu0
      %v4156 = vadd.f32 0.0, %v4155
      %v4157 = vpop.f32.mrb[0].mxu0
      %4158 = vmatprep.mubr.bf16.mxu0 0
      %4159 = vmatmul.mubr.bf16.gmra.mrb[0].mxu0 %v4080
      %v4160 = vpop.f32.mrb[0].mxu0
      %v4161 = vadd.f32 0.0, %v4160
      %v4162 = vpop.f32.mrb[0].mxu0
      %v4163 = vpop.f32.mrb[0].mxu0
      %v4164 = vadd.f32 0.0, %v4163
      %v4165 = vpop.f32.mrb[0].mxu0
      %4166 = vmatprep.mubr.bf16.mxu0 0
      %4167 = vmatmul.mubr.bf16.gmra.mrb[0].mxu0 %v4083
      %v4168 = vpop.f32.mrb[0].mxu0
      %v4169 = vadd.f32 0.0, %v4168
      %v4170 = vpop.f32.mrb[0].mxu0
      %v4171 = vpop.f32.mrb[0].mxu0
      %v4172 = vadd.f32 0.0, %v4171
      %v4173 = vpop.f32.mrb[0].mxu0
      %4174 = vmatprep.mubr.bf16.mxu0 0
      %4175 = vmatmul.mubr.bf16.gmra.mrb[0].mxu0 %v4086
      %v4176 = vpop.f32.mrb[0].mxu0
      %v4177 = vadd.f32 0.0, %v4176
      %v4178 = vpop.f32.mrb[0].mxu0
      %v4179 = vpop.f32.mrb[0].mxu0
      %v4180 = vadd.f32 0.0, %v4179
      %v4181 = vpop.f32.mrb[0].mxu0
      %4182 = vmatprep.mubr.bf16.mxu0 0
      %4183 = vmatmul.mubr.bf16.gmra.mrb[0].mxu0 %v4089
      %v4184 = vpop.f32.mrb[0].mxu0
      %v4185 = vadd.f32 0.0, %v4184
      %v4186 = vpop.f32.mrb[0].mxu0
      %v4187 = vpop.f32.mrb[0].mxu0
      %v4188 = vadd.f32 0.0, %v4187
      %v4189 = vpop.f32.mrb[0].mxu0
      %4190 = vdwg.mxu0
      %v4191 = vunpack.c.l.b16 %v2734
      %v4192 = vunpack.c.l.b16 %v2743
      %v4193 = vunpack.c.l.b16 %v2752
      %v4194 = vunpack.c.l.b16 %v2761
      %v4195 = vunpack.c.l.b16 %v2770
      %v4196 = vunpack.c.l.b16 %v2779
      %v4197 = vunpack.c.l.b16 %v2788
      %v4198 = vunpack.c.l.b16 %v2797
      %v4199 = vunpack.c.l.b16 %v2806
      %v4200 = vunpack.c.l.b16 %v2815
      %v4201 = vunpack.c.l.b16 %v2824
      %v4202 = vunpack.c.l.b16 %v2833
      %v4203 = vunpack.c.l.b16 %v2842
      %v4204 = vunpack.c.l.b16 %v2851
      %v4205 = vunpack.c.l.b16 %v2860
      %v4206 = vunpack.c.l.b16 %v2869
      %v4207 = vpack.c.b16 %v4192, %v4191
      %v4208 = vpack.c.b16 %v4194, %v4193
      %v4209 = vpack.c.b16 %v4196, %v4195
      %v4210 = vpack.c.b16 %v4198, %v4197
      %v4211 = vpack.c.b16 %v4200, %v4199
      %v4212 = vpack.c.b16 %v4202, %v4201
      %v4213 = vpack.c.b16 %v4204, %v4203
      %v4214 = vpack.c.b16 %v4206, %v4205
      %v4216 = vunpack.c.l.b16 %v2871
      %v4217 = vpack.c.b16 %v4216, %v4216
      %4218 = vrot.lane.b32.xlu0 %v4217, 120
      %v4219 = vpop.permute.xlu0 %4218
      %v4221 = vsel %vm2049, %v4207, 0
      %v4224 = vsel %vm2049, %v4208, 0
      %v4227 = vsel %vm2049, %v4209, 0
      %v4230 = vsel %vm2049, %v4210, 0
      %v4233 = vsel %vm2049, %v4211, 0
      %v4236 = vsel %vm2049, %v4212, 0
      %v4239 = vsel %vm2049, %v4213, 0
      %v4242 = vsel %vm2049, %v4214, 0
      %v4245 = vsel %vm3515, %v4219, 0
      %4247 = vmatprep.subr.bf16.mxu0 0
      %4248 = vmatpush1.bf16.msra.mxu0 %v4245
      %4249 = vmatprep.subr.bf16.mxu0 0
      %4250 = vmatpush1.bf16.msra.mxu0 0
      %4251 = vmatprep.subr.bf16.mxu0 0
      %4252 = vmatpush1.bf16.msra.mxu0 0
      %4253 = vmatprep.subr.bf16.mxu0 0
      %4254 = vmatpush1.bf16.msra.mxu0 0
      %4255 = vmatprep.subr.bf16.mxu0 0
      %4256 = vmatpush1.bf16.msra.mxu0 0
      %4257 = vmatprep.subr.bf16.mxu0 0
      %4258 = vmatpush1.bf16.msra.mxu0 0
      %4259 = vmatprep.subr.bf16.mxu0 0
      %4260 = vmatpush1.bf16.msra.mxu0 0
      %4261 = vmatprep.subr.bf16.mxu0 0
      %4262 = vmatpush1.bf16.msra.mxu0 0
      %4263 = vmatprep.subr.bf16.mxu0 0
      %4264 = vmatpush1.bf16.msra.mxu0 0
      %4265 = vmatprep.subr.bf16.mxu0 0
      %4266 = vmatpush1.bf16.msra.mxu0 0
      %4267 = vmatprep.subr.bf16.mxu0 0
      %4268 = vmatpush1.bf16.msra.mxu0 0
      %4269 = vmatprep.subr.bf16.mxu0 0
      %4270 = vmatpush1.bf16.msra.mxu0 0
      %4271 = vmatprep.subr.bf16.mxu0 0
      %4272 = vmatpush1.bf16.msra.mxu0 0
      %4273 = vmatprep.subr.bf16.mxu0 0
      %4274 = vmatpush1.bf16.msra.mxu0 0
      %4275 = vmatprep.subr.bf16.mxu0 0
      %4276 = vmatpush1.bf16.msra.mxu0 0
      %4277 = vmatprep.subr.bf16.mxu0 0
      %4278 = vmatpush1.bf16.msra.mxu0 0
      %4279 = vmatprep.mubr.bf16.mxu0 0
      %4280 = vmatmul.mubr.bf16.gmra.mrb[0].mxu0 %v4221
      %v4281 = vpop.f32.mrb[0].mxu0
      %v4282 = vadd.f32 %v4129, %v4281
      %v4283 = vpop.f32.mrb[0].mxu0
      %v4284 = vpop.f32.mrb[0].mxu0
      %v4285 = vadd.f32 %v4132, %v4284
      %v4286 = vpop.f32.mrb[0].mxu0
      %4287 = vmatprep.mubr.bf16.mxu0 0
      %4288 = vmatmul.mubr.bf16.gmra.mrb[0].mxu0 %v4224
      %v4289 = vpop.f32.mrb[0].mxu0
      %v4290 = vadd.f32 %v4137, %v4289
      %v4291 = vpop.f32.mrb[0].mxu0
      %v4292 = vpop.f32.mrb[0].mxu0
      %v4293 = vadd.f32 %v4140, %v4292
      %v4294 = vpop.f32.mrb[0].mxu0
      %4295 = vmatprep.mubr.bf16.mxu0 0
      %4296 = vmatmul.mubr.bf16.gmra.mrb[0].mxu0 %v4227
      %v4297 = vpop.f32.mrb[0].mxu0
      %v4298 = vadd.f32 %v4145, %v4297
      %v4299 = vpop.f32.mrb[0].mxu0
      %v4300 = vpop.f32.mrb[0].mxu0
      %v4301 = vadd.f32 %v4148, %v4300
      %v4302 = vpop.f32.mrb[0].mxu0
      %4303 = vmatprep.mubr.bf16.mxu0 0
      %4304 = vmatmul.mubr.bf16.gmra.mrb[0].mxu0 %v4230
      %v4305 = vpop.f32.mrb[0].mxu0
      %v4306 = vadd.f32 %v4153, %v4305
      %v4307 = vpop.f32.mrb[0].mxu0
      %v4308 = vpop.f32.mrb[0].mxu0
      %v4309 = vadd.f32 %v4156, %v4308
      %v4310 = vpop.f32.mrb[0].mxu0
      %4311 = vmatprep.mubr.bf16.mxu0 0
      %4312 = vmatmul.mubr.bf16.gmra.mrb[0].mxu0 %v4233
      %v4313 = vpop.f32.mrb[0].mxu0
      %v4314 = vadd.f32 %v4161, %v4313
      %v4315 = vpop.f32.mrb[0].mxu0
      %v4316 = vpop.f32.mrb[0].mxu0
      %v4317 = vadd.f32 %v4164, %v4316
      %v4318 = vpop.f32.mrb[0].mxu0
      %4319 = vmatprep.mubr.bf16.mxu0 0
      %4320 = vmatmul.mubr.bf16.gmra.mrb[0].mxu0 %v4236
      %v4321 = vpop.f32.mrb[0].mxu0
      %v4322 = vadd.f32 %v4169, %v4321
      %v4323 = vpop.f32.mrb[0].mxu0
      %v4324 = vpop.f32.mrb[0].mxu0
      %v4325 = vadd.f32 %v4172, %v4324
      %v4326 = vpop.f32.mrb[0].mxu0
      %4327 = vmatprep.mubr.bf16.mxu0 0
      %4328 = vmatmul.mubr.bf16.gmra.mrb[0].mxu0 %v4239
      %v4329 = vpop.f32.mrb[0].mxu0
      %v4330 = vadd.f32 %v4177, %v4329
      %v4331 = vpop.f32.mrb[0].mxu0
      %v4332 = vpop.f32.mrb[0].mxu0
      %v4333 = vadd.f32 %v4180, %v4332
      %v4334 = vpop.f32.mrb[0].mxu0
      %4335 = vmatprep.mubr.bf16.mxu0 0
      %4336 = vmatmul.mubr.bf16.gmra.mrb[0].mxu0 %v4242
      %v4337 = vpop.f32.mrb[0].mxu0
      %v4338 = vadd.f32 %v4185, %v4337
      %v4339 = vpop.f32.mrb[0].mxu0
      %v4340 = vpop.f32.mrb[0].mxu0
      %v4341 = vadd.f32 %v4188, %v4340
      %v4342 = vpop.f32.mrb[0].mxu0
      %4343 = vdwg.mxu0
      %s4344 = scalar_lea.vmem [#allocation2], 24
      %v4345 = vld [vmem:[%s4344 + $0x4] sm:$0xf]
      %v4346 = vld [vmem:[%s4344 + $0x10] sm:$0xf]
      %v4347 = vld [vmem:[%s4344 + $0x1c] sm:$0xf]
      %v4348 = vld [vmem:[%s4344 + $0x28] sm:$0xf]
      %v4349 = vld [vmem:[%s4344 + $0x34] sm:$0xf]
      %v4350 = vld [vmem:[%s4344 + $0x40] sm:$0xf]
      %v4351 = vld [vmem:[%s4344 + $0x4c] sm:$0xf]
      %v4352 = vld [vmem:[%s4344 + $0x58] sm:$0xf]
      %v4353 = vld [vmem:[%s4344 + $0x64] sm:$0xf]
      %v4354 = vld [vmem:[%s4344 + $0x70] sm:$0xf]
      %v4355 = vld [vmem:[%s4344 + $0x7c] sm:$0xf]
      %v4356 = vld [vmem:[%s4344 + $0x88] sm:$0xf]
      %v4357 = vld [vmem:[%s4344 + $0x94] sm:$0xf]
      %v4358 = vld [vmem:[%s4344 + $0xa0] sm:$0xf]
      %v4359 = vld [vmem:[%s4344 + $0xac] sm:$0xf]
      %v4360 = vld [vmem:[%s4344 + $0xb8] sm:$0xf]
      %s4361 = scalar_lea.vmem %s2, 56
      %v4362 = vld [vmem:[%s4361] sm:$0xf]
      %v4363 = vld [vmem:[%s4361 + $0x4] sm:$0xf]
      %v4380 = vunpack.c.l.b16 %v4345
      %v4381 = vunpack.c.l.b16 %v4346
      %v4382 = vunpack.c.l.b16 %v4347
      %v4383 = vunpack.c.l.b16 %v4348
      %v4384 = vunpack.c.l.b16 %v4349
      %v4385 = vunpack.c.l.b16 %v4350
      %v4386 = vunpack.c.l.b16 %v4351
      %v4387 = vunpack.c.l.b16 %v4352
      %v4388 = vunpack.c.l.b16 %v4353
      %v4389 = vunpack.c.l.b16 %v4354
      %v4390 = vunpack.c.l.b16 %v4355
      %v4391 = vunpack.c.l.b16 %v4356
      %v4392 = vunpack.c.l.b16 %v4357
      %v4393 = vunpack.c.l.b16 %v4358
      %v4394 = vunpack.c.l.b16 %v4359
      %v4395 = vunpack.c.l.b16 %v4360
      %v4396 = vpack.c.b16 %v4381, %v4380
      %v4397 = vpack.c.b16 %v4383, %v4382
      %v4398 = vpack.c.b16 %v4385, %v4384
      %v4399 = vpack.c.b16 %v4387, %v4386
      %v4400 = vpack.c.b16 %v4389, %v4388
      %v4401 = vpack.c.b16 %v4391, %v4390
      %v4402 = vpack.c.b16 %v4393, %v4392
      %v4403 = vpack.c.b16 %v4395, %v4394
      %v4406 = vunpack.c.l.b16 %v4362
      %v4407 = vunpack.c.l.b16 %v4363
      %v4408 = vpack.c.b16 %v4407, %v4406
      %v4411 = vsel %vm352, %v4396, 0
      %v4414 = vsel %vm352, %v4397, 0
      %v4417 = vsel %vm352, %v4398, 0
      %v4420 = vsel %vm352, %v4399, 0
      %v4423 = vsel %vm352, %v4400, 0
      %v4426 = vsel %vm352, %v4401, 0
      %v4429 = vsel %vm352, %v4402, 0
      %v4432 = vsel %vm352, %v4403, 0
      %4434 = vmatprep.subr.bf16.mxu0 0
      %4435 = vmatpush1.bf16.msra.mxu0 %v4408
      %4436 = vmatprep.subr.bf16.mxu0 0
      %4437 = vmatpush1.bf16.msra.mxu0 0
      %4438 = vmatprep.subr.bf16.mxu0 0
      %4439 = vmatpush1.bf16.msra.mxu0 0
      %4440 = vmatprep.subr.bf16.mxu0 0
      %4441 = vmatpush1.bf16.msra.mxu0 0
      %4442 = vmatprep.subr.bf16.mxu0 0
      %4443 = vmatpush1.bf16.msra.mxu0 0
      %4444 = vmatprep.subr.bf16.mxu0 0
      %4445 = vmatpush1.bf16.msra.mxu0 0
      %4446 = vmatprep.subr.bf16.mxu0 0
      %4447 = vmatpush1.bf16.msra.mxu0 0
      %4448 = vmatprep.subr.bf16.mxu0 0
      %4449 = vmatpush1.bf16.msra.mxu0 0
      %4450 = vmatprep.subr.bf16.mxu0 0
      %4451 = vmatpush1.bf16.msra.mxu0 0
      %4452 = vmatprep.subr.bf16.mxu0 0
      %4453 = vmatpush1.bf16.msra.mxu0 0
      %4454 = vmatprep.subr.bf16.mxu0 0
      %4455 = vmatpush1.bf16.msra.mxu0 0
      %4456 = vmatprep.subr.bf16.mxu0 0
      %4457 = vmatpush1.bf16.msra.mxu0 0
      %4458 = vmatprep.subr.bf16.mxu0 0
      %4459 = vmatpush1.bf16.msra.mxu0 0
      %4460 = vmatprep.subr.bf16.mxu0 0
      %4461 = vmatpush1.bf16.msra.mxu0 0
      %4462 = vmatprep.subr.bf16.mxu0 0
      %4463 = vmatpush1.bf16.msra.mxu0 0
      %4464 = vmatprep.subr.bf16.mxu0 0
      %4465 = vmatpush1.bf16.msra.mxu0 0
      %4466 = vmatprep.mubr.bf16.mxu0 0
      %4467 = vmatmul.mubr.bf16.gmra.mrb[0].mxu0 %v4411
      %v4468 = vpop.f32.mrb[0].mxu0
      %v4469 = vadd.f32 0.0, %v4468
      %v4470 = vpop.f32.mrb[0].mxu0
      %v4471 = vpop.f32.mrb[0].mxu0
      %v4472 = vadd.f32 0.0, %v4471
      %v4473 = vpop.f32.mrb[0].mxu0
      %4474 = vmatprep.mubr.bf16.mxu0 0
      %4475 = vmatmul.mubr.bf16.gmra.mrb[0].mxu0 %v4414
      %v4476 = vpop.f32.mrb[0].mxu0
      %v4477 = vadd.f32 0.0, %v4476
      %v4478 = vpop.f32.mrb[0].mxu0
      %v4479 = vpop.f32.mrb[0].mxu0
      %v4480 = vadd.f32 0.0, %v4479
      %v4481 = vpop.f32.mrb[0].mxu0
      %4482 = vmatprep.mubr.bf16.mxu0 0
      %4483 = vmatmul.mubr.bf16.gmra.mrb[0].mxu0 %v4417
      %v4484 = vpop.f32.mrb[0].mxu0
      %v4485 = vadd.f32 0.0, %v4484
      %v4486 = vpop.f32.mrb[0].mxu0
      %v4487 = vpop.f32.mrb[0].mxu0
      %v4488 = vadd.f32 0.0, %v4487
      %v4489 = vpop.f32.mrb[0].mxu0
      %4490 = vmatprep.mubr.bf16.mxu0 0
      %4491 = vmatmul.mubr.bf16.gmra.mrb[0].mxu0 %v4420
      %v4492 = vpop.f32.mrb[0].mxu0
      %v4493 = vadd.f32 0.0, %v4492
      %v4494 = vpop.f32.mrb[0].mxu0
      %v4495 = vpop.f32.mrb[0].mxu0
      %v4496 = vadd.f32 0.0, %v4495
      %v4497 = vpop.f32.mrb[0].mxu0
      %4498 = vmatprep.mubr.bf16.mxu0 0
      %4499 = vmatmul.mubr.bf16.gmra.mrb[0].mxu0 %v4423
      %v4500 = vpop.f32.mrb[0].mxu0
      %v4501 = vadd.f32 0.0, %v4500
      %v4502 = vpop.f32.mrb[0].mxu0
      %v4503 = vpop.f32.mrb[0].mxu0
      %v4504 = vadd.f32 0.0, %v4503
      %v4505 = vpop.f32.mrb[0].mxu0
      %4506 = vmatprep.mubr.bf16.mxu0 0
      %4507 = vmatmul.mubr.bf16.gmra.mrb[0].mxu0 %v4426
      %v4508 = vpop.f32.mrb[0].mxu0
      %v4509 = vadd.f32 0.0, %v4508
      %v4510 = vpop.f32.mrb[0].mxu0
      %v4511 = vpop.f32.mrb[0].mxu0
      %v4512 = vadd.f32 0.0, %v4511
      %v4513 = vpop.f32.mrb[0].mxu0
      %4514 = vmatprep.mubr.bf16.mxu0 0
      %4515 = vmatmul.mubr.bf16.gmra.mrb[0].mxu0 %v4429
      %v4516 = vpop.f32.mrb[0].mxu0
      %v4517 = vadd.f32 0.0, %v4516
      %v4518 = vpop.f32.mrb[0].mxu0
      %v4519 = vpop.f32.mrb[0].mxu0
      %v4520 = vadd.f32 0.0, %v4519
      %v4521 = vpop.f32.mrb[0].mxu0
      %4522 = vmatprep.mubr.bf16.mxu0 0
      %4523 = vmatmul.mubr.bf16.gmra.mrb[0].mxu0 %v4432
      %v4524 = vpop.f32.mrb[0].mxu0
      %v4525 = vadd.f32 0.0, %v4524
      %v4526 = vpop.f32.mrb[0].mxu0
      %v4527 = vpop.f32.mrb[0].mxu0
      %v4528 = vadd.f32 0.0, %v4527
      %v4529 = vpop.f32.mrb[0].mxu0
      %4530 = vdwg.mxu0
      %v4531 = vadd.f32 %v3163, %v4469
      %v4532 = vadd.f32 %v3166, %v4472
      %v4533 = vadd.f32 %v3171, %v4477
      %v4534 = vadd.f32 %v3174, %v4480
      %v4535 = vadd.f32 %v3179, %v4485
      %v4536 = vadd.f32 %v3182, %v4488
      %v4537 = vadd.f32 %v3187, %v4493
      %v4538 = vadd.f32 %v3190, %v4496
      %v4539 = vadd.f32 %v3195, %v4501
      %v4540 = vadd.f32 %v3198, %v4504
      %v4541 = vadd.f32 %v3203, %v4509
      %v4542 = vadd.f32 %v3206, %v4512
      %v4543 = vadd.f32 %v3211, %v4517
      %v4544 = vadd.f32 %v3214, %v4520
      %v4545 = vadd.f32 %v3219, %v4525
      %v4546 = vadd.f32 %v3222, %v4528
      %v4547 = vld [vmem:[%s4344] sm:$0x8]
      %v4548 = vld [vmem:[%s4344 + $0xc] sm:$0x8]
      %v4549 = vld [vmem:[%s4344 + $0x18] sm:$0x8]
      %v4550 = vld [vmem:[%s4344 + $0x24] sm:$0x8]
      %v4551 = vld [vmem:[%s4344 + $0x30] sm:$0x8]
      %v4552 = vld [vmem:[%s4344 + $0x3c] sm:$0x8]
      %v4553 = vld [vmem:[%s4344 + $0x48] sm:$0x8]
      %v4554 = vld [vmem:[%s4344 + $0x54] sm:$0x8]
      %v4555 = vld [vmem:[%s4344 + $0x60] sm:$0x8]
      %v4556 = vld [vmem:[%s4344 + $0x6c] sm:$0x8]
      %v4557 = vld [vmem:[%s4344 + $0x78] sm:$0x8]
      %v4558 = vld [vmem:[%s4344 + $0x84] sm:$0x8]
      %v4559 = vld [vmem:[%s4344 + $0x90] sm:$0x8]
      %v4560 = vld [vmem:[%s4344 + $0x9c] sm:$0x8]
      %v4561 = vld [vmem:[%s4344 + $0xa8] sm:$0x8]
      %v4562 = vld [vmem:[%s4344 + $0xb4] sm:$0x8]
      %v4564 = vshrl.u32 %v4547, 16
      %v4566 = vrot.slane %v4564, 7
      %v4567 = vrot.slane %v4566, 4
      %v4569 = vshrl.u32 %v4345, 16
      %v4571 = vrot.slane %v4569, 7
      %v4572 = vshll.u32 %v4345, 16
      %v4574 = vor.u32 %v4571, %v4572
      %v4575 = vsel %vm2500, %v4567, %v4574
      %v4577 = vshrl.u32 %v4548, 16
      %v4579 = vrot.slane %v4577, 7
      %v4580 = vrot.slane %v4579, 4
      %v4582 = vshrl.u32 %v4346, 16
      %v4584 = vrot.slane %v4582, 7
      %v4585 = vshll.u32 %v4346, 16
      %v4587 = vor.u32 %v4584, %v4585
      %v4588 = vsel %vm2500, %v4580, %v4587
      %v4590 = vshrl.u32 %v4549, 16
      %v4592 = vrot.slane %v4590, 7
      %v4593 = vrot.slane %v4592, 4
      %v4595 = vshrl.u32 %v4347, 16
      %v4597 = vrot.slane %v4595, 7
      %v4598 = vshll.u32 %v4347, 16
      %v4600 = vor.u32 %v4597, %v4598
      %v4601 = vsel %vm2500, %v4593, %v4600
      %v4603 = vshrl.u32 %v4550, 16
      %v4605 = vrot.slane %v4603, 7
      %v4606 = vrot.slane %v4605, 4
      %v4608 = vshrl.u32 %v4348, 16
      %v4610 = vrot.slane %v4608, 7
      %v4611 = vshll.u32 %v4348, 16
      %v4613 = vor.u32 %v4610, %v4611
      %v4614 = vsel %vm2500, %v4606, %v4613
      %v4616 = vshrl.u32 %v4551, 16
      %v4618 = vrot.slane %v4616, 7
      %v4619 = vrot.slane %v4618, 4
      %v4621 = vshrl.u32 %v4349, 16
      %v4623 = vrot.slane %v4621, 7
      %v4624 = vshll.u32 %v4349, 16
      %v4626 = vor.u32 %v4623, %v4624
      %v4627 = vsel %vm2500, %v4619, %v4626
      %v4629 = vshrl.u32 %v4552, 16
      %v4631 = vrot.slane %v4629, 7
      %v4632 = vrot.slane %v4631, 4
      %v4634 = vshrl.u32 %v4350, 16
      %v4636 = vrot.slane %v4634, 7
      %v4637 = vshll.u32 %v4350, 16
      %v4639 = vor.u32 %v4636, %v4637
      %v4640 = vsel %vm2500, %v4632, %v4639
      %v4642 = vshrl.u32 %v4553, 16
      %v4644 = vrot.slane %v4642, 7
      %v4645 = vrot.slane %v4644, 4
      %v4647 = vshrl.u32 %v4351, 16
      %v4649 = vrot.slane %v4647, 7
      %v4650 = vshll.u32 %v4351, 16
      %v4652 = vor.u32 %v4649, %v4650
      %v4653 = vsel %vm2500, %v4645, %v4652
      %v4655 = vshrl.u32 %v4554, 16
      %v4657 = vrot.slane %v4655, 7
      %v4658 = vrot.slane %v4657, 4
      %v4660 = vshrl.u32 %v4352, 16
      %v4662 = vrot.slane %v4660, 7
      %v4663 = vshll.u32 %v4352, 16
      %v4665 = vor.u32 %v4662, %v4663
      %v4666 = vsel %vm2500, %v4658, %v4665
      %v4668 = vshrl.u32 %v4555, 16
      %v4670 = vrot.slane %v4668, 7
      %v4671 = vrot.slane %v4670, 4
      %v4673 = vshrl.u32 %v4353, 16
      %v4675 = vrot.slane %v4673, 7
      %v4676 = vshll.u32 %v4353, 16
      %v4678 = vor.u32 %v4675, %v4676
      %v4679 = vsel %vm2500, %v4671, %v4678
      %v4681 = vshrl.u32 %v4556, 16
      %v4683 = vrot.slane %v4681, 7
      %v4684 = vrot.slane %v4683, 4
      %v4686 = vshrl.u32 %v4354, 16
      %v4688 = vrot.slane %v4686, 7
      %v4689 = vshll.u32 %v4354, 16
      %v4691 = vor.u32 %v4688, %v4689
      %v4692 = vsel %vm2500, %v4684, %v4691
      %v4694 = vshrl.u32 %v4557, 16
      %v4696 = vrot.slane %v4694, 7
      %v4697 = vrot.slane %v4696, 4
      %v4699 = vshrl.u32 %v4355, 16
      %v4701 = vrot.slane %v4699, 7
      %v4702 = vshll.u32 %v4355, 16
      %v4704 = vor.u32 %v4701, %v4702
      %v4705 = vsel %vm2500, %v4697, %v4704
      %v4707 = vshrl.u32 %v4558, 16
      %v4709 = vrot.slane %v4707, 7
      %v4710 = vrot.slane %v4709, 4
      %v4712 = vshrl.u32 %v4356, 16
      %v4714 = vrot.slane %v4712, 7
      %v4715 = vshll.u32 %v4356, 16
      %v4717 = vor.u32 %v4714, %v4715
      %v4718 = vsel %vm2500, %v4710, %v4717
      %v4720 = vshrl.u32 %v4559, 16
      %v4722 = vrot.slane %v4720, 7
      %v4723 = vrot.slane %v4722, 4
      %v4725 = vshrl.u32 %v4357, 16
      %v4727 = vrot.slane %v4725, 7
      %v4728 = vshll.u32 %v4357, 16
      %v4730 = vor.u32 %v4727, %v4728
      %v4731 = vsel %vm2500, %v4723, %v4730
      %v4733 = vshrl.u32 %v4560, 16
      %v4735 = vrot.slane %v4733, 7
      %v4736 = vrot.slane %v4735, 4
      %v4738 = vshrl.u32 %v4358, 16
      %v4740 = vrot.slane %v4738, 7
      %v4741 = vshll.u32 %v4358, 16
      %v4743 = vor.u32 %v4740, %v4741
      %v4744 = vsel %vm2500, %v4736, %v4743
      %v4746 = vshrl.u32 %v4561, 16
      %v4748 = vrot.slane %v4746, 7
      %v4749 = vrot.slane %v4748, 4
      %v4751 = vshrl.u32 %v4359, 16
      %v4753 = vrot.slane %v4751, 7
      %v4754 = vshll.u32 %v4359, 16
      %v4756 = vor.u32 %v4753, %v4754
      %v4757 = vsel %vm2500, %v4749, %v4756
      %v4759 = vshrl.u32 %v4562, 16
      %v4761 = vrot.slane %v4759, 7
      %v4762 = vrot.slane %v4761, 4
      %v4764 = vshrl.u32 %v4360, 16
      %v4766 = vrot.slane %v4764, 7
      %v4767 = vshll.u32 %v4360, 16
      %v4769 = vor.u32 %v4766, %v4767
      %v4770 = vsel %vm2500, %v4762, %v4769
      %s4771 = scalar_lea.vmem %s2, 48
      %v4772 = vld [vmem:[%s4771 + $0x4] sm:$0xf]
      %v4773 = vunpack.c.l.b16 %v4575
      %v4774 = vunpack.c.l.b16 %v4588
      %v4775 = vunpack.c.l.b16 %v4601
      %v4776 = vunpack.c.l.b16 %v4614
      %v4777 = vunpack.c.l.b16 %v4627
      %v4778 = vunpack.c.l.b16 %v4640
      %v4779 = vunpack.c.l.b16 %v4653
      %v4780 = vunpack.c.l.b16 %v4666
      %v4781 = vunpack.c.l.b16 %v4679
      %v4782 = vunpack.c.l.b16 %v4692
      %v4783 = vunpack.c.l.b16 %v4705
      %v4784 = vunpack.c.l.b16 %v4718
      %v4785 = vunpack.c.l.b16 %v4731
      %v4786 = vunpack.c.l.b16 %v4744
      %v4787 = vunpack.c.l.b16 %v4757
      %v4788 = vunpack.c.l.b16 %v4770
      %v4789 = vpack.c.b16 %v4774, %v4773
      %v4790 = vpack.c.b16 %v4776, %v4775
      %v4791 = vpack.c.b16 %v4778, %v4777
      %v4792 = vpack.c.b16 %v4780, %v4779
      %v4793 = vpack.c.b16 %v4782, %v4781
      %v4794 = vpack.c.b16 %v4784, %v4783
      %v4795 = vpack.c.b16 %v4786, %v4785
      %v4796 = vpack.c.b16 %v4788, %v4787
      %4797 = vrot.lane.b32.xlu0 %v4789, 120
      %v4798 = vpop.permute.xlu0 %4797
      %4799 = vrot.lane.b32.xlu0 %v4790, 120
      %v4800 = vpop.permute.xlu0 %4799
      %4801 = vrot.lane.b32.xlu0 %v4791, 120
      %v4802 = vpop.permute.xlu0 %4801
      %4803 = vrot.lane.b32.xlu0 %v4792, 120
      %v4804 = vpop.permute.xlu0 %4803
      %4805 = vrot.lane.b32.xlu0 %v4793, 120
      %v4806 = vpop.permute.xlu0 %4805
      %4807 = vrot.lane.b32.xlu0 %v4794, 120
      %v4808 = vpop.permute.xlu0 %4807
      %4809 = vrot.lane.b32.xlu0 %v4795, 120
      %v4810 = vpop.permute.xlu0 %4809
      %4811 = vrot.lane.b32.xlu0 %v4796, 120
      %v4812 = vpop.permute.xlu0 %4811
      %v4814 = vsel %vm2049, %v4798, 0
      %v4817 = vsel %vm2049, %v4800, 0
      %v4820 = vsel %vm2049, %v4802, 0
      %v4823 = vsel %vm2049, %v4804, 0
      %v4826 = vsel %vm2049, %v4806, 0
      %v4829 = vsel %vm2049, %v4808, 0
      %v4832 = vsel %vm2049, %v4810, 0
      %v4835 = vsel %vm2049, %v4812, 0
      %v4838 = vsel %vm3515, %v4772, 0
      %4840 = vmatprep.subr.bf16.mxu0 0
      %4841 = vmatpush1.bf16.msra.mxu0 %v4838
      %4842 = vmatprep.subr.bf16.mxu0 0
      %4843 = vmatpush1.bf16.msra.mxu0 0
      %4844 = vmatprep.subr.bf16.mxu0 0
      %4845 = vmatpush1.bf16.msra.mxu0 0
      %4846 = vmatprep.subr.bf16.mxu0 0
      %4847 = vmatpush1.bf16.msra.mxu0 0
      %4848 = vmatprep.subr.bf16.mxu0 0
      %4849 = vmatpush1.bf16.msra.mxu0 0
      %4850 = vmatprep.subr.bf16.mxu0 0
      %4851 = vmatpush1.bf16.msra.mxu0 0
      %4852 = vmatprep.subr.bf16.mxu0 0
      %4853 = vmatpush1.bf16.msra.mxu0 0
      %4854 = vmatprep.subr.bf16.mxu0 0
      %4855 = vmatpush1.bf16.msra.mxu0 0
      %4856 = vmatprep.subr.bf16.mxu0 0
      %4857 = vmatpush1.bf16.msra.mxu0 0
      %4858 = vmatprep.subr.bf16.mxu0 0
      %4859 = vmatpush1.bf16.msra.mxu0 0
      %4860 = vmatprep.subr.bf16.mxu0 0
      %4861 = vmatpush1.bf16.msra.mxu0 0
      %4862 = vmatprep.subr.bf16.mxu0 0
      %4863 = vmatpush1.bf16.msra.mxu0 0
      %4864 = vmatprep.subr.bf16.mxu0 0
      %4865 = vmatpush1.bf16.msra.mxu0 0
      %4866 = vmatprep.subr.bf16.mxu0 0
      %4867 = vmatpush1.bf16.msra.mxu0 0
      %4868 = vmatprep.subr.bf16.mxu0 0
      %4869 = vmatpush1.bf16.msra.mxu0 0
      %4870 = vmatprep.subr.bf16.mxu0 0
      %4871 = vmatpush1.bf16.msra.mxu0 0
      %4872 = vmatprep.mubr.bf16.mxu0 0
      %4873 = vmatmul.mubr.bf16.gmra.mrb[0].mxu0 %v4814
      %v4874 = vpop.f32.mrb[0].mxu0
      %v4875 = vadd.f32 0.0, %v4874
      %v4876 = vpop.f32.mrb[0].mxu0
      %v4877 = vpop.f32.mrb[0].mxu0
      %v4878 = vadd.f32 0.0, %v4877
      %v4879 = vpop.f32.mrb[0].mxu0
      %4880 = vmatprep.mubr.bf16.mxu0 0
      %4881 = vmatmul.mubr.bf16.gmra.mrb[0].mxu0 %v4817
      %v4882 = vpop.f32.mrb[0].mxu0
      %v4883 = vadd.f32 0.0, %v4882
      %v4884 = vpop.f32.mrb[0].mxu0
      %v4885 = vpop.f32.mrb[0].mxu0
      %v4886 = vadd.f32 0.0, %v4885
      %v4887 = vpop.f32.mrb[0].mxu0
      %4888 = vmatprep.mubr.bf16.mxu0 0
      %4889 = vmatmul.mubr.bf16.gmra.mrb[0].mxu0 %v4820
      %v4890 = vpop.f32.mrb[0].mxu0
      %v4891 = vadd.f32 0.0, %v4890
      %v4892 = vpop.f32.mrb[0].mxu0
      %v4893 = vpop.f32.mrb[0].mxu0
      %v4894 = vadd.f32 0.0, %v4893
      %v4895 = vpop.f32.mrb[0].mxu0
      %4896 = vmatprep.mubr.bf16.mxu0 0
      %4897 = vmatmul.mubr.bf16.gmra.mrb[0].mxu0 %v4823
      %v4898 = vpop.f32.mrb[0].mxu0
      %v4899 = vadd.f32 0.0, %v4898
      %v4900 = vpop.f32.mrb[0].mxu0
      %v4901 = vpop.f32.mrb[0].mxu0
      %v4902 = vadd.f32 0.0, %v4901
      %v4903 = vpop.f32.mrb[0].mxu0
      %4904 = vmatprep.mubr.bf16.mxu0 0
      %4905 = vmatmul.mubr.bf16.gmra.mrb[0].mxu0 %v4826
      %v4906 = vpop.f32.mrb[0].mxu0
      %v4907 = vadd.f32 0.0, %v4906
      %v4908 = vpop.f32.mrb[0].mxu0
      %v4909 = vpop.f32.mrb[0].mxu0
      %v4910 = vadd.f32 0.0, %v4909
      %v4911 = vpop.f32.mrb[0].mxu0
      %4912 = vmatprep.mubr.bf16.mxu0 0
      %4913 = vmatmul.mubr.bf16.gmra.mrb[0].mxu0 %v4829
      %v4914 = vpop.f32.mrb[0].mxu0
      %v4915 = vadd.f32 0.0, %v4914
      %v4916 = vpop.f32.mrb[0].mxu0
      %v4917 = vpop.f32.mrb[0].mxu0
      %v4918 = vadd.f32 0.0, %v4917
      %v4919 = vpop.f32.mrb[0].mxu0
      %4920 = vmatprep.mubr.bf16.mxu0 0
      %4921 = vmatmul.mubr.bf16.gmra.mrb[0].mxu0 %v4832
      %v4922 = vpop.f32.mrb[0].mxu0
      %v4923 = vadd.f32 0.0, %v4922
      %v4924 = vpop.f32.mrb[0].mxu0
      %v4925 = vpop.f32.mrb[0].mxu0
      %v4926 = vadd.f32 0.0, %v4925
      %v4927 = vpop.f32.mrb[0].mxu0
      %4928 = vmatprep.mubr.bf16.mxu0 0
      %4929 = vmatmul.mubr.bf16.gmra.mrb[0].mxu0 %v4835
      %v4930 = vpop.f32.mrb[0].mxu0
      %v4931 = vadd.f32 0.0, %v4930
      %v4932 = vpop.f32.mrb[0].mxu0
      %v4933 = vpop.f32.mrb[0].mxu0
      %v4934 = vadd.f32 0.0, %v4933
      %v4935 = vpop.f32.mrb[0].mxu0
      %4936 = vdwg.mxu0
      %v4937 = vadd.f32 %v3718, %v4875
      %v4938 = vadd.f32 %v3721, %v4878
      %v4939 = vadd.f32 %v3726, %v4883
      %v4940 = vadd.f32 %v3729, %v4886
      %v4941 = vadd.f32 %v3734, %v4891
      %v4942 = vadd.f32 %v3737, %v4894
      %v4943 = vadd.f32 %v3742, %v4899
      %v4944 = vadd.f32 %v3745, %v4902
      %v4945 = vadd.f32 %v3750, %v4907
      %v4946 = vadd.f32 %v3753, %v4910
      %v4947 = vadd.f32 %v3758, %v4915
      %v4948 = vadd.f32 %v3761, %v4918
      %v4949 = vadd.f32 %v3766, %v4923
      %v4950 = vadd.f32 %v3769, %v4926
      %v4951 = vadd.f32 %v3774, %v4931
      %v4952 = vadd.f32 %v3777, %v4934
      %v4953 = vld [vmem:[%s4344 + $0x4] sm:$0xf]
      %v4954 = vld [vmem:[%s4344 + $0x8] sm:$0x1]
      %v4955 = vld [vmem:[%s4344 + $0x10] sm:$0xf]
      %v4956 = vld [vmem:[%s4344 + $0x14] sm:$0x1]
      %v4957 = vld [vmem:[%s4344 + $0x1c] sm:$0xf]
      %v4958 = vld [vmem:[%s4344 + $0x20] sm:$0x1]
      %v4959 = vld [vmem:[%s4344 + $0x28] sm:$0xf]
      %v4960 = vld [vmem:[%s4344 + $0x2c] sm:$0x1]
      %v4961 = vld [vmem:[%s4344 + $0x34] sm:$0xf]
      %v4962 = vld [vmem:[%s4344 + $0x38] sm:$0x1]
      %v4963 = vld [vmem:[%s4344 + $0x40] sm:$0xf]
      %v4964 = vld [vmem:[%s4344 + $0x44] sm:$0x1]
      %v4965 = vld [vmem:[%s4344 + $0x4c] sm:$0xf]
      %v4966 = vld [vmem:[%s4344 + $0x50] sm:$0x1]
      %v4967 = vld [vmem:[%s4344 + $0x58] sm:$0xf]
      %v4968 = vld [vmem:[%s4344 + $0x5c] sm:$0x1]
      %v4969 = vld [vmem:[%s4344 + $0x64] sm:$0xf]
      %v4970 = vld [vmem:[%s4344 + $0x68] sm:$0x1]
      %v4971 = vld [vmem:[%s4344 + $0x70] sm:$0xf]
      %v4972 = vld [vmem:[%s4344 + $0x74] sm:$0x1]
      %v4973 = vld [vmem:[%s4344 + $0x7c] sm:$0xf]
      %v4974 = vld [vmem:[%s4344 + $0x80] sm:$0x1]
      %v4975 = vld [vmem:[%s4344 + $0x88] sm:$0xf]
      %v4976 = vld [vmem:[%s4344 + $0x8c] sm:$0x1]
      %v4977 = vld [vmem:[%s4344 + $0x94] sm:$0xf]
      %v4978 = vld [vmem:[%s4344 + $0x98] sm:$0x1]
      %v4979 = vld [vmem:[%s4344 + $0xa0] sm:$0xf]
      %v4980 = vld [vmem:[%s4344 + $0xa4] sm:$0x1]
      %v4981 = vld [vmem:[%s4344 + $0xac] sm:$0xf]
      %v4982 = vld [vmem:[%s4344 + $0xb0] sm:$0x1]
      %v4983 = vld [vmem:[%s4344 + $0xb8] sm:$0xf]
      %v4984 = vld [vmem:[%s4344 + $0xbc] sm:$0x1]
      %v4986 = vshrl.u32 %v4953, 16
      %v4988 = vrot.slane %v4986, 4
      %v4989 = vshll.u32 %v4953, 16
      %v4991 = vrot.slane %v4989, 5
      %v4992 = vor.u32 %v4988, %v4991
      %v4993 = vrot.slane %v4992, 4
      %v4995 = vshll.u32 %v4954, 16
      %v4997 = vrot.slane %v4995, 5
      %v4998 = vsel %vm219, %v4993, %v4997
      %v5000 = vshrl.u32 %v4955, 16
      %v5002 = vrot.slane %v5000, 4
      %v5003 = vshll.u32 %v4955, 16
      %v5005 = vrot.slane %v5003, 5
      %v5006 = vor.u32 %v5002, %v5005
      %v5007 = vrot.slane %v5006, 4
      %v5009 = vshll.u32 %v4956, 16
      %v5011 = vrot.slane %v5009, 5
      %v5012 = vsel %vm219, %v5007, %v5011
      %v5014 = vshrl.u32 %v4957, 16
      %v5016 = vrot.slane %v5014, 4
      %v5017 = vshll.u32 %v4957, 16
      %v5019 = vrot.slane %v5017, 5
      %v5020 = vor.u32 %v5016, %v5019
      %v5021 = vrot.slane %v5020, 4
      %v5023 = vshll.u32 %v4958, 16
      %v5025 = vrot.slane %v5023, 5
      %v5026 = vsel %vm219, %v5021, %v5025
      %v5028 = vshrl.u32 %v4959, 16
      %v5030 = vrot.slane %v5028, 4
      %v5031 = vshll.u32 %v4959, 16
      %v5033 = vrot.slane %v5031, 5
      %v5034 = vor.u32 %v5030, %v5033
      %v5035 = vrot.slane %v5034, 4
      %v5037 = vshll.u32 %v4960, 16
      %v5039 = vrot.slane %v5037, 5
      %v5040 = vsel %vm219, %v5035, %v5039
      %v5042 = vshrl.u32 %v4961, 16
      %v5044 = vrot.slane %v5042, 4
      %v5045 = vshll.u32 %v4961, 16
      %v5047 = vrot.slane %v5045, 5
      %v5048 = vor.u32 %v5044, %v5047
      %v5049 = vrot.slane %v5048, 4
      %v5051 = vshll.u32 %v4962, 16
      %v5053 = vrot.slane %v5051, 5
      %v5054 = vsel %vm219, %v5049, %v5053
      %v5056 = vshrl.u32 %v4963, 16
      %v5058 = vrot.slane %v5056, 4
      %v5059 = vshll.u32 %v4963, 16
      %v5061 = vrot.slane %v5059, 5
      %v5062 = vor.u32 %v5058, %v5061
      %v5063 = vrot.slane %v5062, 4
      %v5065 = vshll.u32 %v4964, 16
      %v5067 = vrot.slane %v5065, 5
      %v5068 = vsel %vm219, %v5063, %v5067
      %v5070 = vshrl.u32 %v4965, 16
      %v5072 = vrot.slane %v5070, 4
      %v5073 = vshll.u32 %v4965, 16
      %v5075 = vrot.slane %v5073, 5
      %v5076 = vor.u32 %v5072, %v5075
      %v5077 = vrot.slane %v5076, 4
      %v5079 = vshll.u32 %v4966, 16
      %v5081 = vrot.slane %v5079, 5
      %v5082 = vsel %vm219, %v5077, %v5081
      %v5084 = vshrl.u32 %v4967, 16
      %v5086 = vrot.slane %v5084, 4
      %v5087 = vshll.u32 %v4967, 16
      %v5089 = vrot.slane %v5087, 5
      %v5090 = vor.u32 %v5086, %v5089
      %v5091 = vrot.slane %v5090, 4
      %v5093 = vshll.u32 %v4968, 16
      %v5095 = vrot.slane %v5093, 5
      %v5096 = vsel %vm219, %v5091, %v5095
      %v5098 = vshrl.u32 %v4969, 16
      %v5100 = vrot.slane %v5098, 4
      %v5101 = vshll.u32 %v4969, 16
      %v5103 = vrot.slane %v5101, 5
      %v5104 = vor.u32 %v5100, %v5103
      %v5105 = vrot.slane %v5104, 4
      %v5107 = vshll.u32 %v4970, 16
      %v5109 = vrot.slane %v5107, 5
      %v5110 = vsel %vm219, %v5105, %v5109
      %v5112 = vshrl.u32 %v4971, 16
      %v5114 = vrot.slane %v5112, 4
      %v5115 = vshll.u32 %v4971, 16
      %v5117 = vrot.slane %v5115, 5
      %v5118 = vor.u32 %v5114, %v5117
      %v5119 = vrot.slane %v5118, 4
      %v5121 = vshll.u32 %v4972, 16
      %v5123 = vrot.slane %v5121, 5
      %v5124 = vsel %vm219, %v5119, %v5123
      %v5126 = vshrl.u32 %v4973, 16
      %v5128 = vrot.slane %v5126, 4
      %v5129 = vshll.u32 %v4973, 16
      %v5131 = vrot.slane %v5129, 5
      %v5132 = vor.u32 %v5128, %v5131
      %v5133 = vrot.slane %v5132, 4
      %v5135 = vshll.u32 %v4974, 16
      %v5137 = vrot.slane %v5135, 5
      %v5138 = vsel %vm219, %v5133, %v5137
      %v5140 = vshrl.u32 %v4975, 16
      %v5142 = vrot.slane %v5140, 4
      %v5143 = vshll.u32 %v4975, 16
      %v5145 = vrot.slane %v5143, 5
      %v5146 = vor.u32 %v5142, %v5145
      %v5147 = vrot.slane %v5146, 4
      %v5149 = vshll.u32 %v4976, 16
      %v5151 = vrot.slane %v5149, 5
      %v5152 = vsel %vm219, %v5147, %v5151
      %v5154 = vshrl.u32 %v4977, 16
      %v5156 = vrot.slane %v5154, 4
      %v5157 = vshll.u32 %v4977, 16
      %v5159 = vrot.slane %v5157, 5
      %v5160 = vor.u32 %v5156, %v5159
      %v5161 = vrot.slane %v5160, 4
      %v5163 = vshll.u32 %v4978, 16
      %v5165 = vrot.slane %v5163, 5
      %v5166 = vsel %vm219, %v5161, %v5165
      %v5168 = vshrl.u32 %v4979, 16
      %v5170 = vrot.slane %v5168, 4
      %v5171 = vshll.u32 %v4979, 16
      %v5173 = vrot.slane %v5171, 5
      %v5174 = vor.u32 %v5170, %v5173
      %v5175 = vrot.slane %v5174, 4
      %v5177 = vshll.u32 %v4980, 16
      %v5179 = vrot.slane %v5177, 5
      %v5180 = vsel %vm219, %v5175, %v5179
      %v5182 = vshrl.u32 %v4981, 16
      %v5184 = vrot.slane %v5182, 4
      %v5185 = vshll.u32 %v4981, 16
      %v5187 = vrot.slane %v5185, 5
      %v5188 = vor.u32 %v5184, %v5187
      %v5189 = vrot.slane %v5188, 4
      %v5191 = vshll.u32 %v4982, 16
      %v5193 = vrot.slane %v5191, 5
      %v5194 = vsel %vm219, %v5189, %v5193
      %v5196 = vshrl.u32 %v4983, 16
      %v5198 = vrot.slane %v5196, 4
      %v5199 = vshll.u32 %v4983, 16
      %v5201 = vrot.slane %v5199, 5
      %v5202 = vor.u32 %v5198, %v5201
      %v5203 = vrot.slane %v5202, 4
      %v5205 = vshll.u32 %v4984, 16
      %v5207 = vrot.slane %v5205, 5
      %v5208 = vsel %vm219, %v5203, %v5207
      %s5209 = scalar_lea.vmem %s2, 64
      %v5210 = vld [vmem:[%s5209] sm:$0xf]
      %v5211 = vunpack.c.l.b16 %v4998
      %v5212 = vunpack.c.l.b16 %v5012
      %v5213 = vunpack.c.l.b16 %v5026
      %v5214 = vunpack.c.l.b16 %v5040
      %v5215 = vunpack.c.l.b16 %v5054
      %v5216 = vunpack.c.l.b16 %v5068
      %v5217 = vunpack.c.l.b16 %v5082
      %v5218 = vunpack.c.l.b16 %v5096
      %v5219 = vunpack.c.l.b16 %v5110
      %v5220 = vunpack.c.l.b16 %v5124
      %v5221 = vunpack.c.l.b16 %v5138
      %v5222 = vunpack.c.l.b16 %v5152
      %v5223 = vunpack.c.l.b16 %v5166
      %v5224 = vunpack.c.l.b16 %v5180
      %v5225 = vunpack.c.l.b16 %v5194
      %v5226 = vunpack.c.l.b16 %v5208
      %v5227 = vpack.c.b16 %v5212, %v5211
      %v5228 = vpack.c.b16 %v5214, %v5213
      %v5229 = vpack.c.b16 %v5216, %v5215
      %v5230 = vpack.c.b16 %v5218, %v5217
      %v5231 = vpack.c.b16 %v5220, %v5219
      %v5232 = vpack.c.b16 %v5222, %v5221
      %v5233 = vpack.c.b16 %v5224, %v5223
      %v5234 = vpack.c.b16 %v5226, %v5225
      %v5236 = vunpack.c.l.b16 %v5210
      %v5237 = vpack.c.b16 %v5236, %v5236
      %5238 = vrot.lane.b32.xlu0 %v5237, 120
      %v5239 = vpop.permute.xlu0 %5238
      %v5241 = vsel %vm2049, %v5227, 0
      %v5244 = vsel %vm2049, %v5228, 0
      %v5247 = vsel %vm2049, %v5229, 0
      %v5250 = vsel %vm2049, %v5230, 0
      %v5253 = vsel %vm2049, %v5231, 0
      %v5256 = vsel %vm2049, %v5232, 0
      %v5259 = vsel %vm2049, %v5233, 0
      %v5262 = vsel %vm2049, %v5234, 0
      %v5265 = vsel %vm3515, %v5239, 0
      %5267 = vmatprep.subr.bf16.mxu0 0
      %5268 = vmatpush1.bf16.msra.mxu0 %v5265
      %5269 = vmatprep.subr.bf16.mxu0 0
      %5270 = vmatpush1.bf16.msra.mxu0 0
      %5271 = vmatprep.subr.bf16.mxu0 0
      %5272 = vmatpush1.bf16.msra.mxu0 0
      %5273 = vmatprep.subr.bf16.mxu0 0
      %5274 = vmatpush1.bf16.msra.mxu0 0
      %5275 = vmatprep.subr.bf16.mxu0 0
      %5276 = vmatpush1.bf16.msra.mxu0 0
      %5277 = vmatprep.subr.bf16.mxu0 0
      %5278 = vmatpush1.bf16.msra.mxu0 0
      %5279 = vmatprep.subr.bf16.mxu0 0
      %5280 = vmatpush1.bf16.msra.mxu0 0
      %5281 = vmatprep.subr.bf16.mxu0 0
      %5282 = vmatpush1.bf16.msra.mxu0 0
      %5283 = vmatprep.subr.bf16.mxu0 0
      %5284 = vmatpush1.bf16.msra.mxu0 0
      %5285 = vmatprep.subr.bf16.mxu0 0
      %5286 = vmatpush1.bf16.msra.mxu0 0
      %5287 = vmatprep.subr.bf16.mxu0 0
      %5288 = vmatpush1.bf16.msra.mxu0 0
      %5289 = vmatprep.subr.bf16.mxu0 0
      %5290 = vmatpush1.bf16.msra.mxu0 0
      %5291 = vmatprep.subr.bf16.mxu0 0
      %5292 = vmatpush1.bf16.msra.mxu0 0
      %5293 = vmatprep.subr.bf16.mxu0 0
      %5294 = vmatpush1.bf16.msra.mxu0 0
      %5295 = vmatprep.subr.bf16.mxu0 0
      %5296 = vmatpush1.bf16.msra.mxu0 0
      %5297 = vmatprep.subr.bf16.mxu0 0
      %5298 = vmatpush1.bf16.msra.mxu0 0
      %5299 = vmatprep.mubr.bf16.mxu0 0
      %5300 = vmatmul.mubr.bf16.gmra.mrb[0].mxu0 %v5241
      %v5301 = vpop.f32.mrb[0].mxu0
      %v5302 = vadd.f32 0.0, %v5301
      %v5303 = vpop.f32.mrb[0].mxu0
      %v5304 = vpop.f32.mrb[0].mxu0
      %v5305 = vadd.f32 0.0, %v5304
      %v5306 = vpop.f32.mrb[0].mxu0
      %5307 = vmatprep.mubr.bf16.mxu0 0
      %5308 = vmatmul.mubr.bf16.gmra.mrb[0].mxu0 %v5244
      %v5309 = vpop.f32.mrb[0].mxu0
      %v5310 = vadd.f32 0.0, %v5309
      %v5311 = vpop.f32.mrb[0].mxu0
      %v5312 = vpop.f32.mrb[0].mxu0
      %v5313 = vadd.f32 0.0, %v5312
      %v5314 = vpop.f32.mrb[0].mxu0
      %5315 = vmatprep.mubr.bf16.mxu0 0
      %5316 = vmatmul.mubr.bf16.gmra.mrb[0].mxu0 %v5247
      %v5317 = vpop.f32.mrb[0].mxu0
      %v5318 = vadd.f32 0.0, %v5317
      %v5319 = vpop.f32.mrb[0].mxu0
      %v5320 = vpop.f32.mrb[0].mxu0
      %v5321 = vadd.f32 0.0, %v5320
      %v5322 = vpop.f32.mrb[0].mxu0
      %5323 = vmatprep.mubr.bf16.mxu0 0
      %5324 = vmatmul.mubr.bf16.gmra.mrb[0].mxu0 %v5250
      %v5325 = vpop.f32.mrb[0].mxu0
      %v5326 = vadd.f32 0.0, %v5325
      %v5327 = vpop.f32.mrb[0].mxu0
      %v5328 = vpop.f32.mrb[0].mxu0
      %v5329 = vadd.f32 0.0, %v5328
      %v5330 = vpop.f32.mrb[0].mxu0
      %5331 = vmatprep.mubr.bf16.mxu0 0
      %5332 = vmatmul.mubr.bf16.gmra.mrb[0].mxu0 %v5253
      %v5333 = vpop.f32.mrb[0].mxu0
      %v5334 = vadd.f32 0.0, %v5333
      %v5335 = vpop.f32.mrb[0].mxu0
      %v5336 = vpop.f32.mrb[0].mxu0
      %v5337 = vadd.f32 0.0, %v5336
      %v5338 = vpop.f32.mrb[0].mxu0
      %5339 = vmatprep.mubr.bf16.mxu0 0
      %5340 = vmatmul.mubr.bf16.gmra.mrb[0].mxu0 %v5256
      %v5341 = vpop.f32.mrb[0].mxu0
      %v5342 = vadd.f32 0.0, %v5341
      %v5343 = vpop.f32.mrb[0].mxu0
      %v5344 = vpop.f32.mrb[0].mxu0
      %v5345 = vadd.f32 0.0, %v5344
      %v5346 = vpop.f32.mrb[0].mxu0
      %5347 = vmatprep.mubr.bf16.mxu0 0
      %5348 = vmatmul.mubr.bf16.gmra.mrb[0].mxu0 %v5259
      %v5349 = vpop.f32.mrb[0].mxu0
      %v5350 = vadd.f32 0.0, %v5349
      %v5351 = vpop.f32.mrb[0].mxu0
      %v5352 = vpop.f32.mrb[0].mxu0
      %v5353 = vadd.f32 0.0, %v5352
      %v5354 = vpop.f32.mrb[0].mxu0
      %5355 = vmatprep.mubr.bf16.mxu0 0
      %5356 = vmatmul.mubr.bf16.gmra.mrb[0].mxu0 %v5262
      %v5357 = vpop.f32.mrb[0].mxu0
      %v5358 = vadd.f32 0.0, %v5357
      %v5359 = vpop.f32.mrb[0].mxu0
      %v5360 = vpop.f32.mrb[0].mxu0
      %v5361 = vadd.f32 0.0, %v5360
      %v5362 = vpop.f32.mrb[0].mxu0
      %5363 = vdwg.mxu0
      %v5364 = vadd.f32 %v4282, %v5302
      %v5365 = vadd.f32 %v4285, %v5305
      %v5366 = vadd.f32 %v4290, %v5310
      %v5367 = vadd.f32 %v4293, %v5313
      %v5368 = vadd.f32 %v4298, %v5318
      %v5369 = vadd.f32 %v4301, %v5321
      %v5370 = vadd.f32 %v4306, %v5326
      %v5371 = vadd.f32 %v4309, %v5329
      %v5372 = vadd.f32 %v4314, %v5334
      %v5373 = vadd.f32 %v4317, %v5337
      %v5374 = vadd.f32 %v4322, %v5342
      %v5375 = vadd.f32 %v4325, %v5345
      %v5376 = vadd.f32 %v4330, %v5350
      %v5377 = vadd.f32 %v4333, %v5353
      %v5378 = vadd.f32 %v4338, %v5358
      %v5379 = vadd.f32 %v4341, %v5361
      %5396 = vrot.lane.b32.xlu0 %v5364, 8
      %v5397 = vpop.permute.xlu0 %5396
      %5398 = vrot.lane.b32.xlu0 %v5365, 8
      %v5399 = vpop.permute.xlu0 %5398
      %5400 = vrot.lane.b32.xlu0 %v5366, 8
      %v5401 = vpop.permute.xlu0 %5400
      %5402 = vrot.lane.b32.xlu0 %v5367, 8
      %v5403 = vpop.permute.xlu0 %5402
      %5404 = vrot.lane.b32.xlu0 %v5368, 8
      %v5405 = vpop.permute.xlu0 %5404
      %5406 = vrot.lane.b32.xlu0 %v5369, 8
      %v5407 = vpop.permute.xlu0 %5406
      %5408 = vrot.lane.b32.xlu0 %v5370, 8
      %v5409 = vpop.permute.xlu0 %5408
      %5410 = vrot.lane.b32.xlu0 %v5371, 8
      %v5411 = vpop.permute.xlu0 %5410
      %5412 = vrot.lane.b32.xlu0 %v5372, 8
      %v5413 = vpop.permute.xlu0 %5412
      %5414 = vrot.lane.b32.xlu0 %v5373, 8
      %v5415 = vpop.permute.xlu0 %5414
      %5416 = vrot.lane.b32.xlu0 %v5374, 8
      %v5417 = vpop.permute.xlu0 %5416
      %5418 = vrot.lane.b32.xlu0 %v5375, 8
      %v5419 = vpop.permute.xlu0 %5418
      %5420 = vrot.lane.b32.xlu0 %v5376, 8
      %v5421 = vpop.permute.xlu0 %5420
      %5422 = vrot.lane.b32.xlu0 %v5377, 8
      %v5423 = vpop.permute.xlu0 %5422
      %5424 = vrot.lane.b32.xlu0 %v5378, 8
      %v5425 = vpop.permute.xlu0 %5424
      %5426 = vrot.lane.b32.xlu0 %v5379, 8
      %v5427 = vpop.permute.xlu0 %5426
      %v5444 = vsel %vm2049, %v4937, %v5397
      %v5445 = vsel %vm2049, %v4938, %v5399
      %v5446 = vsel %vm2049, %v4939, %v5401
      %v5447 = vsel %vm2049, %v4940, %v5403
      %v5448 = vsel %vm2049, %v4941, %v5405
      %v5449 = vsel %vm2049, %v4942, %v5407
      %v5450 = vsel %vm2049, %v4943, %v5409
      %v5451 = vsel %vm2049, %v4944, %v5411
      %v5452 = vsel %vm2049, %v4945, %v5413
      %v5453 = vsel %vm2049, %v4946, %v5415
      %v5454 = vsel %vm2049, %v4947, %v5417
      %v5455 = vsel %vm2049, %v4948, %v5419
      %v5456 = vsel %vm2049, %v4949, %v5421
      %v5457 = vsel %vm2049, %v4950, %v5423
      %v5458 = vsel %vm2049, %v4951, %v5425
      %v5459 = vsel %vm2049, %v4952, %v5427
      %v5460 = vadd.f32 %v4531, %v5444
      %v5461 = vadd.f32 %v4532, %v5445
      %v5462 = vadd.f32 %v4533, %v5446
      %v5463 = vadd.f32 %v4534, %v5447
      %v5464 = vadd.f32 %v4535, %v5448
      %v5465 = vadd.f32 %v4536, %v5449
      %v5466 = vadd.f32 %v4537, %v5450
      %v5467 = vadd.f32 %v4538, %v5451
      %v5468 = vadd.f32 %v4539, %v5452
      %v5469 = vadd.f32 %v4540, %v5453
      %v5470 = vadd.f32 %v4541, %v5454
      %v5471 = vadd.f32 %v4542, %v5455
      %v5472 = vadd.f32 %v4543, %v5456
      %v5473 = vadd.f32 %v4544, %v5457
      %v5474 = vadd.f32 %v4545, %v5458
      %v5475 = vadd.f32 %v4546, %v5459
      %v5476 = vadd.f32 %v5460, %v2122
      %v5477 = vadd.f32 %v5461, %v2301
      %v5478 = vadd.f32 %v5462, %v2123
      %v5479 = vadd.f32 %v5463, %v2302
      %v5480 = vadd.f32 %v5464, %v2124
      %v5481 = vadd.f32 %v5465, %v2303
      %v5482 = vadd.f32 %v5466, %v2125
      %v5483 = vadd.f32 %v5467, %v2304
      %v5484 = vadd.f32 %v5468, %v2126
      %v5485 = vadd.f32 %v5469, %v2305
      %v5486 = vadd.f32 %v5470, %v2127
      %v5487 = vadd.f32 %v5471, %v2306
      %v5488 = vadd.f32 %v5472, %v2128
      %v5489 = vadd.f32 %v5473, %v2307
      %v5490 = vadd.f32 %v5474, %v2129
      %v5491 = vadd.f32 %v5475, %v2308
      %v5492 = vld [vmem:[%s3 + $0x1] sm:$0x1]
      %v5493 = vlaneseq
      %v5494 = vshrl.u32 %v5493, 7
      %v5495 = vsub.s32 0, %v5494
      %v5496 = vrot.slane %v5492, %v5495
      %v5497 = vadd.f32 %v5476, %v5496
      %v5498 = vadd.f32 %v5477, %v5496
      %v5499 = vadd.f32 %v5478, %v5496
      %v5500 = vadd.f32 %v5479, %v5496
      %v5501 = vadd.f32 %v5480, %v5496
      %v5502 = vadd.f32 %v5481, %v5496
      %v5503 = vadd.f32 %v5482, %v5496
      %v5504 = vadd.f32 %v5483, %v5496
      %v5505 = vadd.f32 %v5484, %v5496
      %v5506 = vadd.f32 %v5485, %v5496
      %v5507 = vadd.f32 %v5486, %v5496
      %v5508 = vadd.f32 %v5487, %v5496
      %v5509 = vadd.f32 %v5488, %v5496
      %v5510 = vadd.f32 %v5489, %v5496
      %v5511 = vadd.f32 %v5490, %v5496
      %v5512 = vadd.f32 %v5491, %v5496
      %v5513 = vmax.f32 %v5497, 0.0
      %v5514 = vmax.f32 %v5498, 0.0
      %v5515 = vmax.f32 %v5499, 0.0
      %v5516 = vmax.f32 %v5500, 0.0
      %v5517 = vmax.f32 %v5501, 0.0
      %v5518 = vmax.f32 %v5502, 0.0
      %v5519 = vmax.f32 %v5503, 0.0
      %v5520 = vmax.f32 %v5504, 0.0
      %v5521 = vmax.f32 %v5505, 0.0
      %v5522 = vmax.f32 %v5506, 0.0
      %v5523 = vmax.f32 %v5507, 0.0
      %v5524 = vmax.f32 %v5508, 0.0
      %v5525 = vmax.f32 %v5509, 0.0
      %v5526 = vmax.f32 %v5510, 0.0
      %v5527 = vmax.f32 %v5511, 0.0
      %v5528 = vmax.f32 %v5512, 0.0
      %v5529 = vpack.c.bf16 %v5513, %v5513
      %v5530 = vpack.c.bf16 %v5514, %v5514
      %v5531 = vpack.c.bf16 %v5515, %v5515
      %v5532 = vpack.c.bf16 %v5516, %v5516
      %v5533 = vpack.c.bf16 %v5517, %v5517
      %v5534 = vpack.c.bf16 %v5518, %v5518
      %v5535 = vpack.c.bf16 %v5519, %v5519
      %v5536 = vpack.c.bf16 %v5520, %v5520
      %v5537 = vpack.c.bf16 %v5521, %v5521
      %v5538 = vpack.c.bf16 %v5522, %v5522
      %v5539 = vpack.c.bf16 %v5523, %v5523
      %v5540 = vpack.c.bf16 %v5524, %v5524
      %v5541 = vpack.c.bf16 %v5525, %v5525
      %v5542 = vpack.c.bf16 %v5526, %v5526
      %v5543 = vpack.c.bf16 %v5527, %v5527
      %v5544 = vpack.c.bf16 %v5528, %v5528
      %5545 = vst.msk [vmem:[%s197] sm:$0xf] %vm2309, %v5529
      %5546 = vst.msk [vmem:[%s197 + $0x4] sm:$0xf] %vm2309, %v5530
      %5547 = vst.msk [vmem:[%s197 + $0x8] sm:$0xf] %vm2309, %v5531
      %5548 = vst.msk [vmem:[%s197 + $0xc] sm:$0xf] %vm2309, %v5532
      %5549 = vst.msk [vmem:[%s197 + $0x10] sm:$0xf] %vm2309, %v5533
      %5550 = vst.msk [vmem:[%s197 + $0x14] sm:$0xf] %vm2309, %v5534
      %5551 = vst.msk [vmem:[%s197 + $0x18] sm:$0xf] %vm2309, %v5535
      %5552 = vst.msk [vmem:[%s197 + $0x1c] sm:$0xf] %vm2309, %v5536
      %5553 = vst.msk [vmem:[%s197 + $0x20] sm:$0xf] %vm2309, %v5537
      %5554 = vst.msk [vmem:[%s197 + $0x24] sm:$0xf] %vm2309, %v5538
      %5555 = vst.msk [vmem:[%s197 + $0x28] sm:$0xf] %vm2309, %v5539
      %5556 = vst.msk [vmem:[%s197 + $0x2c] sm:$0xf] %vm2309, %v5540
      %5557 = vst.msk [vmem:[%s197 + $0x30] sm:$0xf] %vm2309, %v5541
      %5558 = vst.msk [vmem:[%s197 + $0x34] sm:$0xf] %vm2309, %v5542
      %5559 = vst.msk [vmem:[%s197 + $0x38] sm:$0xf] %vm2309, %v5543
      %5560 = vst.msk [vmem:[%s197 + $0x3c] sm:$0xf] %vm2309, %v5544
      %p5561 = scmp.lt.s32.totalorder %s15, 1
      %s5562 = scalar_select %p5561, %s15, 1
      %s5563 = smul.addr %s5562, 16
      %s5564 = smul.addr %s5563, 4
      %s5565 = scalar_lea.vmem %s4, %s5564
      // Predicated region
      $region37: #{upproj_forward.1} parent=35 // pred_check
        %p5566 = pneg %p122
      $region38: #{upproj_forward.1} parent=35 // pred_check_branch
        %5568 = sbr.rel (%p5566) target = $region40
      $region39: #{upproj_forward.1} parent=35 // pred_region
        _
      $region40: #{upproj_forward.1} parent=35 // pred_fallthru
        _
    $region36: #{upproj_forward.1} parent=5 // pred_fallthru
      _
    %p5569 = scmp.le.s32.totalorder 2, %s10
    // Predicated region
    $region41: #{upproj_forward.1} parent=5 // pred_check
      %p5570 = pneg %p5569
    $region42: #{upproj_forward.1} parent=5 // pred_check_branch
      %5572 = sbr.rel (%p5570) target = $region44
    $region43: #{upproj_forward.1} parent=5 // pred_region
      %s5573 = ssub.s32 %s10, 2
      // Predicated region
      $region45: #{upproj_forward.1} parent=43 // pred_check
        %p5574 = pneg %p128
      $region46: #{upproj_forward.1} parent=43 // pred_check_branch
        %5576 = sbr.rel (%p5574) target = $region48
      $region47: #{upproj_forward.1} parent=43 // pred_region
        %p5577 = scmp.lt.s32.totalorder %s16, 1
        %s5578 = scalar_select %p5577, %s16, 1
        %s5579 = smul.addr %s5578, 16
        %s5580 = smul.addr %s5579, 4
        %s5581 = scalar_lea.vmem %s4, %s5580
      $region48: #{upproj_forward.1} parent=43 // pred_fallthru
        _
    $region44: #{upproj_forward.1} parent=5 // pred_fallthru
      _
  $region6: #{upproj_forward.1} parent=0 // loop_footer
    %s14 = sadd.s32 1, %s10
  $region7: #{upproj_forward.1} parent=0 // loop_footer_branch
    %9 = sbr.rel target = $region3
  $region8: #{upproj_forward.1} parent=0 // loop_exit
    _

</llo_original>
